<compile_context>
chip_gen: v6e
topology: v6e:2x2x1
jax: 0.10.0
libtpu: 0.0.40
codegen_flags: <defaults>
</compile_context>

<pallas_src>
import functools

import jax
import jax.numpy as jnp
import numpy as np
from jax.experimental import pallas as pl
from jax.experimental.pallas import tpu as pltpu


def _round_up(x, m):
    return (x + m - 1) // m * m


# ------------------------------ Fused kernel ------------------------------- #

def _down_fused_kernel(x_ref, mask_ref, w1_ref, b1_ref, w2_ref, b2_ref, o_ref,
                       p_ref, a1_ref, *, bn, hq, wf, m0, cout_p):
    # x_ref   : (2, rows, 3*cin)  W-pooled + W-tap-stacked input, H pair on dim0
    # mask_ref: (sf, 1)           1.0 at interior flat rows of ONE image
    # w1_ref  : (3, 3*cin, cout_p)  conv1 (BN scale folded, Cout padded to 128)
    # w2_ref  : (9, cout_p, cout_p) conv2 (BN scale folded, Cin/Cout padded)
    # b*_ref  : (1, cout_p)       folded BN bias
    # o_ref   : (rows, cout_p)    full flat output block (wrapper crops ring)
    # p_ref   : (2*m0+rows, 3*cin)   flat zero-margined pooled image (VMEM)
    # a1_ref  : (2*m0+rows, cout_p)  flat zero-margined conv1 activation (VMEM)
    sf = hq * wf
    rows = bn * sf
    cin3 = p_ref.shape[-1]

    # Finish the 2x2 max-pool (H direction): one aligned bulk store of the
    # whole flat interior (W was already padded to wf in the wrapper).
    p_ref[pl.ds(m0, rows), :] = jnp.maximum(x_ref[0], x_ref[1])

    # Zero only the margins; the interiors are fully overwritten below.
    zc = jnp.zeros((m0, cin3), jnp.float32)
    zo = jnp.zeros((m0, cout_p), jnp.float32)
    p_ref[pl.ds(0, m0), :] = zc
    p_ref[pl.ds(m0 + rows, m0), :] = zc
    a1_ref[pl.ds(0, m0), :] = zo
    a1_ref[pl.ds(m0 + rows, m0), :] = zo

    # conv1: 3 dots, K = 3*cin (W taps pre-stacked on channels), every slice
    # start is a multiple of 8 (m0 and wf are), accumulation in VMEM.
    for dy in range(3):
        contrib = jnp.dot(p_ref[pl.ds(m0 + (dy - 1) * wf, rows), :], w1_ref[dy],
                          preferred_element_type=jnp.float32)
        if dy == 0:
            a1_ref[pl.ds(m0, rows), :] = contrib
        else:
            a1_ref[pl.ds(m0, rows), :] += contrib

    # Folded-BN bias + ReLU + interior mask (ring rows/cols and the wq..wf
    # lane-pad columns become exact zeros -> SAME padding for conv2).
    inner = mask_ref[...] > 0.0                       # (sf, 1) bool
    for b in range(bn):
        off = m0 + b * sf
        seg = a1_ref[pl.ds(off, sf), :]
        a1_ref[pl.ds(off, sf), :] = jnp.where(
            inner, jnp.maximum(seg + b1_ref[...], 0.0), 0.0)

    # conv2: 9 dots with K = cout_p, accumulated straight into the output
    # block in VMEM (no SSA accumulator, no separate y2 scratch, no gather).
    for k in range(9):
        dy, dx = divmod(k, 3)
        off = m0 + (dy - 1) * wf + (dx - 1)
        contrib = jnp.dot(a1_ref[pl.ds(off, rows), :], w2_ref[k],
                          preferred_element_type=jnp.float32)
        if k == 0:
            o_ref[...] = contrib
        else:
            o_ref[...] += contrib
    o_ref[...] = jnp.maximum(o_ref[...] + b2_ref[...], 0.0)


# ------------------------------ Wrapper ------------------------------------ #

def _fold_bn(conv_bias, gamma, beta, mean, var, eps=1e-5):
    scale = gamma / jnp.sqrt(var + eps)
    bias = beta + (conv_bias - mean) * scale
    return scale, bias


def _vmem_capacity_bytes():
    try:
        info = pltpu.get_tpu_info()
        for name in ("vmem_capacity_bytes", "vmem_size_bytes", "vmem_bytes"):
            v = getattr(info, name, None)
            if v:
                return int(v)
    except Exception:
        pass
    return 64 * 1024 * 1024            # v7x per-TC physical VMEM (smallest gen)


def _vmem_footprint_bytes(bn, hq, wf, m0, cin3, cout_p):
    sf = hq * wf
    rows = bn * sf
    f32 = 4
    cin_l = _round_up(cin3, 128)       # lanes pad to 128 in VMEM
    x_blk = 2 * rows * cin_l * f32 * 2            # input block, double-buffered
    o_blk = rows * cout_p * f32 * 2               # output block, double-buffered
    p_s = (2 * m0 + rows) * cin_l * f32           # flat pooled scratch
    a1_s = (2 * m0 + rows) * cout_p * f32         # flat conv1 activation scratch
    w_b = (3 * _round_up(cin3, 8) * cout_p + 9 * cout_p * cout_p
           + 2 * 8 * cout_p + sf * 128) * f32 * 2  # weights/bias/mask buffers
    return x_blk + o_blk + p_s + a1_s + w_b


def down_forward(x_nchw, p):
    """down(in_ch, out_ch) forward.  Input/output NCHW like PyTorch."""
    n, cin, h, w = x_nchw.shape
    assert h % 2 == 0 and w % 2 == 0
    ho, wo = h // 2, w // 2
    hq, wq = ho + 2, wo + 2                 # pooled image + 1-pixel conv ring
    wf = _round_up(wq, 8)                   # flat row stride (sublane aligned)
    sf = hq * wf                            # flat rows per image
    m0 = wf + 8                             # aligned scratch margin >= wf + 1
    cout = p["w1"].shape[-1]
    cout_p = _round_up(cout, 128)           # lane-dense padded channel count
    cin3 = 3 * cin

    # VMEM-aware batch tile: largest divisor of n that fits the budget while
    # keeping >= 2 grid steps (pipelining + v7x megacore sharding).
    vmem_cap = _vmem_capacity_bytes()
    budget = vmem_cap // 3
    bn = 1
    for cand in range(1, n + 1):
        if n % cand:
            continue
        if n // cand < min(2, n):
            continue
        if _vmem_footprint_bytes(cand, hq, wf, m0, cin3, cout_p) <= budget:
            bn = cand
    rows = bn * sf
    prow = 2 * m0 + rows
    footprint = _vmem_footprint_bytes(bn, hq, wf, m0, cin3, cout_p)
    vmem_limit = int(min(3 * vmem_cap // 4, max(2 * footprint, 16 * 1024 * 1024)))

    # --- XLA prep (single pass over the small input): NCHW->NHWC, zero-pad by
    # 2 (gives the pooled image its conv ring), W half of the 2x2 max-pool,
    # stack conv1's three W-taps onto channels, pad W to wf, and lay out with
    # the H-pool pair on the leading axis so the kernel needs no reshapes.
    x = jnp.transpose(x_nchw, (0, 2, 3, 1))                       # (n,h,w,cin)
    xpad = jnp.pad(x, ((0, 0), (2, 2), (2, 2), (0, 0)))           # (n,h+4,w+4,cin)
    xw = jnp.maximum(xpad[:, :, 0::2, :], xpad[:, :, 1::2, :])    # (n,2hq,wq,cin)
    left = jnp.pad(xw, ((0, 0), (0, 0), (1, 0), (0, 0)))[:, :, :wq, :]
    right = jnp.pad(xw, ((0, 0), (0, 0), (0, 1), (0, 0)))[:, :, 1:, :]
    xs = jnp.concatenate([left, xw, right], axis=-1)              # (n,2hq,wq,3cin)
    xs = jnp.pad(xs, ((0, 0), (0, 0), (0, wf - wq), (0, 0)))      # (n,2hq,wf,3cin)
    xk = xs.reshape(n, hq, 2, wf, cin3).transpose(2, 0, 1, 3, 4)
    xk = xk.reshape(2, n * sf, cin3)                              # (2,n*sf,3cin)

    # Weights: fold the BN scale into the conv weights, pad Cout (and conv2's
    # Cin) to 128 lanes.  conv1 is packed per-dy with K = 3*cin (kw-major).
    s1, b1 = _fold_bn(p["b1"], p["g1"], p["bt1"], p["m1"], p["v1"])
    s2, b2 = _fold_bn(p["b2"], p["g2"], p["bt2"], p["m2"], p["v2"])
    cpad = cout_p - cout
    w1 = (p["w1"] * s1[None, None, None, :]).reshape(3, 3 * cin, cout)
    w1 = jnp.pad(w1, ((0, 0), (0, 0), (0, cpad)))                 # (3,3cin,Cp)
    w2 = (p["w2"] * s2[None, None, None, :]).reshape(9, cout, cout)
    w2 = jnp.pad(w2, ((0, 0), (0, cpad), (0, cpad)))              # (9,Cp,Cp)
    b1p = jnp.pad(b1, (0, cpad)).reshape(1, cout_p)
    b2p = jnp.pad(b2, (0, cpad)).reshape(1, cout_p)

    # Per-image interior mask over the flat layout (static; fetched once since
    # its block index never changes across grid steps).
    yy, xx = np.arange(sf) // wf, np.arange(sf) % wf
    inner = ((yy >= 1) & (yy <= ho) & (xx >= 1) & (xx <= wo)).astype(np.float32)
    mask = jnp.asarray(inner[:, None])                            # (sf, 1)

    kernel = functools.partial(_down_fused_kernel, bn=bn, hq=hq, wf=wf, m0=m0,
                               cout_p=cout_p)

    out_flat = pl.pallas_call(
        kernel,
        out_shape=jax.ShapeDtypeStruct((n * sf, cout_p), jnp.float32),
        grid=(n // bn,),
        in_specs=[
            pl.BlockSpec((2, rows, cin3), lambda i: (0, i, 0)),
            pl.BlockSpec((sf, 1), lambda i: (0, 0)),
            pl.BlockSpec((3, 3 * cin, cout_p), lambda i: (0, 0, 0)),
            pl.BlockSpec((1, cout_p), lambda i: (0, 0)),
            pl.BlockSpec((9, cout_p, cout_p), lambda i: (0, 0, 0)),
            pl.BlockSpec((1, cout_p), lambda i: (0, 0)),
        ],
        out_specs=pl.BlockSpec((rows, cout_p), lambda i: (i, 0)),
        scratch_shapes=[
            pltpu.VMEM((prow, cin3), jnp.float32),     # flat padded pooled image
            pltpu.VMEM((prow, cout_p), jnp.float32),   # flat padded conv1 act
        ],
        compiler_params=pltpu.CompilerParams(
            dimension_semantics=("parallel",),
            vmem_limit_bytes=vmem_limit),
    )(xk, mask, w1, b1p, w2, b2p)

    # Crop the ring + lane padding (fused with the NCHW transpose by XLA).
    out = out_flat.reshape(n, hq, wf, cout_p)[:, 1:ho + 1, 1:wo + 1, :cout]
    return jnp.transpose(out, (0, 3, 1, 2))


# ------------------------- Deterministic parameters ------------------------ #

def init_params(key, in_ch, out_ch):
    ks = jax.random.split(key, 8)

    def conv_init(k, cin, cout):
        fan_in = 9 * cin
        return jax.random.normal(k, (3, 3, cin, cout), jnp.float32) / np.sqrt(fan_in)

    return {
        "w1": conv_init(ks[0], in_ch, out_ch),
        "b1": 0.01 * jax.random.normal(ks[1], (out_ch,), jnp.float32),
        "g1": 1.0 + 0.1 * jax.random.normal(ks[2], (out_ch,), jnp.float32),
        "bt1": 0.1 * jax.random.normal(ks[3], (out_ch,), jnp.float32),
        "m1": jnp.zeros((out_ch,), jnp.float32),
        "v1": jnp.ones((out_ch,), jnp.float32),
        "w2": conv_init(ks[4], out_ch, out_ch),
        "b2": 0.01 * jax.random.normal(ks[5], (out_ch,), jnp.float32),
        "g2": 1.0 + 0.1 * jax.random.normal(ks[6], (out_ch,), jnp.float32),
        "bt2": 0.1 * jax.random.normal(ks[7], (out_ch,), jnp.float32),
        "m2": jnp.zeros((out_ch,), jnp.float32),
        "v2": jnp.ones((out_ch,), jnp.float32),
    }


# ------------------------------ Reference ---------------------------------- #

def _ref_conv_bn_relu(x_nchw, w_hwio, b, g, bt, m, v, eps=1e-5):
    y = jax.lax.conv_general_dilated(
        x_nchw, w_hwio, window_strides=(1, 1), padding="SAME",
        dimension_numbers=("NCHW", "HWIO", "NCHW"))
    y = y + b[None, :, None, None]
    y = (y - m[None, :, None, None]) / jnp.sqrt(v + eps)[None, :, None, None]
    y = y * g[None, :, None, None] + bt[None, :, None, None]
    return jnp.maximum(y, 0.0)


def ref_down(x_nchw, p):
    x = jax.lax.reduce_window(x_nchw, -jnp.inf, jax.lax.max,
                              (1, 1, 2, 2), (1, 1, 2, 2), "VALID")
    x = _ref_conv_bn_relu(x, p["w1"], p["b1"], p["g1"], p["bt1"], p["m1"], p["v1"])
    x = _ref_conv_bn_relu(x, p["w2"], p["b2"], p["g2"], p["bt2"], p["m2"], p["v2"])
    return x


# --------------------------------- Main ------------------------------------ #

if __name__ == "__main__":
    N, IN_CH, OUT_CH, H, W = 2, 4, 8, 16, 16

    key = jax.random.PRNGKey(0)
    kx, kp = jax.random.split(key)
    x = jax.random.normal(kx, (N, IN_CH, H, W), jnp.float32)
    params = init_params(kp, IN_CH, OUT_CH)

    fwd = jax.jit(down_forward)
    out = jax.block_until_ready(fwd(x, params))
    assert out.shape == (N, OUT_CH, H // 2, W // 2), out.shape

    ref = jax.block_until_ready(ref_down(x, params))
    np.testing.assert_allclose(np.asarray(out), np.asarray(ref),
                               rtol=1e-4, atol=1e-4)
    print("KERNEL_OK")
</pallas_src>

<mosaic_0001>
module attributes {stable_mosaic.version = 11 : i64} {
  func.func @_down_fused_kernel(%arg0: i32, %arg1: memref<2x160x12xf32, #tpu.memory_space<vmem>>, %arg2: memref<160x1xf32, #tpu.memory_space<vmem>>, %arg3: memref<3x12x128xf32, #tpu.memory_space<vmem>>, %arg4: memref<1x128xf32, #tpu.memory_space<vmem>>, %arg5: memref<9x128x128xf32, #tpu.memory_space<vmem>>, %arg6: memref<1x128xf32, #tpu.memory_space<vmem>>, %arg7: memref<160x128xf32, #tpu.memory_space<vmem>>, %arg8: memref<208x12xf32, #tpu.memory_space<vmem>>, %arg9: memref<208x128xf32, #tpu.memory_space<vmem>>) attributes {dimension_semantics = [#tpu.dimension_semantics<parallel>], iteration_bounds = array<i64: 2>, scalar_prefetch = 0 : i64, scratch_operands = 2 : i64, tpu.core_type = #tpu.core_type<tc>, window_params = [{transform_indices = @transform_0, window_bounds = array<i64: 2, 160, 12>}, {pipeline_mode = #tpu.pipeline_mode<synchronous>, transform_indices = @transform_1, window_bounds = array<i64: 160, 1>}, {pipeline_mode = #tpu.pipeline_mode<synchronous>, transform_indices = @transform_2, window_bounds = array<i64: 3, 12, 128>}, {pipeline_mode = #tpu.pipeline_mode<synchronous>, transform_indices = @transform_3, window_bounds = array<i64: 1, 128>}, {pipeline_mode = #tpu.pipeline_mode<synchronous>, transform_indices = @transform_4, window_bounds = array<i64: 9, 128, 128>}, {pipeline_mode = #tpu.pipeline_mode<synchronous>, transform_indices = @transform_5, window_bounds = array<i64: 1, 128>}, {transform_indices = @transform_6, window_bounds = array<i64: 160, 128>}]} {
    %c0 = arith.constant 0 : index
    %c0_0 = arith.constant 0 : index
    %c0_1 = arith.constant 0 : index
    %0 = vector.load %arg1[%c0, %c0_0, %c0_1] : memref<2x160x12xf32, #tpu.memory_space<vmem>>, vector<1x160x12xf32>
    %1 = vector.shape_cast %0 : vector<1x160x12xf32> to vector<160x12xf32>
    %c1 = arith.constant 1 : index
    %c0_2 = arith.constant 0 : index
    %c0_3 = arith.constant 0 : index
    %2 = vector.load %arg1[%c1, %c0_2, %c0_3] : memref<2x160x12xf32, #tpu.memory_space<vmem>>, vector<1x160x12xf32>
    %3 = vector.shape_cast %2 : vector<1x160x12xf32> to vector<160x12xf32>
    %4 = arith.maximumf %1, %3 : vector<160x12xf32>
    %c24 = arith.constant 24 : index
    %c0_4 = arith.constant 0 : index
    %5 = vector.load %arg8[%c24, %c0_4] : memref<208x12xf32, #tpu.memory_space<vmem>>, vector<160x12xf32>
    tpu.vector_store %arg8[%c24, %c0_4], %4 {strides = array<i32>} : memref<208x12xf32, #tpu.memory_space<vmem>>, vector<160x12xf32>,
    %cst = arith.constant 0.000000e+00 : f32
    %6 = vector.broadcast %cst : f32 to vector<24x12xf32>
    %cst_5 = arith.constant 0.000000e+00 : f32
    %7 = vector.broadcast %cst_5 : f32 to vector<24x128xf32>
    %c0_6 = arith.constant 0 : index
    %c0_7 = arith.constant 0 : index
    %8 = vector.load %arg8[%c0_6, %c0_7] : memref<208x12xf32, #tpu.memory_space<vmem>>, vector<24x12xf32>
    tpu.vector_store %arg8[%c0_6, %c0_7], %6 {strides = array<i32>} : memref<208x12xf32, #tpu.memory_space<vmem>>, vector<24x12xf32>,
    %c184 = arith.constant 184 : index
    %c0_8 = arith.constant 0 : index
    %9 = vector.load %arg8[%c184, %c0_8] : memref<208x12xf32, #tpu.memory_space<vmem>>, vector<24x12xf32>
    tpu.vector_store %arg8[%c184, %c0_8], %6 {strides = array<i32>} : memref<208x12xf32, #tpu.memory_space<vmem>>, vector<24x12xf32>,
    %c0_9 = arith.constant 0 : index
    %c0_10 = arith.constant 0 : index
    %10 = vector.load %arg9[%c0_9, %c0_10] : memref<208x128xf32, #tpu.memory_space<vmem>>, vector<24x128xf32>
    tpu.vector_store %arg9[%c0_9, %c0_10], %7 {strides = array<i32>} : memref<208x128xf32, #tpu.memory_space<vmem>>, vector<24x128xf32>,
    %c184_11 = arith.constant 184 : index
    %c0_12 = arith.constant 0 : index
    %11 = vector.load %arg9[%c184_11, %c0_12] : memref<208x128xf32, #tpu.memory_space<vmem>>, vector<24x128xf32>
    tpu.vector_store %arg9[%c184_11, %c0_12], %7 {strides = array<i32>} : memref<208x128xf32, #tpu.memory_space<vmem>>, vector<24x128xf32>,
    %c8 = arith.constant 8 : index
    %c0_13 = arith.constant 0 : index
    %12 = vector.load %arg8[%c8, %c0_13] : memref<208x12xf32, #tpu.memory_space<vmem>>, vector<160x12xf32>
    %c0_14 = arith.constant 0 : index
    %c0_15 = arith.constant 0 : index
    %c0_16 = arith.constant 0 : index
    %13 = vector.load %arg3[%c0_14, %c0_15, %c0_16] : memref<3x12x128xf32, #tpu.memory_space<vmem>>, vector<1x12x128xf32>
    %14 = vector.shape_cast %13 : vector<1x12x128xf32> to vector<12x128xf32>
    %cst_17 = arith.constant dense<0.000000e+00> : vector<160x128xf32>
    %15 = tpu.matmul %12, %14, %cst_17 {dimension_numbers = #tpu.dot_dimension_numbers<[1], [0], [0], [1], [0, 0, 1, 1], [], []>} : vector<160x12xf32>, vector<12x128xf32>, vector<160x128xf32> -> vector<160x128xf32>
    %c24_18 = arith.constant 24 : index
    %c0_19 = arith.constant 0 : index
    %16 = vector.load %arg9[%c24_18, %c0_19] : memref<208x128xf32, #tpu.memory_space<vmem>>, vector<160x128xf32>
    tpu.vector_store %arg9[%c24_18, %c0_19], %15 {strides = array<i32>} : memref<208x128xf32, #tpu.memory_space<vmem>>, vector<160x128xf32>,
    %c24_20 = arith.constant 24 : index
    %c0_21 = arith.constant 0 : index
    %17 = vector.load %arg8[%c24_20, %c0_21] : memref<208x12xf32, #tpu.memory_space<vmem>>, vector<160x12xf32>
    %c1_22 = arith.constant 1 : index
    %c0_23 = arith.constant 0 : index
    %c0_24 = arith.constant 0 : index
    %18 = vector.load %arg3[%c1_22, %c0_23, %c0_24] : memref<3x12x128xf32, #tpu.memory_space<vmem>>, vector<1x12x128xf32>
    %19 = vector.shape_cast %18 : vector<1x12x128xf32> to vector<12x128xf32>
    %cst_25 = arith.constant dense<0.000000e+00> : vector<160x128xf32>
    %20 = tpu.matmul %17, %19, %cst_25 {dimension_numbers = #tpu.dot_dimension_numbers<[1], [0], [0], [1], [0, 0, 1, 1], [], []>} : vector<160x12xf32>, vector<12x128xf32>, vector<160x128xf32> -> vector<160x128xf32>
    %c24_26 = arith.constant 24 : index
    %c0_27 = arith.constant 0 : index
    %21 = vector.load %arg9[%c24_26, %c0_27] : memref<208x128xf32, #tpu.memory_space<vmem>>, vector<160x128xf32>
    %22 = arith.addf %21, %20 : vector<160x128xf32>
    %c24_28 = arith.constant 24 : index
    %c0_29 = arith.constant 0 : index
    %23 = vector.load %arg9[%c24_28, %c0_29] : memref<208x128xf32, #tpu.memory_space<vmem>>, vector<160x128xf32>
    tpu.vector_store %arg9[%c24_28, %c0_29], %22 {strides = array<i32>} : memref<208x128xf32, #tpu.memory_space<vmem>>, vector<160x128xf32>,
    %c40 = arith.constant 40 : index
    %c0_30 = arith.constant 0 : index
    %24 = vector.load %arg8[%c40, %c0_30] : memref<208x12xf32, #tpu.memory_space<vmem>>, vector<160x12xf32>
    %c2 = arith.constant 2 : index
    %c0_31 = arith.constant 0 : index
    %c0_32 = arith.constant 0 : index
    %25 = vector.load %arg3[%c2, %c0_31, %c0_32] : memref<3x12x128xf32, #tpu.memory_space<vmem>>, vector<1x12x128xf32>
    %26 = vector.shape_cast %25 : vector<1x12x128xf32> to vector<12x128xf32>
    %cst_33 = arith.constant dense<0.000000e+00> : vector<160x128xf32>
    %27 = tpu.matmul %24, %26, %cst_33 {dimension_numbers = #tpu.dot_dimension_numbers<[1], [0], [0], [1], [0, 0, 1, 1], [], []>} : vector<160x12xf32>, vector<12x128xf32>, vector<160x128xf32> -> vector<160x128xf32>
    %c24_34 = arith.constant 24 : index
    %c0_35 = arith.constant 0 : index
    %28 = vector.load %arg9[%c24_34, %c0_35] : memref<208x128xf32, #tpu.memory_space<vmem>>, vector<160x128xf32>
    %29 = arith.addf %28, %27 : vector<160x128xf32>
    %c24_36 = arith.constant 24 : index
    %c0_37 = arith.constant 0 : index
    %30 = vector.load %arg9[%c24_36, %c0_37] : memref<208x128xf32, #tpu.memory_space<vmem>>, vector<160x128xf32>
    tpu.vector_store %arg9[%c24_36, %c0_37], %29 {strides = array<i32>} : memref<208x128xf32, #tpu.memory_space<vmem>>, vector<160x128xf32>,
    %c0_38 = arith.constant 0 : index
    %c0_39 = arith.constant 0 : index
    %31 = vector.load %arg2[%c0_38, %c0_39] : memref<160x1xf32, #tpu.memory_space<vmem>>, vector<160x1xf32>
    %cst_40 = arith.constant 0.000000e+00 : f32
    %32 = vector.broadcast %cst_40 : f32 to vector<160x1xf32>
    %33 = arith.cmpf ogt, %31, %32 : vector<160x1xf32>
    %c24_41 = arith.constant 24 : index
    %c0_42 = arith.constant 0 : index
    %34 = vector.load %arg9[%c24_41, %c0_42] : memref<208x128xf32, #tpu.memory_space<vmem>>, vector<160x128xf32>
    %c0_43 = arith.constant 0 : index
    %c0_44 = arith.constant 0 : index
    %35 = vector.load %arg4[%c0_43, %c0_44] : memref<1x128xf32, #tpu.memory_space<vmem>>, vector<1x128xf32>
    %36 = vector.broadcast %35 : vector<1x128xf32> to vector<160x128xf32>
    %37 = arith.addf %34, %36 : vector<160x128xf32>
    %cst_45 = arith.constant 0.000000e+00 : f32
    %38 = vector.broadcast %cst_45 : f32 to vector<160x128xf32>
    %39 = arith.maximumf %37, %38 : vector<160x128xf32>
    %cst_46 = arith.constant 0.000000e+00 : f32
    %40 = vector.shape_cast %33 : vector<160x1xi1> to vector<160x1xi1>
    %41 = vector.broadcast %40 : vector<160x1xi1> to vector<160x128xi1>
    %42 = vector.broadcast %cst_46 : f32 to vector<160x128xf32>
    %43 = arith.select %41, %39, %42 : vector<160x128xi1>, vector<160x128xf32>
    %c24_47 = arith.constant 24 : index
    %c0_48 = arith.constant 0 : index
    %44 = vector.load %arg9[%c24_47, %c0_48] : memref<208x128xf32, #tpu.memory_space<vmem>>, vector<160x128xf32>
    tpu.vector_store %arg9[%c24_47, %c0_48], %43 {strides = array<i32>} : memref<208x128xf32, #tpu.memory_space<vmem>>, vector<160x128xf32>,
    %c7 = arith.constant 7 : index
    %c0_49 = arith.constant 0 : index
    %45 = vector.load %arg9[%c7, %c0_49] : memref<208x128xf32, #tpu.memory_space<vmem>>, vector<160x128xf32>
    %c0_50 = arith.constant 0 : index
    %c0_51 = arith.constant 0 : index
    %c0_52 = arith.constant 0 : index
    %46 = vector.load %arg5[%c0_50, %c0_51, %c0_52] : memref<9x128x128xf32, #tpu.memory_space<vmem>>, vector<1x128x128xf32>
    %47 = vector.shape_cast %46 : vector<1x128x128xf32> to vector<128x128xf32>
    %cst_53 = arith.constant dense<0.000000e+00> : vector<160x128xf32>
    %48 = tpu.matmul %45, %47, %cst_53 {dimension_numbers = #tpu.dot_dimension_numbers<[1], [0], [0], [1], [0, 0, 1, 1], [], []>} : vector<160x128xf32>, vector<128x128xf32>, vector<160x128xf32> -> vector<160x128xf32>
    %c0_54 = arith.constant 0 : index
    %c0_55 = arith.constant 0 : index
    %49 = vector.load %arg7[%c0_54, %c0_55] : memref<160x128xf32, #tpu.memory_space<vmem>>, vector<160x128xf32>
    tpu.vector_store %arg7[%c0_54, %c0_55], %48 {strides = array<i32>} : memref<160x128xf32, #tpu.memory_space<vmem>>, vector<160x128xf32>,
    %c8_56 = arith.constant 8 : index
    %c0_57 = arith.constant 0 : index
    %50 = vector.load %arg9[%c8_56, %c0_57] : memref<208x128xf32, #tpu.memory_space<vmem>>, vector<160x128xf32>
    %c1_58 = arith.constant 1 : index
    %c0_59 = arith.constant 0 : index
    %c0_60 = arith.constant 0 : index
    %51 = vector.load %arg5[%c1_58, %c0_59, %c0_60] : memref<9x128x128xf32, #tpu.memory_space<vmem>>, vector<1x128x128xf32>
    %52 = vector.shape_cast %51 : vector<1x128x128xf32> to vector<128x128xf32>
    %cst_61 = arith.constant dense<0.000000e+00> : vector<160x128xf32>
    %53 = tpu.matmul %50, %52, %cst_61 {dimension_numbers = #tpu.dot_dimension_numbers<[1], [0], [0], [1], [0, 0, 1, 1], [], []>} : vector<160x128xf32>, vector<128x128xf32>, vector<160x128xf32> -> vector<160x128xf32>
    %c0_62 = arith.constant 0 : index
    %c0_63 = arith.constant 0 : index
    %54 = vector.load %arg7[%c0_62, %c0_63] : memref<160x128xf32, #tpu.memory_space<vmem>>, vector<160x128xf32>
    %55 = arith.addf %54, %53 : vector<160x128xf32>
    %c0_64 = arith.constant 0 : index
    %c0_65 = arith.constant 0 : index
    %56 = vector.load %arg7[%c0_64, %c0_65] : memref<160x128xf32, #tpu.memory_space<vmem>>, vector<160x128xf32>
    tpu.vector_store %arg7[%c0_64, %c0_65], %55 {strides = array<i32>} : memref<160x128xf32, #tpu.memory_space<vmem>>, vector<160x128xf32>,
    %c9 = arith.constant 9 : index
    %c0_66 = arith.constant 0 : index
    %57 = vector.load %arg9[%c9, %c0_66] : memref<208x128xf32, #tpu.memory_space<vmem>>, vector<160x128xf32>
    %c2_67 = arith.constant 2 : index
    %c0_68 = arith.constant 0 : index
    %c0_69 = arith.constant 0 : index
    %58 = vector.load %arg5[%c2_67, %c0_68, %c0_69] : memref<9x128x128xf32, #tpu.memory_space<vmem>>, vector<1x128x128xf32>
    %59 = vector.shape_cast %58 : vector<1x128x128xf32> to vector<128x128xf32>
    %cst_70 = arith.constant dense<0.000000e+00> : vector<160x128xf32>
    %60 = tpu.matmul %57, %59, %cst_70 {dimension_numbers = #tpu.dot_dimension_numbers<[1], [0], [0], [1], [0, 0, 1, 1], [], []>} : vector<160x128xf32>, vector<128x128xf32>, vector<160x128xf32> -> vector<160x128xf32>
    %c0_71 = arith.constant 0 : index
    %c0_72 = arith.constant 0 : index
    %61 = vector.load %arg7[%c0_71, %c0_72] : memref<160x128xf32, #tpu.memory_space<vmem>>, vector<160x128xf32>
    %62 = arith.addf %61, %60 : vector<160x128xf32>
    %c0_73 = arith.constant 0 : index
    %c0_74 = arith.constant 0 : index
    %63 = vector.load %arg7[%c0_73, %c0_74] : memref<160x128xf32, #tpu.memory_space<vmem>>, vector<160x128xf32>
    tpu.vector_store %arg7[%c0_73, %c0_74], %62 {strides = array<i32>} : memref<160x128xf32, #tpu.memory_space<vmem>>, vector<160x128xf32>,
    %c23 = arith.constant 23 : index
    %c0_75 = arith.constant 0 : index
    %64 = vector.load %arg9[%c23, %c0_75] : memref<208x128xf32, #tpu.memory_space<vmem>>, vector<160x128xf32>
    %c3 = arith.constant 3 : index
    %c0_76 = arith.constant 0 : index
    %c0_77 = arith.constant 0 : index
    %65 = vector.load %arg5[%c3, %c0_76, %c0_77] : memref<9x128x128xf32, #tpu.memory_space<vmem>>, vector<1x128x128xf32>
    %66 = vector.shape_cast %65 : vector<1x128x128xf32> to vector<128x128xf32>
    %cst_78 = arith.constant dense<0.000000e+00> : vector<160x128xf32>
    %67 = tpu.matmul %64, %66, %cst_78 {dimension_numbers = #tpu.dot_dimension_numbers<[1], [0], [0], [1], [0, 0, 1, 1], [], []>} : vector<160x128xf32>, vector<128x128xf32>, vector<160x128xf32> -> vector<160x128xf32>
    %c0_79 = arith.constant 0 : index
    %c0_80 = arith.constant 0 : index
    %68 = vector.load %arg7[%c0_79, %c0_80] : memref<160x128xf32, #tpu.memory_space<vmem>>, vector<160x128xf32>
    %69 = arith.addf %68, %67 : vector<160x128xf32>
    %c0_81 = arith.constant 0 : index
    %c0_82 = arith.constant 0 : index
    %70 = vector.load %arg7[%c0_81, %c0_82] : memref<160x128xf32, #tpu.memory_space<vmem>>, vector<160x128xf32>
    tpu.vector_store %arg7[%c0_81, %c0_82], %69 {strides = array<i32>} : memref<160x128xf32, #tpu.memory_space<vmem>>, vector<160x128xf32>,
    %c24_83 = arith.constant 24 : index
    %c0_84 = arith.constant 0 : index
    %71 = vector.load %arg9[%c24_83, %c0_84] : memref<208x128xf32, #tpu.memory_space<vmem>>, vector<160x128xf32>
    %c4 = arith.constant 4 : index
    %c0_85 = arith.constant 0 : index
    %c0_86 = arith.constant 0 : index
    %72 = vector.load %arg5[%c4, %c0_85, %c0_86] : memref<9x128x128xf32, #tpu.memory_space<vmem>>, vector<1x128x128xf32>
    %73 = vector.shape_cast %72 : vector<1x128x128xf32> to vector<128x128xf32>
    %cst_87 = arith.constant dense<0.000000e+00> : vector<160x128xf32>
    %74 = tpu.matmul %71, %73, %cst_87 {dimension_numbers = #tpu.dot_dimension_numbers<[1], [0], [0], [1], [0, 0, 1, 1], [], []>} : vector<160x128xf32>, vector<128x128xf32>, vector<160x128xf32> -> vector<160x128xf32>
    %c0_88 = arith.constant 0 : index
    %c0_89 = arith.constant 0 : index
    %75 = vector.load %arg7[%c0_88, %c0_89] : memref<160x128xf32, #tpu.memory_space<vmem>>, vector<160x128xf32>
    %76 = arith.addf %75, %74 : vector<160x128xf32>
    %c0_90 = arith.constant 0 : index
    %c0_91 = arith.constant 0 : index
    %77 = vector.load %arg7[%c0_90, %c0_91] : memref<160x128xf32, #tpu.memory_space<vmem>>, vector<160x128xf32>
    tpu.vector_store %arg7[%c0_90, %c0_91], %76 {strides = array<i32>} : memref<160x128xf32, #tpu.memory_space<vmem>>, vector<160x128xf32>,
    %c25 = arith.constant 25 : index
    %c0_92 = arith.constant 0 : index
    %78 = vector.load %arg9[%c25, %c0_92] : memref<208x128xf32, #tpu.memory_space<vmem>>, vector<160x128xf32>
    %c5 = arith.constant 5 : index
    %c0_93 = arith.constant 0 : index
    %c0_94 = arith.constant 0 : index
    %79 = vector.load %arg5[%c5, %c0_93, %c0_94] : memref<9x128x128xf32, #tpu.memory_space<vmem>>, vector<1x128x128xf32>
    %80 = vector.shape_cast %79 : vector<1x128x128xf32> to vector<128x128xf32>
    %cst_95 = arith.constant dense<0.000000e+00> : vector<160x128xf32>
    %81 = tpu.matmul %78, %80, %cst_95 {dimension_numbers = #tpu.dot_dimension_numbers<[1], [0], [0], [1], [0, 0, 1, 1], [], []>} : vector<160x128xf32>, vector<128x128xf32>, vector<160x128xf32> -> vector<160x128xf32>
    %c0_96 = arith.constant 0 : index
    %c0_97 = arith.constant 0 : index
    %82 = vector.load %arg7[%c0_96, %c0_97] : memref<160x128xf32, #tpu.memory_space<vmem>>, vector<160x128xf32>
    %83 = arith.addf %82, %81 : vector<160x128xf32>
    %c0_98 = arith.constant 0 : index
    %c0_99 = arith.constant 0 : index
    %84 = vector.load %arg7[%c0_98, %c0_99] : memref<160x128xf32, #tpu.memory_space<vmem>>, vector<160x128xf32>
    tpu.vector_store %arg7[%c0_98, %c0_99], %83 {strides = array<i32>} : memref<160x128xf32, #tpu.memory_space<vmem>>, vector<160x128xf32>,
    %c39 = arith.constant 39 : index
    %c0_100 = arith.constant 0 : index
    %85 = vector.load %arg9[%c39, %c0_100] : memref<208x128xf32, #tpu.memory_space<vmem>>, vector<160x128xf32>
    %c6 = arith.constant 6 : index
    %c0_101 = arith.constant 0 : index
    %c0_102 = arith.constant 0 : index
    %86 = vector.load %arg5[%c6, %c0_101, %c0_102] : memref<9x128x128xf32, #tpu.memory_space<vmem>>, vector<1x128x128xf32>
    %87 = vector.shape_cast %86 : vector<1x128x128xf32> to vector<128x128xf32>
    %cst_103 = arith.constant dense<0.000000e+00> : vector<160x128xf32>
    %88 = tpu.matmul %85, %87, %cst_103 {dimension_numbers = #tpu.dot_dimension_numbers<[1], [0], [0], [1], [0, 0, 1, 1], [], []>} : vector<160x128xf32>, vector<128x128xf32>, vector<160x128xf32> -> vector<160x128xf32>
    %c0_104 = arith.constant 0 : index
    %c0_105 = arith.constant 0 : index
    %89 = vector.load %arg7[%c0_104, %c0_105] : memref<160x128xf32, #tpu.memory_space<vmem>>, vector<160x128xf32>
    %90 = arith.addf %89, %88 : vector<160x128xf32>
    %c0_106 = arith.constant 0 : index
    %c0_107 = arith.constant 0 : index
    %91 = vector.load %arg7[%c0_106, %c0_107] : memref<160x128xf32, #tpu.memory_space<vmem>>, vector<160x128xf32>
    tpu.vector_store %arg7[%c0_106, %c0_107], %90 {strides = array<i32>} : memref<160x128xf32, #tpu.memory_space<vmem>>, vector<160x128xf32>,
    %c40_108 = arith.constant 40 : index
    %c0_109 = arith.constant 0 : index
    %92 = vector.load %arg9[%c40_108, %c0_109] : memref<208x128xf32, #tpu.memory_space<vmem>>, vector<160x128xf32>
    %c7_110 = arith.constant 7 : index
    %c0_111 = arith.constant 0 : index
    %c0_112 = arith.constant 0 : index
    %93 = vector.load %arg5[%c7_110, %c0_111, %c0_112] : memref<9x128x128xf32, #tpu.memory_space<vmem>>, vector<1x128x128xf32>
    %94 = vector.shape_cast %93 : vector<1x128x128xf32> to vector<128x128xf32>
    %cst_113 = arith.constant dense<0.000000e+00> : vector<160x128xf32>
    %95 = tpu.matmul %92, %94, %cst_113 {dimension_numbers = #tpu.dot_dimension_numbers<[1], [0], [0], [1], [0, 0, 1, 1], [], []>} : vector<160x128xf32>, vector<128x128xf32>, vector<160x128xf32> -> vector<160x128xf32>
    %c0_114 = arith.constant 0 : index
    %c0_115 = arith.constant 0 : index
    %96 = vector.load %arg7[%c0_114, %c0_115] : memref<160x128xf32, #tpu.memory_space<vmem>>, vector<160x128xf32>
    %97 = arith.addf %96, %95 : vector<160x128xf32>
    %c0_116 = arith.constant 0 : index
    %c0_117 = arith.constant 0 : index
    %98 = vector.load %arg7[%c0_116, %c0_117] : memref<160x128xf32, #tpu.memory_space<vmem>>, vector<160x128xf32>
    tpu.vector_store %arg7[%c0_116, %c0_117], %97 {strides = array<i32>} : memref<160x128xf32, #tpu.memory_space<vmem>>, vector<160x128xf32>,
    %c41 = arith.constant 41 : index
    %c0_118 = arith.constant 0 : index
    %99 = vector.load %arg9[%c41, %c0_118] : memref<208x128xf32, #tpu.memory_space<vmem>>, vector<160x128xf32>
    %c8_119 = arith.constant 8 : index
    %c0_120 = arith.constant 0 : index
    %c0_121 = arith.constant 0 : index
    %100 = vector.load %arg5[%c8_119, %c0_120, %c0_121] : memref<9x128x128xf32, #tpu.memory_space<vmem>>, vector<1x128x128xf32>
    %101 = vector.shape_cast %100 : vector<1x128x128xf32> to vector<128x128xf32>
    %cst_122 = arith.constant dense<0.000000e+00> : vector<160x128xf32>
    %102 = tpu.matmul %99, %101, %cst_122 {dimension_numbers = #tpu.dot_dimension_numbers<[1], [0], [0], [1], [0, 0, 1, 1], [], []>} : vector<160x128xf32>, vector<128x128xf32>, vector<160x128xf32> -> vector<160x128xf32>
    %c0_123 = arith.constant 0 : index
    %c0_124 = arith.constant 0 : index
    %103 = vector.load %arg7[%c0_123, %c0_124] : memref<160x128xf32, #tpu.memory_space<vmem>>, vector<160x128xf32>
    %104 = arith.addf %103, %102 : vector<160x128xf32>
    %c0_125 = arith.constant 0 : index
    %c0_126 = arith.constant 0 : index
    %105 = vector.load %arg7[%c0_125, %c0_126] : memref<160x128xf32, #tpu.memory_space<vmem>>, vector<160x128xf32>
    tpu.vector_store %arg7[%c0_125, %c0_126], %104 {strides = array<i32>} : memref<160x128xf32, #tpu.memory_space<vmem>>, vector<160x128xf32>,
    %c0_127 = arith.constant 0 : index
    %c0_128 = arith.constant 0 : index
    %106 = vector.load %arg7[%c0_127, %c0_128] : memref<160x128xf32, #tpu.memory_space<vmem>>, vector<160x128xf32>
    %c0_129 = arith.constant 0 : index
    %c0_130 = arith.constant 0 : index
    %107 = vector.load %arg6[%c0_129, %c0_130] : memref<1x128xf32, #tpu.memory_space<vmem>>, vector<1x128xf32>
    %108 = vector.broadcast %107 : vector<1x128xf32> to vector<160x128xf32>
    %109 = arith.addf %106, %108 : vector<160x128xf32>
    %cst_131 = arith.constant 0.000000e+00 : f32
    %110 = vector.broadcast %cst_131 : f32 to vector<160x128xf32>
    %111 = arith.maximumf %109, %110 : vector<160x128xf32>
    %c0_132 = arith.constant 0 : index
    %c0_133 = arith.constant 0 : index
    %112 = vector.load %arg7[%c0_132, %c0_133] : memref<160x128xf32, #tpu.memory_space<vmem>>, vector<160x128xf32>
    tpu.vector_store %arg7[%c0_132, %c0_133], %111 {strides = array<i32>} : memref<160x128xf32, #tpu.memory_space<vmem>>, vector<160x128xf32>,
    return
  }
  func.func @transform_0(%arg0: i32) -> (i32, i32, i32) {
    %c0_i32 = arith.constant 0 : i32
    %c0_i32_0 = arith.constant 0 : i32
    %c0_i32_1 = arith.constant 0 : i32
    return %c0_i32, %arg0, %c0_i32_0 : i32, i32, i32
  }
  func.func @transform_1(%arg0: i32) -> (i32, i32) {
    %c0_i32 = arith.constant 0 : i32
    %c0_i32_0 = arith.constant 0 : i32
    %c0_i32_1 = arith.constant 0 : i32
    return %c0_i32, %c0_i32_0 : i32, i32
  }
  func.func @transform_2(%arg0: i32) -> (i32, i32, i32) {
    %c0_i32 = arith.constant 0 : i32
    %c0_i32_0 = arith.constant 0 : i32
    %c0_i32_1 = arith.constant 0 : i32
    %c0_i32_2 = arith.constant 0 : i32
    return %c0_i32, %c0_i32_0, %c0_i32_1 : i32, i32, i32
  }
  func.func @transform_3(%arg0: i32) -> (i32, i32) {
    %c0_i32 = arith.constant 0 : i32
    %c0_i32_0 = arith.constant 0 : i32
    %c0_i32_1 = arith.constant 0 : i32
    return %c0_i32, %c0_i32_0 : i32, i32
  }
  func.func @transform_4(%arg0: i32) -> (i32, i32, i32) {
    %c0_i32 = arith.constant 0 : i32
    %c0_i32_0 = arith.constant 0 : i32
    %c0_i32_1 = arith.constant 0 : i32
    %c0_i32_2 = arith.constant 0 : i32
    return %c0_i32, %c0_i32_0, %c0_i32_1 : i32, i32, i32
  }
  func.func @transform_5(%arg0: i32) -> (i32, i32) {
    %c0_i32 = arith.constant 0 : i32
    %c0_i32_0 = arith.constant 0 : i32
    %c0_i32_1 = arith.constant 0 : i32
    return %c0_i32, %c0_i32_0 : i32, i32
  }
  func.func @transform_6(%arg0: i32) -> (i32, i32) {
    %c0_i32 = arith.constant 0 : i32
    %c0_i32_0 = arith.constant 0 : i32
    return %arg0, %c0_i32 : i32, i32
  }
}

</mosaic_0001>

<llo_original>
// kernel: down_forward.1
$region0: #{down_forward.1}
  #allocation0 [shape = 'u32[]', space=smem, size = 0x4, offset = 0x4, fixed_abs, tag = 'smem constant byte address 0x4 - core index']
  #allocation1 [shape = 'u32[144,128]{1,0:T(1,128)}', space=vmem, size = 0x12000, scoped, tag = 'internal scratch']
  #allocation2 [shape = 'f32[208,12]{1,0:T(8,128)}', space=vmem, size = 0x1a000, scoped, tag = 'scratch operand']
  #allocation3 [shape = 'f32[208,128]{1,0:T(8,128)}', space=vmem, size = 0x1a000, scoped, tag = 'scratch operand']
  %s0 = inlined_call_operand.vmem [shape: f32[2,320,12], index: 0, kind: input, shape index: {}]
  %s1 = inlined_call_operand.vmem [shape: f32[160,1], index: 1, kind: input, shape index: {}]
  %s2 = inlined_call_operand.vmem [shape: f32[3,12,128], index: 2, kind: input, shape index: {}]
  %s3 = inlined_call_operand.vmem [shape: f32[1,128], index: 3, kind: input, shape index: {}]
  %s4 = inlined_call_operand.vmem [shape: f32[9,128,128], index: 4, kind: input, shape index: {}]
  %s5 = inlined_call_operand.vmem [shape: f32[1,128], index: 5, kind: input, shape index: {}]
  %s6 = inlined_call_operand.vmem [shape: f32[320,128], index: 6, kind: output, shape index: {}]
  %s7 = sld [smem:[#allocation0]]
  $region95: #{down_forward.1} parent=0
    _
  %s9 = ssub.s32 1, %s7
  %s10 = scalar_select 0, %s9, %s7
  $region1: #{down_forward.1} parent=0
    #allocation4 [shape = 'u8[327680]{0}', space=vmem, size = 0x50000, scoped, tag = 'input window, operand 0']
    loop: start=0, step=1, limit=4
    $region2: #{down_forward.1} parent=1 // loop_pre_header
      _
    $region3: #{down_forward.1} parent=1 // loop_header
      %s12 = sphi 0, %s16
      %p13 = scmp.ge.s32.totalorder %s12, 4
      %s22 = sphi 0, %s24
      %s25 = sphi 0, %s22
      %s26 = sphi 0, %s25
      %s42 = sphi 0, %s26
      %s46 = sphi 0, %s46
      %s48 = sphi 0, %s46
      %s49 = sphi 0, %s48
      %s63 = sphi 0, %s49
      %s67 = sphi 0, %s67
      %s69 = sphi 0, %s67
      %s70 = sphi 0, %s69
      %s84 = sphi 0, %s70
      %s88 = sphi 0, %s88
      %s90 = sphi 0, %s88
      %s91 = sphi 0, %s90
      %s105 = sphi 0, %s91
      %s109 = sphi 0, %s109
      %s111 = sphi 0, %s109
      %s112 = sphi 0, %s111
      %s126 = sphi 0, %s112
      %s130 = sphi 0, %s130
      %s132 = sphi 0, %s130
      %s133 = sphi 0, %s132
      %s147 = sphi 0, %s133
      %s153 = sphi 0, %s155
      %s156 = sphi 0, %s153
      %s157 = sphi 0, %s156
      %s173 = sphi 0, %s157
    $region4: #{down_forward.1} parent=1 // loop_header_branch
      %15 = sbr.rel (%p13) target = $region8
    $region5: #{down_forward.1} parent=1 // loop_body
      %s17 = ssub.s32 %s12, 1
      %s18 = ssub.s32 %s12, 2
      %s19 = sadd.s32 %s12, 1
      %s20 = ssub.s32 %s12, %s19
      %p21 = scmp.eq.s32.totalorder %s20, 0
      %s23 = sadd.s32 %s22, 1
      %s24 = scalar_select %p21, %s22, %s23
      %p27 = pneg %p21
      %p28 = scmp.eq.s32.totalorder %s12, 1
      %p29 = por %p27, %p28
      %p30 = scmp.ne.s32.totalorder %s22, %s25
      %p31 = scmp.eq.s32.totalorder %s12, 0
      %p32 = por %p30, %p31
      %p33 = scmp.ne.s32.totalorder %s22, %s25
      %p34 = scmp.eq.s32.totalorder %s17, 1
      %p35 = por %p33, %p34
      %p36 = scmp.ne.s32.totalorder %s25, %s26
      %p37 = scmp.eq.s32.totalorder %s17, 0
      %p38 = por %p36, %p37
      %p39 = scmp.ne.s32.totalorder %s25, %s26
      %p40 = scmp.eq.s32.totalorder %s18, 1
      %p41 = por %p39, %p40
      %p43 = scmp.ne.s32.totalorder %s26, %s42
      %p44 = scmp.eq.s32.totalorder %s18, 0
      %p45 = por %p43, %p44
      %s47 = sadd.s32 %s46, 1
      %p50 = scmp.eq.s32.totalorder %s12, 1
      %p51 = scmp.ne.s32.totalorder %s46, %s48
      %p52 = scmp.eq.s32.totalorder %s12, 0
      %p53 = por %p51, %p52
      %p54 = scmp.ne.s32.totalorder %s46, %s48
      %p55 = scmp.eq.s32.totalorder %s17, 1
      %p56 = por %p54, %p55
      %p57 = scmp.ne.s32.totalorder %s48, %s49
      %p58 = scmp.eq.s32.totalorder %s17, 0
      %p59 = por %p57, %p58
      %p60 = scmp.ne.s32.totalorder %s48, %s49
      %p61 = scmp.eq.s32.totalorder %s18, 1
      %p62 = por %p60, %p61
      %p64 = scmp.ne.s32.totalorder %s49, %s63
      %p65 = scmp.eq.s32.totalorder %s18, 0
      %p66 = por %p64, %p65
      %s68 = sadd.s32 %s67, 1
      %p71 = scmp.eq.s32.totalorder %s12, 1
      %p72 = scmp.ne.s32.totalorder %s67, %s69
      %p73 = scmp.eq.s32.totalorder %s12, 0
      %p74 = por %p72, %p73
      %p75 = scmp.ne.s32.totalorder %s67, %s69
      %p76 = scmp.eq.s32.totalorder %s17, 1
      %p77 = por %p75, %p76
      %p78 = scmp.ne.s32.totalorder %s69, %s70
      %p79 = scmp.eq.s32.totalorder %s17, 0
      %p80 = por %p78, %p79
      %p81 = scmp.ne.s32.totalorder %s69, %s70
      %p82 = scmp.eq.s32.totalorder %s18, 1
      %p83 = por %p81, %p82
      %p85 = scmp.ne.s32.totalorder %s70, %s84
      %p86 = scmp.eq.s32.totalorder %s18, 0
      %p87 = por %p85, %p86
      %s89 = sadd.s32 %s88, 1
      %p92 = scmp.eq.s32.totalorder %s12, 1
      %p93 = scmp.ne.s32.totalorder %s88, %s90
      %p94 = scmp.eq.s32.totalorder %s12, 0
      %p95 = por %p93, %p94
      %p96 = scmp.ne.s32.totalorder %s88, %s90
      %p97 = scmp.eq.s32.totalorder %s17, 1
      %p98 = por %p96, %p97
      %p99 = scmp.ne.s32.totalorder %s90, %s91
      %p100 = scmp.eq.s32.totalorder %s17, 0
      %p101 = por %p99, %p100
      %p102 = scmp.ne.s32.totalorder %s90, %s91
      %p103 = scmp.eq.s32.totalorder %s18, 1
      %p104 = por %p102, %p103
      %p106 = scmp.ne.s32.totalorder %s91, %s105
      %p107 = scmp.eq.s32.totalorder %s18, 0
      %p108 = por %p106, %p107
      %s110 = sadd.s32 %s109, 1
      %p113 = scmp.eq.s32.totalorder %s12, 1
      %p114 = scmp.ne.s32.totalorder %s109, %s111
      %p115 = scmp.eq.s32.totalorder %s12, 0
      %p116 = por %p114, %p115
      %p117 = scmp.ne.s32.totalorder %s109, %s111
      %p118 = scmp.eq.s32.totalorder %s17, 1
      %p119 = por %p117, %p118
      %p120 = scmp.ne.s32.totalorder %s111, %s112
      %p121 = scmp.eq.s32.totalorder %s17, 0
      %p122 = por %p120, %p121
      %p123 = scmp.ne.s32.totalorder %s111, %s112
      %p124 = scmp.eq.s32.totalorder %s18, 1
      %p125 = por %p123, %p124
      %p127 = scmp.ne.s32.totalorder %s112, %s126
      %p128 = scmp.eq.s32.totalorder %s18, 0
      %p129 = por %p127, %p128
      %s131 = sadd.s32 %s130, 1
      %p134 = scmp.eq.s32.totalorder %s12, 1
      %p135 = scmp.ne.s32.totalorder %s130, %s132
      %p136 = scmp.eq.s32.totalorder %s12, 0
      %p137 = por %p135, %p136
      %p138 = scmp.ne.s32.totalorder %s130, %s132
      %p139 = scmp.eq.s32.totalorder %s17, 1
      %p140 = por %p138, %p139
      %p141 = scmp.ne.s32.totalorder %s132, %s133
      %p142 = scmp.eq.s32.totalorder %s17, 0
      %p143 = por %p141, %p142
      %p144 = scmp.ne.s32.totalorder %s132, %s133
      %p145 = scmp.eq.s32.totalorder %s18, 1
      %p146 = por %p144, %p145
      %p148 = scmp.ne.s32.totalorder %s133, %s147
      %p149 = scmp.eq.s32.totalorder %s18, 0
      %p150 = por %p148, %p149
      %s151 = ssub.s32 %s12, %s19
      %p152 = scmp.eq.s32.totalorder %s151, 0
      %s154 = sadd.s32 %s153, 1
      %s155 = scalar_select %p152, %s153, %s154
      %p158 = pneg %p152
      %p159 = scmp.eq.s32.totalorder %s12, 1
      %p160 = por %p158, %p159
      %p161 = scmp.ne.s32.totalorder %s153, %s156
      %p162 = scmp.eq.s32.totalorder %s12, 0
      %p163 = por %p161, %p162
      %p164 = scmp.ne.s32.totalorder %s153, %s156
      %p165 = scmp.eq.s32.totalorder %s17, 1
      %p166 = por %p164, %p165
      %p167 = scmp.ne.s32.totalorder %s156, %s157
      %p168 = scmp.eq.s32.totalorder %s17, 0
      %p169 = por %p167, %p168
      %p170 = scmp.ne.s32.totalorder %s156, %s157
      %p171 = scmp.eq.s32.totalorder %s18, 1
      %p172 = por %p170, %p171
      %p174 = scmp.ne.s32.totalorder %s157, %s173
      %p175 = scmp.eq.s32.totalorder %s18, 0
      %p176 = por %p174, %p175
      %p177 = scmp.le.s32.totalorder 1, %s12
      %p178 = scmp.lt.s32.totalorder %s12, 3
      %p179 = pnand %p177, %p178
      %p180 = pneg %p179
      // Predicated region
      $region9: #{down_forward.1} parent=5 // pred_check
        _
      $region10: #{down_forward.1} parent=5 // pred_check_branch
        %182 = sbr.rel (%p179) target = $region12
      $region11: #{down_forward.1} parent=5 // pred_region
        %s183 = ssub.s32 %s12, 1
        // Predicated region
        $region13: #{down_forward.1} parent=11 // pred_check
          %p184 = pneg %p59
        $region14: #{down_forward.1} parent=11 // pred_check_branch
          %186 = sbr.rel (%p184) target = $region16
        $region15: #{down_forward.1} parent=11 // pred_region
          _
        $region16: #{down_forward.1} parent=11 // pred_fallthru
          _
        // Predicated region
        $region17: #{down_forward.1} parent=11 // pred_check
          %p187 = pneg %p80
        $region18: #{down_forward.1} parent=11 // pred_check_branch
          %189 = sbr.rel (%p187) target = $region20
        $region19: #{down_forward.1} parent=11 // pred_region
          _
        $region20: #{down_forward.1} parent=11 // pred_fallthru
          _
        // Predicated region
        $region21: #{down_forward.1} parent=11 // pred_check
          %p190 = pneg %p101
        $region22: #{down_forward.1} parent=11 // pred_check_branch
          %192 = sbr.rel (%p190) target = $region24
        $region23: #{down_forward.1} parent=11 // pred_region
          _
        $region24: #{down_forward.1} parent=11 // pred_fallthru
          _
        // Predicated region
        $region25: #{down_forward.1} parent=11 // pred_check
          %p193 = pneg %p122
        $region26: #{down_forward.1} parent=11 // pred_check_branch
          %195 = sbr.rel (%p193) target = $region28
        $region27: #{down_forward.1} parent=11 // pred_region
          _
        $region28: #{down_forward.1} parent=11 // pred_fallthru
          _
        // Predicated region
        $region29: #{down_forward.1} parent=11 // pred_check
          %p196 = pneg %p143
        $region30: #{down_forward.1} parent=11 // pred_check_branch
          %198 = sbr.rel (%p196) target = $region32
        $region31: #{down_forward.1} parent=11 // pred_region
          _
        $region32: #{down_forward.1} parent=11 // pred_fallthru
          _
      $region12: #{down_forward.1} parent=5 // pred_fallthru
        _
      %p199 = scmp.lt.s32.totalorder %s12, 2
      // Predicated region
      $region33: #{down_forward.1} parent=5 // pred_check
        %p200 = pneg %p199
      $region34: #{down_forward.1} parent=5 // pred_check_branch
        %202 = sbr.rel (%p200) target = $region36
      $region35: #{down_forward.1} parent=5 // pred_region
        // Predicated region
        $region37: #{down_forward.1} parent=35 // pred_check
          %p203 = pneg %p32
        $region38: #{down_forward.1} parent=35 // pred_check_branch
          %205 = sbr.rel (%p203) target = $region40
        $region39: #{down_forward.1} parent=35 // pred_region
          %s206 = sand.u32 %s22, 1
          %s207 = sand.u32 %s22, 1
          %s208 = smul.addr %s207, 320
          %s209 = scalar_lea.vmem [#allocation4], %s208
          %s210 = smul.u32 20, %s12
          %s211 = smul.addr %s210, 8
          %s212 = scalar_lea.vmem %s0, %s211
          // Predicated region
          $region41: #{down_forward.1} parent=39 // pred_check
            _
          $region42: #{down_forward.1} parent=39 // pred_check_branch
            %214 = sbr.rel (0) target = $region44
          $region43: #{down_forward.1} parent=39 // pred_region
            // Predicated region
            $region45: #{down_forward.1} parent=43 // pred_check
              _
            $region46: #{down_forward.1} parent=43 // pred_check_branch
              %216 = sbr.rel (0) target = $region48
            $region47: #{down_forward.1} parent=43 // pred_region
              // Predicated region
              $region60: #{down_forward.1} parent=47 // pred_check
                _
              $region61: #{down_forward.1} parent=47 // pred_check_branch
                %310 = sbr.rel (0) target = $region63
              $region62: #{down_forward.1} parent=47 // pred_region
                loop: start=0, step=1, limit=1
                $region64: #{down_forward.1} parent=62 // loop_pre_header
                  _
                $region65: #{down_forward.1} parent=62 // loop_header
                  %s312 = sphi 0, %s316
                  %p313 = scmp.ge.s32.totalorder %s312, 1
                  %s317 = sphi %s212, %s212
                  %s318 = sphi %s209, %s209
                $region66: #{down_forward.1} parent=62 // loop_header_branch
                  %315 = sbr.rel (%p313) target = $region70
                $region67: #{down_forward.1} parent=62 // loop_body
                  %v319 = vld [vmem:[%s317] sm:$0xff]
                  %320 = vst [vmem:[%s318] sm:$0xff] %v319
                  %v321 = vld [vmem:[%s317 + $0x8] sm:$0xff]
                  %322 = vst [vmem:[%s318 + $0x8] sm:$0xff] %v321
                  %v323 = vld [vmem:[%s317 + $0x10] sm:$0xff]
                  %324 = vst [vmem:[%s318 + $0x10] sm:$0xff] %v323
                  %v325 = vld [vmem:[%s317 + $0x18] sm:$0xff]
                  %326 = vst [vmem:[%s318 + $0x18] sm:$0xff] %v325
                  %v327 = vld [vmem:[%s317 + $0x20] sm:$0xff]
                  %328 = vst [vmem:[%s318 + $0x20] sm:$0xff] %v327
                  %v329 = vld [vmem:[%s317 + $0x28] sm:$0xff]
                  %330 = vst [vmem:[%s318 + $0x28] sm:$0xff] %v329
                  %v331 = vld [vmem:[%s317 + $0x30] sm:$0xff]
                  %332 = vst [vmem:[%s318 + $0x30] sm:$0xff] %v331
                  %v333 = vld [vmem:[%s317 + $0x38] sm:$0xff]
                  %334 = vst [vmem:[%s318 + $0x38] sm:$0xff] %v333
                  %v335 = vld [vmem:[%s317 + $0x40] sm:$0xff]
                  %336 = vst [vmem:[%s318 + $0x40] sm:$0xff] %v335
                  %v337 = vld [vmem:[%s317 + $0x48] sm:$0xff]
                  %338 = vst [vmem:[%s318 + $0x48] sm:$0xff] %v337
                  %v339 = vld [vmem:[%s317 + $0x50] sm:$0xff]
                  %340 = vst [vmem:[%s318 + $0x50] sm:$0xff] %v339
                  %v341 = vld [vmem:[%s317 + $0x58] sm:$0xff]
                  %342 = vst [vmem:[%s318 + $0x58] sm:$0xff] %v341
                  %v343 = vld [vmem:[%s317 + $0x60] sm:$0xff]
                  %344 = vst [vmem:[%s318 + $0x60] sm:$0xff] %v343
                  %v345 = vld [vmem:[%s317 + $0x68] sm:$0xff]
                  %346 = vst [vmem:[%s318 + $0x68] sm:$0xff] %v345
                  %v347 = vld [vmem:[%s317 + $0x70] sm:$0xff]
                  %348 = vst [vmem:[%s318 + $0x70] sm:$0xff] %v347
                  %v349 = vld [vmem:[%s317 + $0x78] sm:$0xff]
                  %350 = vst [vmem:[%s318 + $0x78] sm:$0xff] %v349
                  %v351 = vld [vmem:[%s317 + $0x80] sm:$0xff]
                  %352 = vst [vmem:[%s318 + $0x80] sm:$0xff] %v351
                  %v353 = vld [vmem:[%s317 + $0x88] sm:$0xff]
                  %354 = vst [vmem:[%s318 + $0x88] sm:$0xff] %v353
                  %v355 = vld [vmem:[%s317 + $0x90] sm:$0xff]
                  %356 = vst [vmem:[%s318 + $0x90] sm:$0xff] %v355
                  %v357 = vld [vmem:[%s317 + $0x98] sm:$0xff]
                  %358 = vst [vmem:[%s318 + $0x98] sm:$0xff] %v357
                  %v359 = vld [vmem:[%s317 + $0x140] sm:$0xff]
                  %360 = vst [vmem:[%s318 + $0xa0] sm:$0xff] %v359
                  %v361 = vld [vmem:[%s317 + $0x148] sm:$0xff]
                  %362 = vst [vmem:[%s318 + $0xa8] sm:$0xff] %v361
                  %v363 = vld [vmem:[%s317 + $0x150] sm:$0xff]
                  %364 = vst [vmem:[%s318 + $0xb0] sm:$0xff] %v363
                  %v365 = vld [vmem:[%s317 + $0x158] sm:$0xff]
                  %366 = vst [vmem:[%s318 + $0xb8] sm:$0xff] %v365
                  %v367 = vld [vmem:[%s317 + $0x160] sm:$0xff]
                  %368 = vst [vmem:[%s318 + $0xc0] sm:$0xff] %v367
                  %v369 = vld [vmem:[%s317 + $0x168] sm:$0xff]
                  %370 = vst [vmem:[%s318 + $0xc8] sm:$0xff] %v369
                  %v371 = vld [vmem:[%s317 + $0x170] sm:$0xff]
                  %372 = vst [vmem:[%s318 + $0xd0] sm:$0xff] %v371
                  %v373 = vld [vmem:[%s317 + $0x178] sm:$0xff]
                  %374 = vst [vmem:[%s318 + $0xd8] sm:$0xff] %v373
                  %v375 = vld [vmem:[%s317 + $0x180] sm:$0xff]
                  %376 = vst [vmem:[%s318 + $0xe0] sm:$0xff] %v375
                  %v377 = vld [vmem:[%s317 + $0x188] sm:$0xff]
                  %378 = vst [vmem:[%s318 + $0xe8] sm:$0xff] %v377
                  %v379 = vld [vmem:[%s317 + $0x190] sm:$0xff]
                  %380 = vst [vmem:[%s318 + $0xf0] sm:$0xff] %v379
                  %v381 = vld [vmem:[%s317 + $0x198] sm:$0xff]
                  %382 = vst [vmem:[%s318 + $0xf8] sm:$0xff] %v381
                  %v383 = vld [vmem:[%s317 + $0x1a0] sm:$0xff]
                  %384 = vst [vmem:[%s318 + $0x100] sm:$0xff] %v383
                  %v385 = vld [vmem:[%s317 + $0x1a8] sm:$0xff]
                  %386 = vst [vmem:[%s318 + $0x108] sm:$0xff] %v385
                  %v387 = vld [vmem:[%s317 + $0x1b0] sm:$0xff]
                  %388 = vst [vmem:[%s318 + $0x110] sm:$0xff] %v387
                  %v389 = vld [vmem:[%s317 + $0x1b8] sm:$0xff]
                  %390 = vst [vmem:[%s318 + $0x118] sm:$0xff] %v389
                  %v391 = vld [vmem:[%s317 + $0x1c0] sm:$0xff]
                  %392 = vst [vmem:[%s318 + $0x120] sm:$0xff] %v391
                  %v393 = vld [vmem:[%s317 + $0x1c8] sm:$0xff]
                  %394 = vst [vmem:[%s318 + $0x128] sm:$0xff] %v393
                  %v395 = vld [vmem:[%s317 + $0x1d0] sm:$0xff]
                  %396 = vst [vmem:[%s318 + $0x130] sm:$0xff] %v395
                  %v397 = vld [vmem:[%s317 + $0x1d8] sm:$0xff]
                  %398 = vst [vmem:[%s318 + $0x138] sm:$0xff] %v397
                $region68: #{down_forward.1} parent=62 // loop_footer
                  %s316 = sadd.s32 1, %s312
                $region69: #{down_forward.1} parent=62 // loop_footer_branch
                  %311 = sbr.rel target = $region65
                $region70: #{down_forward.1} parent=62 // loop_exit
                  _
              $region63: #{down_forward.1} parent=47 // pred_fallthru
                _
              // Predicated region
              $region71: #{down_forward.1} parent=47 // pred_check
                _
              $region72: #{down_forward.1} parent=47 // pred_check_branch
                %400 = sbr.rel target = $region74
              $region73: #{down_forward.1} parent=47 // pred_region
                _
              $region74: #{down_forward.1} parent=47 // pred_fallthru
                _
            $region48: #{down_forward.1} parent=43 // pred_fallthru
              _
            // Predicated region
            $region49: #{down_forward.1} parent=43 // pred_check
              _
            $region50: #{down_forward.1} parent=43 // pred_check_branch
              %218 = sbr.rel target = $region52
            $region51: #{down_forward.1} parent=43 // pred_region
              %s220 = ssub.s32 256, 1
              loop: start=0, step=1, limit=1
              $region53: #{down_forward.1} parent=51 // loop_pre_header
                _
              $region54: #{down_forward.1} parent=51 // loop_header
                %s222 = sphi 0, %s226
                %p223 = scmp.ge.s32.totalorder %s222, 1
                %s227 = sphi %s212, %s212
                %s228 = sphi %s209, %s209
              $region55: #{down_forward.1} parent=51 // loop_header_branch
                %225 = sbr.rel (%p223) target = $region59
              $region56: #{down_forward.1} parent=51 // loop_body
                %v229 = vld [vmem:[%s227] sm:%s220]
                %230 = vst [vmem:[%s228] sm:%s220] %v229
                %v231 = vld [vmem:[%s227 + $0x8] sm:%s220]
                %232 = vst [vmem:[%s228 + $0x8] sm:%s220] %v231
                %v233 = vld [vmem:[%s227 + $0x10] sm:%s220]
                %234 = vst [vmem:[%s228 + $0x10] sm:%s220] %v233
                %v235 = vld [vmem:[%s227 + $0x18] sm:%s220]
                %236 = vst [vmem:[%s228 + $0x18] sm:%s220] %v235
                %v237 = vld [vmem:[%s227 + $0x20] sm:%s220]
                %238 = vst [vmem:[%s228 + $0x20] sm:%s220] %v237
                %v239 = vld [vmem:[%s227 + $0x28] sm:%s220]
                %240 = vst [vmem:[%s228 + $0x28] sm:%s220] %v239
                %v241 = vld [vmem:[%s227 + $0x30] sm:%s220]
                %242 = vst [vmem:[%s228 + $0x30] sm:%s220] %v241
                %v243 = vld [vmem:[%s227 + $0x38] sm:%s220]
                %244 = vst [vmem:[%s228 + $0x38] sm:%s220] %v243
                %v245 = vld [vmem:[%s227 + $0x40] sm:%s220]
                %246 = vst [vmem:[%s228 + $0x40] sm:%s220] %v245
                %v247 = vld [vmem:[%s227 + $0x48] sm:%s220]
                %248 = vst [vmem:[%s228 + $0x48] sm:%s220] %v247
                %v249 = vld [vmem:[%s227 + $0x50] sm:%s220]
                %250 = vst [vmem:[%s228 + $0x50] sm:%s220] %v249
                %v251 = vld [vmem:[%s227 + $0x58] sm:%s220]
                %252 = vst [vmem:[%s228 + $0x58] sm:%s220] %v251
                %v253 = vld [vmem:[%s227 + $0x60] sm:%s220]
                %254 = vst [vmem:[%s228 + $0x60] sm:%s220] %v253
                %v255 = vld [vmem:[%s227 + $0x68] sm:%s220]
                %256 = vst [vmem:[%s228 + $0x68] sm:%s220] %v255
                %v257 = vld [vmem:[%s227 + $0x70] sm:%s220]
                %258 = vst [vmem:[%s228 + $0x70] sm:%s220] %v257
                %v259 = vld [vmem:[%s227 + $0x78] sm:%s220]
                %260 = vst [vmem:[%s228 + $0x78] sm:%s220] %v259
                %v261 = vld [vmem:[%s227 + $0x80] sm:%s220]
                %262 = vst [vmem:[%s228 + $0x80] sm:%s220] %v261
                %v263 = vld [vmem:[%s227 + $0x88] sm:%s220]
                %264 = vst [vmem:[%s228 + $0x88] sm:%s220] %v263
                %v265 = vld [vmem:[%s227 + $0x90] sm:%s220]
                %266 = vst [vmem:[%s228 + $0x90] sm:%s220] %v265
                %v267 = vld [vmem:[%s227 + $0x98] sm:%s220]
                %268 = vst [vmem:[%s228 + $0x98] sm:%s220] %v267
                %v269 = vld [vmem:[%s227 + $0x140] sm:%s220]
                %270 = vst [vmem:[%s228 + $0xa0] sm:%s220] %v269
                %v271 = vld [vmem:[%s227 + $0x148] sm:%s220]
                %272 = vst [vmem:[%s228 + $0xa8] sm:%s220] %v271
                %v273 = vld [vmem:[%s227 + $0x150] sm:%s220]
                %274 = vst [vmem:[%s228 + $0xb0] sm:%s220] %v273
                %v275 = vld [vmem:[%s227 + $0x158] sm:%s220]
                %276 = vst [vmem:[%s228 + $0xb8] sm:%s220] %v275
                %v277 = vld [vmem:[%s227 + $0x160] sm:%s220]
                %278 = vst [vmem:[%s228 + $0xc0] sm:%s220] %v277
                %v279 = vld [vmem:[%s227 + $0x168] sm:%s220]
                %280 = vst [vmem:[%s228 + $0xc8] sm:%s220] %v279
                %v281 = vld [vmem:[%s227 + $0x170] sm:%s220]
                %282 = vst [vmem:[%s228 + $0xd0] sm:%s220] %v281
                %v283 = vld [vmem:[%s227 + $0x178] sm:%s220]
                %284 = vst [vmem:[%s228 + $0xd8] sm:%s220] %v283
                %v285 = vld [vmem:[%s227 + $0x180] sm:%s220]
                %286 = vst [vmem:[%s228 + $0xe0] sm:%s220] %v285
                %v287 = vld [vmem:[%s227 + $0x188] sm:%s220]
                %288 = vst [vmem:[%s228 + $0xe8] sm:%s220] %v287
                %v289 = vld [vmem:[%s227 + $0x190] sm:%s220]
                %290 = vst [vmem:[%s228 + $0xf0] sm:%s220] %v289
                %v291 = vld [vmem:[%s227 + $0x198] sm:%s220]
                %292 = vst [vmem:[%s228 + $0xf8] sm:%s220] %v291
                %v293 = vld [vmem:[%s227 + $0x1a0] sm:%s220]
                %294 = vst [vmem:[%s228 + $0x100] sm:%s220] %v293
                %v295 = vld [vmem:[%s227 + $0x1a8] sm:%s220]
                %296 = vst [vmem:[%s228 + $0x108] sm:%s220] %v295
                %v297 = vld [vmem:[%s227 + $0x1b0] sm:%s220]
                %298 = vst [vmem:[%s228 + $0x110] sm:%s220] %v297
                %v299 = vld [vmem:[%s227 + $0x1b8] sm:%s220]
                %300 = vst [vmem:[%s228 + $0x118] sm:%s220] %v299
                %v301 = vld [vmem:[%s227 + $0x1c0] sm:%s220]
                %302 = vst [vmem:[%s228 + $0x120] sm:%s220] %v301
                %v303 = vld [vmem:[%s227 + $0x1c8] sm:%s220]
                %304 = vst [vmem:[%s228 + $0x128] sm:%s220] %v303
                %v305 = vld [vmem:[%s227 + $0x1d0] sm:%s220]
                %306 = vst [vmem:[%s228 + $0x130] sm:%s220] %v305
                %v307 = vld [vmem:[%s227 + $0x1d8] sm:%s220]
                %308 = vst [vmem:[%s228 + $0x138] sm:%s220] %v307
              $region57: #{down_forward.1} parent=51 // loop_footer
                %s226 = sadd.s32 1, %s222
              $region58: #{down_forward.1} parent=51 // loop_footer_branch
                %221 = sbr.rel target = $region54
              $region59: #{down_forward.1} parent=51 // loop_exit
                _
            $region52: #{down_forward.1} parent=43 // pred_fallthru
              _
          $region44: #{down_forward.1} parent=39 // pred_fallthru
            _
          %401 = vnop
        $region40: #{down_forward.1} parent=35 // pred_fallthru
          _
      $region36: #{down_forward.1} parent=5 // pred_fallthru
        _
      %p402 = scmp.le.s32.totalorder 1, %s12
      %p403 = scmp.lt.s32.totalorder %s12, 3
      %p404 = pnand %p402, %p403
      %p405 = pneg %p404
      // Predicated region
      $region75: #{down_forward.1} parent=5 // pred_check
        _
      $region76: #{down_forward.1} parent=5 // pred_check_branch
        %407 = sbr.rel (%p404) target = $region78
      $region77: #{down_forward.1} parent=5 // pred_region
        %s408 = ssub.s32 %s12, 1
        %s409 = sand.u32 %s25, 1
        %s410 = sand.u32 %s25, 1
        %s411 = smul.addr %s410, 320
        %s412 = scalar_lea.vmem [#allocation4], %s411
        // Predicated region
        $region79: #{down_forward.1} parent=77 // pred_check
          %p413 = pneg %p38
        $region80: #{down_forward.1} parent=77 // pred_check_branch
          %415 = sbr.rel (%p413) target = $region82
        $region81: #{down_forward.1} parent=77 // pred_region
          _
        $region82: #{down_forward.1} parent=77 // pred_fallthru
          _
        %s416 = sand.u32 %s25, 1
        %s417 = sand.u32 %s25, 1
        %s418 = smul.addr %s417, 320
        %s419 = scalar_lea.vmem [#allocation4], %s418
        %p420 = pneg %p38
        %p421 = pneg %p35
        %p422 = pneg %p59
        %p423 = pneg %p56
        %p424 = pneg %p80
        %p425 = pneg %p77
        %p426 = pneg %p101
        %p427 = pneg %p98
        %p428 = pneg %p122
        %p429 = pneg %p119
        %p430 = pneg %p143
        %p431 = pneg %p140
        %p432 = pneg %p169
        %p433 = pneg %p166
        %s434 = smul.u32 20, %s17
        %p435 = scmp.lt.s32.totalorder %s434, 39
        %s436 = scalar_select %p435, %s434, 39
        %s437 = smul.addr %s436, 8
        %s438 = scalar_lea.vmem %s6, %s437
        %s439 = smul.u32 20, %s17
        %s440 = smul.u32 20, %s17
        %p441 = scmp.lt.s32.totalorder %s440, 39
        %s442 = scalar_select %p441, %s440, 39
        %s443 = smul.addr %s442, 8
        %s444 = scalar_lea.vmem %s6, %s443
        %s445 = smul.u32 20, %s17
        %v446 = vld [vmem:[%s412] sm:$0xff]
        %v447 = vld [vmem:[%s412 + $0x8] sm:$0xff]
        %v448 = vld [vmem:[%s412 + $0x10] sm:$0xff]
        %v449 = vld [vmem:[%s412 + $0x18] sm:$0xff]
        %v450 = vld [vmem:[%s412 + $0x20] sm:$0xff]
        %v451 = vld [vmem:[%s412 + $0x28] sm:$0xff]
        %v452 = vld [vmem:[%s412 + $0x30] sm:$0xff]
        %v453 = vld [vmem:[%s412 + $0x38] sm:$0xff]
        %v454 = vld [vmem:[%s412 + $0x40] sm:$0xff]
        %v455 = vld [vmem:[%s412 + $0x48] sm:$0xff]
        %v456 = vld [vmem:[%s412 + $0x50] sm:$0xff]
        %v457 = vld [vmem:[%s412 + $0x58] sm:$0xff]
        %v458 = vld [vmem:[%s412 + $0x60] sm:$0xff]
        %v459 = vld [vmem:[%s412 + $0x68] sm:$0xff]
        %v460 = vld [vmem:[%s412 + $0x70] sm:$0xff]
        %v461 = vld [vmem:[%s412 + $0x78] sm:$0xff]
        %v462 = vld [vmem:[%s412 + $0x80] sm:$0xff]
        %v463 = vld [vmem:[%s412 + $0x88] sm:$0xff]
        %v464 = vld [vmem:[%s412 + $0x90] sm:$0xff]
        %v465 = vld [vmem:[%s412 + $0x98] sm:$0xff]
        %s466 = scalar_lea.vmem %s412, 160 [#allocation4]
        %v467 = vld [vmem:[%s466] sm:$0xff]
        %v468 = vld [vmem:[%s466 + $0x8] sm:$0xff]
        %v469 = vld [vmem:[%s466 + $0x10] sm:$0xff]
        %v470 = vld [vmem:[%s466 + $0x18] sm:$0xff]
        %v471 = vld [vmem:[%s466 + $0x20] sm:$0xff]
        %v472 = vld [vmem:[%s466 + $0x28] sm:$0xff]
        %v473 = vld [vmem:[%s466 + $0x30] sm:$0xff]
        %v474 = vld [vmem:[%s466 + $0x38] sm:$0xff]
        %v475 = vld [vmem:[%s466 + $0x40] sm:$0xff]
        %v476 = vld [vmem:[%s466 + $0x48] sm:$0xff]
        %v477 = vld [vmem:[%s466 + $0x50] sm:$0xff]
        %v478 = vld [vmem:[%s466 + $0x58] sm:$0xff]
        %v479 = vld [vmem:[%s466 + $0x60] sm:$0xff]
        %v480 = vld [vmem:[%s466 + $0x68] sm:$0xff]
        %v481 = vld [vmem:[%s466 + $0x70] sm:$0xff]
        %v482 = vld [vmem:[%s466 + $0x78] sm:$0xff]
        %v483 = vld [vmem:[%s466 + $0x80] sm:$0xff]
        %v484 = vld [vmem:[%s466 + $0x88] sm:$0xff]
        %v485 = vld [vmem:[%s466 + $0x90] sm:$0xff]
        %v486 = vld [vmem:[%s466 + $0x98] sm:$0xff]
        %v487 = vmax.f32 %v446, %v467
        %v488 = vmax.f32 %v447, %v468
        %v489 = vmax.f32 %v448, %v469
        %v490 = vmax.f32 %v449, %v470
        %v491 = vmax.f32 %v450, %v471
        %v492 = vmax.f32 %v451, %v472
        %v493 = vmax.f32 %v452, %v473
        %v494 = vmax.f32 %v453, %v474
        %v495 = vmax.f32 %v454, %v475
        %v496 = vmax.f32 %v455, %v476
        %v497 = vmax.f32 %v456, %v477
        %v498 = vmax.f32 %v457, %v478
        %v499 = vmax.f32 %v458, %v479
        %v500 = vmax.f32 %v459, %v480
        %v501 = vmax.f32 %v460, %v481
        %v502 = vmax.f32 %v461, %v482
        %v503 = vmax.f32 %v462, %v483
        %v504 = vmax.f32 %v463, %v484
        %v505 = vmax.f32 %v464, %v485
        %v506 = vmax.f32 %v465, %v486
        %vm507 = vcmask 97280
        %508 = vst.msk [vmem:[#allocation2 + $0x18] sm:$0xff] %vm507, %v487
        %509 = vst.msk [vmem:[#allocation2 + $0x20] sm:$0xff] %vm507, %v488
        %510 = vst.msk [vmem:[#allocation2 + $0x28] sm:$0xff] %vm507, %v489
        %511 = vst.msk [vmem:[#allocation2 + $0x30] sm:$0xff] %vm507, %v490
        %512 = vst.msk [vmem:[#allocation2 + $0x38] sm:$0xff] %vm507, %v491
        %513 = vst.msk [vmem:[#allocation2 + $0x40] sm:$0xff] %vm507, %v492
        %514 = vst.msk [vmem:[#allocation2 + $0x48] sm:$0xff] %vm507, %v493
        %515 = vst.msk [vmem:[#allocation2 + $0x50] sm:$0xff] %vm507, %v494
        %516 = vst.msk [vmem:[#allocation2 + $0x58] sm:$0xff] %vm507, %v495
        %517 = vst.msk [vmem:[#allocation2 + $0x60] sm:$0xff] %vm507, %v496
        %518 = vst.msk [vmem:[#allocation2 + $0x68] sm:$0xff] %vm507, %v497
        %519 = vst.msk [vmem:[#allocation2 + $0x70] sm:$0xff] %vm507, %v498
        %520 = vst.msk [vmem:[#allocation2 + $0x78] sm:$0xff] %vm507, %v499
        %521 = vst.msk [vmem:[#allocation2 + $0x80] sm:$0xff] %vm507, %v500
        %522 = vst.msk [vmem:[#allocation2 + $0x88] sm:$0xff] %vm507, %v501
        %523 = vst.msk [vmem:[#allocation2 + $0x90] sm:$0xff] %vm507, %v502
        %524 = vst.msk [vmem:[#allocation2 + $0x98] sm:$0xff] %vm507, %v503
        %525 = vst.msk [vmem:[#allocation2 + $0xa0] sm:$0xff] %vm507, %v504
        %526 = vst.msk [vmem:[#allocation2 + $0xa8] sm:$0xff] %vm507, %v505
        %527 = vst.msk [vmem:[#allocation2 + $0xb0] sm:$0xff] %vm507, %v506
        %528 = vst.msk [vmem:[#allocation2] sm:$0xff] %vm507, 0.0
        %529 = vst.msk [vmem:[#allocation2 + $0x8] sm:$0xff] %vm507, 0.0
        %530 = vst.msk [vmem:[#allocation2 + $0x10] sm:$0xff] %vm507, 0.0
        %531 = vst.msk [vmem:[#allocation2 + $0xb8] sm:$0xff] %vm507, 0.0
        %532 = vst.msk [vmem:[#allocation2 + $0xc0] sm:$0xff] %vm507, 0.0
        %533 = vst.msk [vmem:[#allocation2 + $0xc8] sm:$0xff] %vm507, 0.0
        %534 = vst [vmem:[#allocation3] sm:$0xff] 0.0
        %535 = vst [vmem:[#allocation3 + $0x8] sm:$0xff] 0.0
        %536 = vst [vmem:[#allocation3 + $0x10] sm:$0xff] 0.0
        %537 = vst [vmem:[#allocation3 + $0xb8] sm:$0xff] 0.0
        %538 = vst [vmem:[#allocation3 + $0xc0] sm:$0xff] 0.0
        %539 = vst [vmem:[#allocation3 + $0xc8] sm:$0xff] 0.0
        %v540 = vld [vmem:[#allocation2 + $0x8] sm:$0xff]
        %v541 = vld [vmem:[#allocation2 + $0x10] sm:$0xff]
        %v542 = vld [vmem:[#allocation2 + $0x18] sm:$0xff]
        %v543 = vld [vmem:[#allocation2 + $0x20] sm:$0xff]
        %v544 = vld [vmem:[#allocation2 + $0x28] sm:$0xff]
        %v545 = vld [vmem:[#allocation2 + $0x30] sm:$0xff]
        %v546 = vld [vmem:[#allocation2 + $0x38] sm:$0xff]
        %v547 = vld [vmem:[#allocation2 + $0x40] sm:$0xff]
        %v548 = vld [vmem:[#allocation2 + $0x48] sm:$0xff]
        %v549 = vld [vmem:[#allocation2 + $0x50] sm:$0xff]
        %v550 = vld [vmem:[#allocation2 + $0x58] sm:$0xff]
        %v551 = vld [vmem:[#allocation2 + $0x60] sm:$0xff]
        %v552 = vld [vmem:[#allocation2 + $0x68] sm:$0xff]
        %v553 = vld [vmem:[#allocation2 + $0x70] sm:$0xff]
        %v554 = vld [vmem:[#allocation2 + $0x78] sm:$0xff]
        %v555 = vld [vmem:[#allocation2 + $0x80] sm:$0xff]
        %v556 = vld [vmem:[#allocation2 + $0x88] sm:$0xff]
        %v557 = vld [vmem:[#allocation2 + $0x90] sm:$0xff]
        %v558 = vld [vmem:[#allocation2 + $0x98] sm:$0xff]
        %v559 = vld [vmem:[#allocation2 + $0xa0] sm:$0xff]
        %v560 = vld [vmem:[%s2] sm:$0xff]
        %v561 = vld [vmem:[%s2 + $0x8] sm:$0xf]
        %v563 = vsel %vm507, %v540, 0
        %v566 = vsel %vm507, %v541, 0
        %v569 = vsel %vm507, %v542, 0
        %v572 = vsel %vm507, %v543, 0
        %v575 = vsel %vm507, %v544, 0
        %v578 = vsel %vm507, %v545, 0
        %v581 = vsel %vm507, %v546, 0
        %v584 = vsel %vm507, %v547, 0
        %v587 = vsel %vm507, %v548, 0
        %v590 = vsel %vm507, %v549, 0
        %v593 = vsel %vm507, %v550, 0
        %v596 = vsel %vm507, %v551, 0
        %v599 = vsel %vm507, %v552, 0
        %v602 = vsel %vm507, %v553, 0
        %v605 = vsel %vm507, %v554, 0
        %v608 = vsel %vm507, %v555, 0
        %v611 = vsel %vm507, %v556, 0
        %v614 = vsel %vm507, %v557, 0
        %v617 = vsel %vm507, %v558, 0
        %v620 = vsel %vm507, %v559, 0
        %vm622 = vcmask 1043456
        %v624 = vsel %vm622, %v561, 0
        %626 = vmatprep.subr.mxu0 0.0
        %627 = vmatpush1.msra.mxu0 0.0
        %628 = vmatprep.subr.mxu0 0.0
        %629 = vmatpush1.msra.mxu0 0.0
        %630 = vmatprep.subr.mxu0 0.0
        %631 = vmatpush1.msra.mxu0 0.0
        %632 = vmatprep.subr.mxu0 0.0
        %633 = vmatpush1.msra.mxu0 0.0
        %634 = vmatprep.subr.mxu0 0.0
        %635 = vmatpush1.msra.mxu0 0.0
        %636 = vmatprep.subr.mxu0 0.0
        %637 = vmatpush1.msra.mxu0 0.0
        %638 = vmatprep.subr.mxu0 0.0
        %639 = vmatpush1.msra.mxu0 0.0
        %640 = vmatprep.subr.mxu0 0.0
        %641 = vmatpush1.msra.mxu0 0.0
        %642 = vmatprep.subr.mxu0 0.0
        %643 = vmatpush1.msra.mxu0 0.0
        %644 = vmatprep.subr.mxu0 0.0
        %645 = vmatpush1.msra.mxu0 0.0
        %646 = vmatprep.subr.mxu0 0.0
        %647 = vmatpush1.msra.mxu0 0.0
        %648 = vmatprep.subr.mxu0 0.0
        %649 = vmatpush1.msra.mxu0 0.0
        %650 = vmatprep.subr.mxu0 0.0
        %651 = vmatpush1.msra.mxu0 0.0
        %652 = vmatprep.subr.mxu0 0.0
        %653 = vmatpush1.msra.mxu0 0.0
        %654 = vmatprep.subr.mxu0 0.0
        %655 = vmatpush1.msra.mxu0 %v624
        %656 = vmatprep.subr.mxu0 0.0
        %657 = vmatpush1.msra.mxu0 %v560
        %658 = vmatprep.subr.mxu0 0.0
        %659 = vmatpush2.msra.mxu0 0.0
        %660 = vmatprep.subr.mxu0 0.0
        %661 = vmatpush2.msra.mxu0 0.0
        %662 = vmatprep.subr.mxu0 0.0
        %663 = vmatpush2.msra.mxu0 0.0
        %664 = vmatprep.subr.mxu0 0.0
        %665 = vmatpush2.msra.mxu0 0.0
        %666 = vmatprep.subr.mxu0 0.0
        %667 = vmatpush2.msra.mxu0 0.0
        %668 = vmatprep.subr.mxu0 0.0
        %669 = vmatpush2.msra.mxu0 0.0
        %670 = vmatprep.subr.mxu0 0.0
        %671 = vmatpush2.msra.mxu0 0.0
        %672 = vmatprep.subr.mxu0 0.0
        %673 = vmatpush2.msra.mxu0 0.0
        %674 = vmatprep.subr.mxu0 0.0
        %675 = vmatpush2.msra.mxu0 0.0
        %676 = vmatprep.subr.mxu0 0.0
        %677 = vmatpush2.msra.mxu0 0.0
        %678 = vmatprep.subr.mxu0 0.0
        %679 = vmatpush2.msra.mxu0 0.0
        %680 = vmatprep.subr.mxu0 0.0
        %681 = vmatpush2.msra.mxu0 0.0
        %682 = vmatprep.subr.mxu0 0.0
        %683 = vmatpush2.msra.mxu0 0.0
        %684 = vmatprep.subr.mxu0 0.0
        %685 = vmatpush2.msra.mxu0 0.0
        %686 = vmatprep.subr.mxu0 0.0
        %687 = vmatpush2.msra.mxu0 0.0
        %688 = vmatprep.subr.mxu0 0.0
        %689 = vmatpush2.msra.mxu0 0.0
        %690 = vmatprep.mubr.f32.mxu0 0.0
        %691 = vmatmul.mubr.f32.gmra.mxu0 %v563
        %v692 = vpop.f32.mrf.mxu0
        %v693 = vadd.f32 0.0, %v692
        %v694 = vpop.f32.mrf.mxu0
        %695 = vmatprep.mubr.f32.mxu0 0.0
        %696 = vmatmul.mubr.f32.gmra.mxu0 %v566
        %v697 = vpop.f32.mrf.mxu0
        %v698 = vadd.f32 0.0, %v697
        %v699 = vpop.f32.mrf.mxu0
        %700 = vmatprep.mubr.f32.mxu0 0.0
        %701 = vmatmul.mubr.f32.gmra.mxu0 %v569
        %v702 = vpop.f32.mrf.mxu0
        %v703 = vadd.f32 0.0, %v702
        %v704 = vpop.f32.mrf.mxu0
        %705 = vmatprep.mubr.f32.mxu0 0.0
        %706 = vmatmul.mubr.f32.gmra.mxu0 %v572
        %v707 = vpop.f32.mrf.mxu0
        %v708 = vadd.f32 0.0, %v707
        %v709 = vpop.f32.mrf.mxu0
        %710 = vmatprep.mubr.f32.mxu0 0.0
        %711 = vmatmul.mubr.f32.gmra.mxu0 %v575
        %v712 = vpop.f32.mrf.mxu0
        %v713 = vadd.f32 0.0, %v712
        %v714 = vpop.f32.mrf.mxu0
        %715 = vmatprep.mubr.f32.mxu0 0.0
        %716 = vmatmul.mubr.f32.gmra.mxu0 %v578
        %v717 = vpop.f32.mrf.mxu0
        %v718 = vadd.f32 0.0, %v717
        %v719 = vpop.f32.mrf.mxu0
        %720 = vmatprep.mubr.f32.mxu0 0.0
        %721 = vmatmul.mubr.f32.gmra.mxu0 %v581
        %v722 = vpop.f32.mrf.mxu0
        %v723 = vadd.f32 0.0, %v722
        %v724 = vpop.f32.mrf.mxu0
        %725 = vmatprep.mubr.f32.mxu0 0.0
        %726 = vmatmul.mubr.f32.gmra.mxu0 %v584
        %v727 = vpop.f32.mrf.mxu0
        %v728 = vadd.f32 0.0, %v727
        %v729 = vpop.f32.mrf.mxu0
        %730 = vmatprep.mubr.f32.mxu0 0.0
        %731 = vmatmul.mubr.f32.gmra.mxu0 %v587
        %v732 = vpop.f32.mrf.mxu0
        %v733 = vadd.f32 0.0, %v732
        %v734 = vpop.f32.mrf.mxu0
        %735 = vmatprep.mubr.f32.mxu0 0.0
        %736 = vmatmul.mubr.f32.gmra.mxu0 %v590
        %v737 = vpop.f32.mrf.mxu0
        %v738 = vadd.f32 0.0, %v737
        %v739 = vpop.f32.mrf.mxu0
        %740 = vmatprep.mubr.f32.mxu0 0.0
        %741 = vmatmul.mubr.f32.gmra.mxu0 %v593
        %v742 = vpop.f32.mrf.mxu0
        %v743 = vadd.f32 0.0, %v742
        %v744 = vpop.f32.mrf.mxu0
        %745 = vmatprep.mubr.f32.mxu0 0.0
        %746 = vmatmul.mubr.f32.gmra.mxu0 %v596
        %v747 = vpop.f32.mrf.mxu0
        %v748 = vadd.f32 0.0, %v747
        %v749 = vpop.f32.mrf.mxu0
        %750 = vmatprep.mubr.f32.mxu0 0.0
        %751 = vmatmul.mubr.f32.gmra.mxu0 %v599
        %v752 = vpop.f32.mrf.mxu0
        %v753 = vadd.f32 0.0, %v752
        %v754 = vpop.f32.mrf.mxu0
        %755 = vmatprep.mubr.f32.mxu0 0.0
        %756 = vmatmul.mubr.f32.gmra.mxu0 %v602
        %v757 = vpop.f32.mrf.mxu0
        %v758 = vadd.f32 0.0, %v757
        %v759 = vpop.f32.mrf.mxu0
        %760 = vmatprep.mubr.f32.mxu0 0.0
        %761 = vmatmul.mubr.f32.gmra.mxu0 %v605
        %v762 = vpop.f32.mrf.mxu0
        %v763 = vadd.f32 0.0, %v762
        %v764 = vpop.f32.mrf.mxu0
        %765 = vmatprep.mubr.f32.mxu0 0.0
        %766 = vmatmul.mubr.f32.gmra.mxu0 %v608
        %v767 = vpop.f32.mrf.mxu0
        %v768 = vadd.f32 0.0, %v767
        %v769 = vpop.f32.mrf.mxu0
        %770 = vmatprep.mubr.f32.mxu0 0.0
        %771 = vmatmul.mubr.f32.gmra.mxu0 %v611
        %v772 = vpop.f32.mrf.mxu0
        %v773 = vadd.f32 0.0, %v772
        %v774 = vpop.f32.mrf.mxu0
        %775 = vmatprep.mubr.f32.mxu0 0.0
        %776 = vmatmul.mubr.f32.gmra.mxu0 %v614
        %v777 = vpop.f32.mrf.mxu0
        %v778 = vadd.f32 0.0, %v777
        %v779 = vpop.f32.mrf.mxu0
        %780 = vmatprep.mubr.f32.mxu0 0.0
        %781 = vmatmul.mubr.f32.gmra.mxu0 %v617
        %v782 = vpop.f32.mrf.mxu0
        %v783 = vadd.f32 0.0, %v782
        %v784 = vpop.f32.mrf.mxu0
        %785 = vmatprep.mubr.f32.mxu0 0.0
        %786 = vmatmul.mubr.f32.gmra.mxu0 %v620
        %v787 = vpop.f32.mrf.mxu0
        %v788 = vadd.f32 0.0, %v787
        %v789 = vpop.f32.mrf.mxu0
        %790 = vdwg.mxu0
        %791 = vst [vmem:[#allocation3 + $0x18] sm:$0xff] %v693
        %792 = vst [vmem:[#allocation3 + $0x20] sm:$0xff] %v698
        %793 = vst [vmem:[#allocation3 + $0x28] sm:$0xff] %v703
        %794 = vst [vmem:[#allocation3 + $0x30] sm:$0xff] %v708
        %795 = vst [vmem:[#allocation3 + $0x38] sm:$0xff] %v713
        %796 = vst [vmem:[#allocation3 + $0x40] sm:$0xff] %v718
        %797 = vst [vmem:[#allocation3 + $0x48] sm:$0xff] %v723
        %798 = vst [vmem:[#allocation3 + $0x50] sm:$0xff] %v728
        %799 = vst [vmem:[#allocation3 + $0x58] sm:$0xff] %v733
        %800 = vst [vmem:[#allocation3 + $0x60] sm:$0xff] %v738
        %801 = vst [vmem:[#allocation3 + $0x68] sm:$0xff] %v743
        %802 = vst [vmem:[#allocation3 + $0x70] sm:$0xff] %v748
        %803 = vst [vmem:[#allocation3 + $0x78] sm:$0xff] %v753
        %804 = vst [vmem:[#allocation3 + $0x80] sm:$0xff] %v758
        %805 = vst [vmem:[#allocation3 + $0x88] sm:$0xff] %v763
        %806 = vst [vmem:[#allocation3 + $0x90] sm:$0xff] %v768
        %807 = vst [vmem:[#allocation3 + $0x98] sm:$0xff] %v773
        %808 = vst [vmem:[#allocation3 + $0xa0] sm:$0xff] %v778
        %809 = vst [vmem:[#allocation3 + $0xa8] sm:$0xff] %v783
        %810 = vst [vmem:[#allocation3 + $0xb0] sm:$0xff] %v788
        %v811 = vld [vmem:[#allocation2 + $0x18] sm:$0xff]
        %v812 = vld [vmem:[#allocation2 + $0x20] sm:$0xff]
        %v813 = vld [vmem:[#allocation2 + $0x28] sm:$0xff]
        %v814 = vld [vmem:[#allocation2 + $0x30] sm:$0xff]
        %v815 = vld [vmem:[#allocation2 + $0x38] sm:$0xff]
        %v816 = vld [vmem:[#allocation2 + $0x40] sm:$0xff]
        %v817 = vld [vmem:[#allocation2 + $0x48] sm:$0xff]
        %v818 = vld [vmem:[#allocation2 + $0x50] sm:$0xff]
        %v819 = vld [vmem:[#allocation2 + $0x58] sm:$0xff]
        %v820 = vld [vmem:[#allocation2 + $0x60] sm:$0xff]
        %v821 = vld [vmem:[#allocation2 + $0x68] sm:$0xff]
        %v822 = vld [vmem:[#allocation2 + $0x70] sm:$0xff]
        %v823 = vld [vmem:[#allocation2 + $0x78] sm:$0xff]
        %v824 = vld [vmem:[#allocation2 + $0x80] sm:$0xff]
        %v825 = vld [vmem:[#allocation2 + $0x88] sm:$0xff]
        %v826 = vld [vmem:[#allocation2 + $0x90] sm:$0xff]
        %v827 = vld [vmem:[#allocation2 + $0x98] sm:$0xff]
        %v828 = vld [vmem:[#allocation2 + $0xa0] sm:$0xff]
        %v829 = vld [vmem:[#allocation2 + $0xa8] sm:$0xff]
        %v830 = vld [vmem:[#allocation2 + $0xb0] sm:$0xff]
        %s831 = scalar_lea.vmem %s2, 16
        %v832 = vld [vmem:[%s831] sm:$0xff]
        %v833 = vld [vmem:[%s831 + $0x8] sm:$0xf]
        %v835 = vsel %vm507, %v811, 0
        %v838 = vsel %vm507, %v812, 0
        %v841 = vsel %vm507, %v813, 0
        %v844 = vsel %vm507, %v814, 0
        %v847 = vsel %vm507, %v815, 0
        %v850 = vsel %vm507, %v816, 0
        %v853 = vsel %vm507, %v817, 0
        %v856 = vsel %vm507, %v818, 0
        %v859 = vsel %vm507, %v819, 0
        %v862 = vsel %vm507, %v820, 0
        %v865 = vsel %vm507, %v821, 0
        %v868 = vsel %vm507, %v822, 0
        %v871 = vsel %vm507, %v823, 0
        %v874 = vsel %vm507, %v824, 0
        %v877 = vsel %vm507, %v825, 0
        %v880 = vsel %vm507, %v826, 0
        %v883 = vsel %vm507, %v827, 0
        %v886 = vsel %vm507, %v828, 0
        %v889 = vsel %vm507, %v829, 0
        %v892 = vsel %vm507, %v830, 0
        %v895 = vsel %vm622, %v833, 0
        %897 = vmatprep.subr.mxu0 0.0
        %898 = vmatpush1.msra.mxu0 0.0
        %899 = vmatprep.subr.mxu0 0.0
        %900 = vmatpush1.msra.mxu0 0.0
        %901 = vmatprep.subr.mxu0 0.0
        %902 = vmatpush1.msra.mxu0 0.0
        %903 = vmatprep.subr.mxu0 0.0
        %904 = vmatpush1.msra.mxu0 0.0
        %905 = vmatprep.subr.mxu0 0.0
        %906 = vmatpush1.msra.mxu0 0.0
        %907 = vmatprep.subr.mxu0 0.0
        %908 = vmatpush1.msra.mxu0 0.0
        %909 = vmatprep.subr.mxu0 0.0
        %910 = vmatpush1.msra.mxu0 0.0
        %911 = vmatprep.subr.mxu0 0.0
        %912 = vmatpush1.msra.mxu0 0.0
        %913 = vmatprep.subr.mxu0 0.0
        %914 = vmatpush1.msra.mxu0 0.0
        %915 = vmatprep.subr.mxu0 0.0
        %916 = vmatpush1.msra.mxu0 0.0
        %917 = vmatprep.subr.mxu0 0.0
        %918 = vmatpush1.msra.mxu0 0.0
        %919 = vmatprep.subr.mxu0 0.0
        %920 = vmatpush1.msra.mxu0 0.0
        %921 = vmatprep.subr.mxu0 0.0
        %922 = vmatpush1.msra.mxu0 0.0
        %923 = vmatprep.subr.mxu0 0.0
        %924 = vmatpush1.msra.mxu0 0.0
        %925 = vmatprep.subr.mxu0 0.0
        %926 = vmatpush1.msra.mxu0 %v895
        %927 = vmatprep.subr.mxu0 0.0
        %928 = vmatpush1.msra.mxu0 %v832
        %929 = vmatprep.subr.mxu0 0.0
        %930 = vmatpush2.msra.mxu0 0.0
        %931 = vmatprep.subr.mxu0 0.0
        %932 = vmatpush2.msra.mxu0 0.0
        %933 = vmatprep.subr.mxu0 0.0
        %934 = vmatpush2.msra.mxu0 0.0
        %935 = vmatprep.subr.mxu0 0.0
        %936 = vmatpush2.msra.mxu0 0.0
        %937 = vmatprep.subr.mxu0 0.0
        %938 = vmatpush2.msra.mxu0 0.0
        %939 = vmatprep.subr.mxu0 0.0
        %940 = vmatpush2.msra.mxu0 0.0
        %941 = vmatprep.subr.mxu0 0.0
        %942 = vmatpush2.msra.mxu0 0.0
        %943 = vmatprep.subr.mxu0 0.0
        %944 = vmatpush2.msra.mxu0 0.0
        %945 = vmatprep.subr.mxu0 0.0
        %946 = vmatpush2.msra.mxu0 0.0
        %947 = vmatprep.subr.mxu0 0.0
        %948 = vmatpush2.msra.mxu0 0.0
        %949 = vmatprep.subr.mxu0 0.0
        %950 = vmatpush2.msra.mxu0 0.0
        %951 = vmatprep.subr.mxu0 0.0
        %952 = vmatpush2.msra.mxu0 0.0
        %953 = vmatprep.subr.mxu0 0.0
        %954 = vmatpush2.msra.mxu0 0.0
        %955 = vmatprep.subr.mxu0 0.0
        %956 = vmatpush2.msra.mxu0 0.0
        %957 = vmatprep.subr.mxu0 0.0
        %958 = vmatpush2.msra.mxu0 0.0
        %959 = vmatprep.subr.mxu0 0.0
        %960 = vmatpush2.msra.mxu0 0.0
        %961 = vmatprep.mubr.f32.mxu0 0.0
        %962 = vmatmul.mubr.f32.gmra.mxu0 %v835
        %v963 = vpop.f32.mrf.mxu0
        %v964 = vadd.f32 0.0, %v963
        %v965 = vpop.f32.mrf.mxu0
        %966 = vmatprep.mubr.f32.mxu0 0.0
        %967 = vmatmul.mubr.f32.gmra.mxu0 %v838
        %v968 = vpop.f32.mrf.mxu0
        %v969 = vadd.f32 0.0, %v968
        %v970 = vpop.f32.mrf.mxu0
        %971 = vmatprep.mubr.f32.mxu0 0.0
        %972 = vmatmul.mubr.f32.gmra.mxu0 %v841
        %v973 = vpop.f32.mrf.mxu0
        %v974 = vadd.f32 0.0, %v973
        %v975 = vpop.f32.mrf.mxu0
        %976 = vmatprep.mubr.f32.mxu0 0.0
        %977 = vmatmul.mubr.f32.gmra.mxu0 %v844
        %v978 = vpop.f32.mrf.mxu0
        %v979 = vadd.f32 0.0, %v978
        %v980 = vpop.f32.mrf.mxu0
        %981 = vmatprep.mubr.f32.mxu0 0.0
        %982 = vmatmul.mubr.f32.gmra.mxu0 %v847
        %v983 = vpop.f32.mrf.mxu0
        %v984 = vadd.f32 0.0, %v983
        %v985 = vpop.f32.mrf.mxu0
        %986 = vmatprep.mubr.f32.mxu0 0.0
        %987 = vmatmul.mubr.f32.gmra.mxu0 %v850
        %v988 = vpop.f32.mrf.mxu0
        %v989 = vadd.f32 0.0, %v988
        %v990 = vpop.f32.mrf.mxu0
        %991 = vmatprep.mubr.f32.mxu0 0.0
        %992 = vmatmul.mubr.f32.gmra.mxu0 %v853
        %v993 = vpop.f32.mrf.mxu0
        %v994 = vadd.f32 0.0, %v993
        %v995 = vpop.f32.mrf.mxu0
        %996 = vmatprep.mubr.f32.mxu0 0.0
        %997 = vmatmul.mubr.f32.gmra.mxu0 %v856
        %v998 = vpop.f32.mrf.mxu0
        %v999 = vadd.f32 0.0, %v998
        %v1000 = vpop.f32.mrf.mxu0
        %1001 = vmatprep.mubr.f32.mxu0 0.0
        %1002 = vmatmul.mubr.f32.gmra.mxu0 %v859
        %v1003 = vpop.f32.mrf.mxu0
        %v1004 = vadd.f32 0.0, %v1003
        %v1005 = vpop.f32.mrf.mxu0
        %1006 = vmatprep.mubr.f32.mxu0 0.0
        %1007 = vmatmul.mubr.f32.gmra.mxu0 %v862
        %v1008 = vpop.f32.mrf.mxu0
        %v1009 = vadd.f32 0.0, %v1008
        %v1010 = vpop.f32.mrf.mxu0
        %1011 = vmatprep.mubr.f32.mxu0 0.0
        %1012 = vmatmul.mubr.f32.gmra.mxu0 %v865
        %v1013 = vpop.f32.mrf.mxu0
        %v1014 = vadd.f32 0.0, %v1013
        %v1015 = vpop.f32.mrf.mxu0
        %1016 = vmatprep.mubr.f32.mxu0 0.0
        %1017 = vmatmul.mubr.f32.gmra.mxu0 %v868
        %v1018 = vpop.f32.mrf.mxu0
        %v1019 = vadd.f32 0.0, %v1018
        %v1020 = vpop.f32.mrf.mxu0
        %1021 = vmatprep.mubr.f32.mxu0 0.0
        %1022 = vmatmul.mubr.f32.gmra.mxu0 %v871
        %v1023 = vpop.f32.mrf.mxu0
        %v1024 = vadd.f32 0.0, %v1023
        %v1025 = vpop.f32.mrf.mxu0
        %1026 = vmatprep.mubr.f32.mxu0 0.0
        %1027 = vmatmul.mubr.f32.gmra.mxu0 %v874
        %v1028 = vpop.f32.mrf.mxu0
        %v1029 = vadd.f32 0.0, %v1028
        %v1030 = vpop.f32.mrf.mxu0
        %1031 = vmatprep.mubr.f32.mxu0 0.0
        %1032 = vmatmul.mubr.f32.gmra.mxu0 %v877
        %v1033 = vpop.f32.mrf.mxu0
        %v1034 = vadd.f32 0.0, %v1033
        %v1035 = vpop.f32.mrf.mxu0
        %1036 = vmatprep.mubr.f32.mxu0 0.0
        %1037 = vmatmul.mubr.f32.gmra.mxu0 %v880
        %v1038 = vpop.f32.mrf.mxu0
        %v1039 = vadd.f32 0.0, %v1038
        %v1040 = vpop.f32.mrf.mxu0
        %1041 = vmatprep.mubr.f32.mxu0 0.0
        %1042 = vmatmul.mubr.f32.gmra.mxu0 %v883
        %v1043 = vpop.f32.mrf.mxu0
        %v1044 = vadd.f32 0.0, %v1043
        %v1045 = vpop.f32.mrf.mxu0
        %1046 = vmatprep.mubr.f32.mxu0 0.0
        %1047 = vmatmul.mubr.f32.gmra.mxu0 %v886
        %v1048 = vpop.f32.mrf.mxu0
        %v1049 = vadd.f32 0.0, %v1048
        %v1050 = vpop.f32.mrf.mxu0
        %1051 = vmatprep.mubr.f32.mxu0 0.0
        %1052 = vmatmul.mubr.f32.gmra.mxu0 %v889
        %v1053 = vpop.f32.mrf.mxu0
        %v1054 = vadd.f32 0.0, %v1053
        %v1055 = vpop.f32.mrf.mxu0
        %1056 = vmatprep.mubr.f32.mxu0 0.0
        %1057 = vmatmul.mubr.f32.gmra.mxu0 %v892
        %v1058 = vpop.f32.mrf.mxu0
        %v1059 = vadd.f32 0.0, %v1058
        %v1060 = vpop.f32.mrf.mxu0
        %1061 = vdwg.mxu0
        %v1062 = vld [vmem:[#allocation3 + $0x18] sm:$0xff]
        %v1063 = vld [vmem:[#allocation3 + $0x20] sm:$0xff]
        %v1064 = vld [vmem:[#allocation3 + $0x28] sm:$0xff]
        %v1065 = vld [vmem:[#allocation3 + $0x30] sm:$0xff]
        %v1066 = vld [vmem:[#allocation3 + $0x38] sm:$0xff]
        %v1067 = vld [vmem:[#allocation3 + $0x40] sm:$0xff]
        %v1068 = vld [vmem:[#allocation3 + $0x48] sm:$0xff]
        %v1069 = vld [vmem:[#allocation3 + $0x50] sm:$0xff]
        %v1070 = vld [vmem:[#allocation3 + $0x58] sm:$0xff]
        %v1071 = vld [vmem:[#allocation3 + $0x60] sm:$0xff]
        %v1072 = vld [vmem:[#allocation3 + $0x68] sm:$0xff]
        %v1073 = vld [vmem:[#allocation3 + $0x70] sm:$0xff]
        %v1074 = vld [vmem:[#allocation3 + $0x78] sm:$0xff]
        %v1075 = vld [vmem:[#allocation3 + $0x80] sm:$0xff]
        %v1076 = vld [vmem:[#allocation3 + $0x88] sm:$0xff]
        %v1077 = vld [vmem:[#allocation3 + $0x90] sm:$0xff]
        %v1078 = vld [vmem:[#allocation3 + $0x98] sm:$0xff]
        %v1079 = vld [vmem:[#allocation3 + $0xa0] sm:$0xff]
        %v1080 = vld [vmem:[#allocation3 + $0xa8] sm:$0xff]
        %v1081 = vld [vmem:[#allocation3 + $0xb0] sm:$0xff]
        %v1082 = vadd.f32 %v1062, %v964
        %v1083 = vadd.f32 %v1063, %v969
        %v1084 = vadd.f32 %v1064, %v974
        %v1085 = vadd.f32 %v1065, %v979
        %v1086 = vadd.f32 %v1066, %v984
        %v1087 = vadd.f32 %v1067, %v989
        %v1088 = vadd.f32 %v1068, %v994
        %v1089 = vadd.f32 %v1069, %v999
        %v1090 = vadd.f32 %v1070, %v1004
        %v1091 = vadd.f32 %v1071, %v1009
        %v1092 = vadd.f32 %v1072, %v1014
        %v1093 = vadd.f32 %v1073, %v1019
        %v1094 = vadd.f32 %v1074, %v1024
        %v1095 = vadd.f32 %v1075, %v1029
        %v1096 = vadd.f32 %v1076, %v1034
        %v1097 = vadd.f32 %v1077, %v1039
        %v1098 = vadd.f32 %v1078, %v1044
        %v1099 = vadd.f32 %v1079, %v1049
        %v1100 = vadd.f32 %v1080, %v1054
        %v1101 = vadd.f32 %v1081, %v1059
        %1102 = vst [vmem:[#allocation3 + $0x18] sm:$0xff] %v1082
        %1103 = vst [vmem:[#allocation3 + $0x20] sm:$0xff] %v1083
        %1104 = vst [vmem:[#allocation3 + $0x28] sm:$0xff] %v1084
        %1105 = vst [vmem:[#allocation3 + $0x30] sm:$0xff] %v1085
        %1106 = vst [vmem:[#allocation3 + $0x38] sm:$0xff] %v1086
        %1107 = vst [vmem:[#allocation3 + $0x40] sm:$0xff] %v1087
        %1108 = vst [vmem:[#allocation3 + $0x48] sm:$0xff] %v1088
        %1109 = vst [vmem:[#allocation3 + $0x50] sm:$0xff] %v1089
        %1110 = vst [vmem:[#allocation3 + $0x58] sm:$0xff] %v1090
        %1111 = vst [vmem:[#allocation3 + $0x60] sm:$0xff] %v1091
        %1112 = vst [vmem:[#allocation3 + $0x68] sm:$0xff] %v1092
        %1113 = vst [vmem:[#allocation3 + $0x70] sm:$0xff] %v1093
        %1114 = vst [vmem:[#allocation3 + $0x78] sm:$0xff] %v1094
        %1115 = vst [vmem:[#allocation3 + $0x80] sm:$0xff] %v1095
        %1116 = vst [vmem:[#allocation3 + $0x88] sm:$0xff] %v1096
        %1117 = vst [vmem:[#allocation3 + $0x90] sm:$0xff] %v1097
        %1118 = vst [vmem:[#allocation3 + $0x98] sm:$0xff] %v1098
        %1119 = vst [vmem:[#allocation3 + $0xa0] sm:$0xff] %v1099
        %1120 = vst [vmem:[#allocation3 + $0xa8] sm:$0xff] %v1100
        %1121 = vst [vmem:[#allocation3 + $0xb0] sm:$0xff] %v1101
        %v1122 = vld [vmem:[#allocation2 + $0x28] sm:$0xff]
        %v1123 = vld [vmem:[#allocation2 + $0x30] sm:$0xff]
        %v1124 = vld [vmem:[#allocation2 + $0x38] sm:$0xff]
        %v1125 = vld [vmem:[#allocation2 + $0x40] sm:$0xff]
        %v1126 = vld [vmem:[#allocation2 + $0x48] sm:$0xff]
        %v1127 = vld [vmem:[#allocation2 + $0x50] sm:$0xff]
        %v1128 = vld [vmem:[#allocation2 + $0x58] sm:$0xff]
        %v1129 = vld [vmem:[#allocation2 + $0x60] sm:$0xff]
        %v1130 = vld [vmem:[#allocation2 + $0x68] sm:$0xff]
        %v1131 = vld [vmem:[#allocation2 + $0x70] sm:$0xff]
        %v1132 = vld [vmem:[#allocation2 + $0x78] sm:$0xff]
        %v1133 = vld [vmem:[#allocation2 + $0x80] sm:$0xff]
        %v1134 = vld [vmem:[#allocation2 + $0x88] sm:$0xff]
        %v1135 = vld [vmem:[#allocation2 + $0x90] sm:$0xff]
        %v1136 = vld [vmem:[#allocation2 + $0x98] sm:$0xff]
        %v1137 = vld [vmem:[#allocation2 + $0xa0] sm:$0xff]
        %v1138 = vld [vmem:[#allocation2 + $0xa8] sm:$0xff]
        %v1139 = vld [vmem:[#allocation2 + $0xb0] sm:$0xff]
        %v1140 = vld [vmem:[#allocation2 + $0xb8] sm:$0xff]
        %v1141 = vld [vmem:[#allocation2 + $0xc0] sm:$0xff]
        %s1142 = scalar_lea.vmem %s2, 32
        %v1143 = vld [vmem:[%s1142] sm:$0xff]
        %v1144 = vld [vmem:[%s1142 + $0x8] sm:$0xf]
        %v1146 = vsel %vm507, %v1122, 0
        %v1149 = vsel %vm507, %v1123, 0
        %v1152 = vsel %vm507, %v1124, 0
        %v1155 = vsel %vm507, %v1125, 0
        %v1158 = vsel %vm507, %v1126, 0
        %v1161 = vsel %vm507, %v1127, 0
        %v1164 = vsel %vm507, %v1128, 0
        %v1167 = vsel %vm507, %v1129, 0
        %v1170 = vsel %vm507, %v1130, 0
        %v1173 = vsel %vm507, %v1131, 0
        %v1176 = vsel %vm507, %v1132, 0
        %v1179 = vsel %vm507, %v1133, 0
        %v1182 = vsel %vm507, %v1134, 0
        %v1185 = vsel %vm507, %v1135, 0
        %v1188 = vsel %vm507, %v1136, 0
        %v1191 = vsel %vm507, %v1137, 0
        %v1194 = vsel %vm507, %v1138, 0
        %v1197 = vsel %vm507, %v1139, 0
        %v1200 = vsel %vm507, %v1140, 0
        %v1203 = vsel %vm507, %v1141, 0
        %v1206 = vsel %vm622, %v1144, 0
        %1208 = vmatprep.subr.mxu0 0.0
        %1209 = vmatpush1.msra.mxu0 0.0
        %1210 = vmatprep.subr.mxu0 0.0
        %1211 = vmatpush1.msra.mxu0 0.0
        %1212 = vmatprep.subr.mxu0 0.0
        %1213 = vmatpush1.msra.mxu0 0.0
        %1214 = vmatprep.subr.mxu0 0.0
        %1215 = vmatpush1.msra.mxu0 0.0
        %1216 = vmatprep.subr.mxu0 0.0
        %1217 = vmatpush1.msra.mxu0 0.0
        %1218 = vmatprep.subr.mxu0 0.0
        %1219 = vmatpush1.msra.mxu0 0.0
        %1220 = vmatprep.subr.mxu0 0.0
        %1221 = vmatpush1.msra.mxu0 0.0
        %1222 = vmatprep.subr.mxu0 0.0
        %1223 = vmatpush1.msra.mxu0 0.0
        %1224 = vmatprep.subr.mxu0 0.0
        %1225 = vmatpush1.msra.mxu0 0.0
        %1226 = vmatprep.subr.mxu0 0.0
        %1227 = vmatpush1.msra.mxu0 0.0
        %1228 = vmatprep.subr.mxu0 0.0
        %1229 = vmatpush1.msra.mxu0 0.0
        %1230 = vmatprep.subr.mxu0 0.0
        %1231 = vmatpush1.msra.mxu0 0.0
        %1232 = vmatprep.subr.mxu0 0.0
        %1233 = vmatpush1.msra.mxu0 0.0
        %1234 = vmatprep.subr.mxu0 0.0
        %1235 = vmatpush1.msra.mxu0 0.0
        %1236 = vmatprep.subr.mxu0 0.0
        %1237 = vmatpush1.msra.mxu0 %v1206
        %1238 = vmatprep.subr.mxu0 0.0
        %1239 = vmatpush1.msra.mxu0 %v1143
        %1240 = vmatprep.subr.mxu0 0.0
        %1241 = vmatpush2.msra.mxu0 0.0
        %1242 = vmatprep.subr.mxu0 0.0
        %1243 = vmatpush2.msra.mxu0 0.0
        %1244 = vmatprep.subr.mxu0 0.0
        %1245 = vmatpush2.msra.mxu0 0.0
        %1246 = vmatprep.subr.mxu0 0.0
        %1247 = vmatpush2.msra.mxu0 0.0
        %1248 = vmatprep.subr.mxu0 0.0
        %1249 = vmatpush2.msra.mxu0 0.0
        %1250 = vmatprep.subr.mxu0 0.0
        %1251 = vmatpush2.msra.mxu0 0.0
        %1252 = vmatprep.subr.mxu0 0.0
        %1253 = vmatpush2.msra.mxu0 0.0
        %1254 = vmatprep.subr.mxu0 0.0
        %1255 = vmatpush2.msra.mxu0 0.0
        %1256 = vmatprep.subr.mxu0 0.0
        %1257 = vmatpush2.msra.mxu0 0.0
        %1258 = vmatprep.subr.mxu0 0.0
        %1259 = vmatpush2.msra.mxu0 0.0
        %1260 = vmatprep.subr.mxu0 0.0
        %1261 = vmatpush2.msra.mxu0 0.0
        %1262 = vmatprep.subr.mxu0 0.0
        %1263 = vmatpush2.msra.mxu0 0.0
        %1264 = vmatprep.subr.mxu0 0.0
        %1265 = vmatpush2.msra.mxu0 0.0
        %1266 = vmatprep.subr.mxu0 0.0
        %1267 = vmatpush2.msra.mxu0 0.0
        %1268 = vmatprep.subr.mxu0 0.0
        %1269 = vmatpush2.msra.mxu0 0.0
        %1270 = vmatprep.subr.mxu0 0.0
        %1271 = vmatpush2.msra.mxu0 0.0
        %1272 = vmatprep.mubr.f32.mxu0 0.0
        %1273 = vmatmul.mubr.f32.gmra.mxu0 %v1146
        %v1274 = vpop.f32.mrf.mxu0
        %v1275 = vadd.f32 0.0, %v1274
        %v1276 = vpop.f32.mrf.mxu0
        %1277 = vmatprep.mubr.f32.mxu0 0.0
        %1278 = vmatmul.mubr.f32.gmra.mxu0 %v1149
        %v1279 = vpop.f32.mrf.mxu0
        %v1280 = vadd.f32 0.0, %v1279
        %v1281 = vpop.f32.mrf.mxu0
        %1282 = vmatprep.mubr.f32.mxu0 0.0
        %1283 = vmatmul.mubr.f32.gmra.mxu0 %v1152
        %v1284 = vpop.f32.mrf.mxu0
        %v1285 = vadd.f32 0.0, %v1284
        %v1286 = vpop.f32.mrf.mxu0
        %1287 = vmatprep.mubr.f32.mxu0 0.0
        %1288 = vmatmul.mubr.f32.gmra.mxu0 %v1155
        %v1289 = vpop.f32.mrf.mxu0
        %v1290 = vadd.f32 0.0, %v1289
        %v1291 = vpop.f32.mrf.mxu0
        %1292 = vmatprep.mubr.f32.mxu0 0.0
        %1293 = vmatmul.mubr.f32.gmra.mxu0 %v1158
        %v1294 = vpop.f32.mrf.mxu0
        %v1295 = vadd.f32 0.0, %v1294
        %v1296 = vpop.f32.mrf.mxu0
        %1297 = vmatprep.mubr.f32.mxu0 0.0
        %1298 = vmatmul.mubr.f32.gmra.mxu0 %v1161
        %v1299 = vpop.f32.mrf.mxu0
        %v1300 = vadd.f32 0.0, %v1299
        %v1301 = vpop.f32.mrf.mxu0
        %1302 = vmatprep.mubr.f32.mxu0 0.0
        %1303 = vmatmul.mubr.f32.gmra.mxu0 %v1164
        %v1304 = vpop.f32.mrf.mxu0
        %v1305 = vadd.f32 0.0, %v1304
        %v1306 = vpop.f32.mrf.mxu0
        %1307 = vmatprep.mubr.f32.mxu0 0.0
        %1308 = vmatmul.mubr.f32.gmra.mxu0 %v1167
        %v1309 = vpop.f32.mrf.mxu0
        %v1310 = vadd.f32 0.0, %v1309
        %v1311 = vpop.f32.mrf.mxu0
        %1312 = vmatprep.mubr.f32.mxu0 0.0
        %1313 = vmatmul.mubr.f32.gmra.mxu0 %v1170
        %v1314 = vpop.f32.mrf.mxu0
        %v1315 = vadd.f32 0.0, %v1314
        %v1316 = vpop.f32.mrf.mxu0
        %1317 = vmatprep.mubr.f32.mxu0 0.0
        %1318 = vmatmul.mubr.f32.gmra.mxu0 %v1173
        %v1319 = vpop.f32.mrf.mxu0
        %v1320 = vadd.f32 0.0, %v1319
        %v1321 = vpop.f32.mrf.mxu0
        %1322 = vmatprep.mubr.f32.mxu0 0.0
        %1323 = vmatmul.mubr.f32.gmra.mxu0 %v1176
        %v1324 = vpop.f32.mrf.mxu0
        %v1325 = vadd.f32 0.0, %v1324
        %v1326 = vpop.f32.mrf.mxu0
        %1327 = vmatprep.mubr.f32.mxu0 0.0
        %1328 = vmatmul.mubr.f32.gmra.mxu0 %v1179
        %v1329 = vpop.f32.mrf.mxu0
        %v1330 = vadd.f32 0.0, %v1329
        %v1331 = vpop.f32.mrf.mxu0
        %1332 = vmatprep.mubr.f32.mxu0 0.0
        %1333 = vmatmul.mubr.f32.gmra.mxu0 %v1182
        %v1334 = vpop.f32.mrf.mxu0
        %v1335 = vadd.f32 0.0, %v1334
        %v1336 = vpop.f32.mrf.mxu0
        %1337 = vmatprep.mubr.f32.mxu0 0.0
        %1338 = vmatmul.mubr.f32.gmra.mxu0 %v1185
        %v1339 = vpop.f32.mrf.mxu0
        %v1340 = vadd.f32 0.0, %v1339
        %v1341 = vpop.f32.mrf.mxu0
        %1342 = vmatprep.mubr.f32.mxu0 0.0
        %1343 = vmatmul.mubr.f32.gmra.mxu0 %v1188
        %v1344 = vpop.f32.mrf.mxu0
        %v1345 = vadd.f32 0.0, %v1344
        %v1346 = vpop.f32.mrf.mxu0
        %1347 = vmatprep.mubr.f32.mxu0 0.0
        %1348 = vmatmul.mubr.f32.gmra.mxu0 %v1191
        %v1349 = vpop.f32.mrf.mxu0
        %v1350 = vadd.f32 0.0, %v1349
        %v1351 = vpop.f32.mrf.mxu0
        %1352 = vmatprep.mubr.f32.mxu0 0.0
        %1353 = vmatmul.mubr.f32.gmra.mxu0 %v1194
        %v1354 = vpop.f32.mrf.mxu0
        %v1355 = vadd.f32 0.0, %v1354
        %v1356 = vpop.f32.mrf.mxu0
        %1357 = vmatprep.mubr.f32.mxu0 0.0
        %1358 = vmatmul.mubr.f32.gmra.mxu0 %v1197
        %v1359 = vpop.f32.mrf.mxu0
        %v1360 = vadd.f32 0.0, %v1359
        %v1361 = vpop.f32.mrf.mxu0
        %1362 = vmatprep.mubr.f32.mxu0 0.0
        %1363 = vmatmul.mubr.f32.gmra.mxu0 %v1200
        %v1364 = vpop.f32.mrf.mxu0
        %v1365 = vadd.f32 0.0, %v1364
        %v1366 = vpop.f32.mrf.mxu0
        %1367 = vmatprep.mubr.f32.mxu0 0.0
        %1368 = vmatmul.mubr.f32.gmra.mxu0 %v1203
        %v1369 = vpop.f32.mrf.mxu0
        %v1370 = vadd.f32 0.0, %v1369
        %v1371 = vpop.f32.mrf.mxu0
        %1372 = vdwg.mxu0
        %v1373 = vld [vmem:[#allocation3 + $0x18] sm:$0xff]
        %v1374 = vld [vmem:[#allocation3 + $0x20] sm:$0xff]
        %v1375 = vld [vmem:[#allocation3 + $0x28] sm:$0xff]
        %v1376 = vld [vmem:[#allocation3 + $0x30] sm:$0xff]
        %v1377 = vld [vmem:[#allocation3 + $0x38] sm:$0xff]
        %v1378 = vld [vmem:[#allocation3 + $0x40] sm:$0xff]
        %v1379 = vld [vmem:[#allocation3 + $0x48] sm:$0xff]
        %v1380 = vld [vmem:[#allocation3 + $0x50] sm:$0xff]
        %v1381 = vld [vmem:[#allocation3 + $0x58] sm:$0xff]
        %v1382 = vld [vmem:[#allocation3 + $0x60] sm:$0xff]
        %v1383 = vld [vmem:[#allocation3 + $0x68] sm:$0xff]
        %v1384 = vld [vmem:[#allocation3 + $0x70] sm:$0xff]
        %v1385 = vld [vmem:[#allocation3 + $0x78] sm:$0xff]
        %v1386 = vld [vmem:[#allocation3 + $0x80] sm:$0xff]
        %v1387 = vld [vmem:[#allocation3 + $0x88] sm:$0xff]
        %v1388 = vld [vmem:[#allocation3 + $0x90] sm:$0xff]
        %v1389 = vld [vmem:[#allocation3 + $0x98] sm:$0xff]
        %v1390 = vld [vmem:[#allocation3 + $0xa0] sm:$0xff]
        %v1391 = vld [vmem:[#allocation3 + $0xa8] sm:$0xff]
        %v1392 = vld [vmem:[#allocation3 + $0xb0] sm:$0xff]
        %v1393 = vadd.f32 %v1373, %v1275
        %v1394 = vadd.f32 %v1374, %v1280
        %v1395 = vadd.f32 %v1375, %v1285
        %v1396 = vadd.f32 %v1376, %v1290
        %v1397 = vadd.f32 %v1377, %v1295
        %v1398 = vadd.f32 %v1378, %v1300
        %v1399 = vadd.f32 %v1379, %v1305
        %v1400 = vadd.f32 %v1380, %v1310
        %v1401 = vadd.f32 %v1381, %v1315
        %v1402 = vadd.f32 %v1382, %v1320
        %v1403 = vadd.f32 %v1383, %v1325
        %v1404 = vadd.f32 %v1384, %v1330
        %v1405 = vadd.f32 %v1385, %v1335
        %v1406 = vadd.f32 %v1386, %v1340
        %v1407 = vadd.f32 %v1387, %v1345
        %v1408 = vadd.f32 %v1388, %v1350
        %v1409 = vadd.f32 %v1389, %v1355
        %v1410 = vadd.f32 %v1390, %v1360
        %v1411 = vadd.f32 %v1391, %v1365
        %v1412 = vadd.f32 %v1392, %v1370
        %1413 = vst [vmem:[#allocation3 + $0x18] sm:$0xff] %v1393
        %1414 = vst [vmem:[#allocation3 + $0x20] sm:$0xff] %v1394
        %1415 = vst [vmem:[#allocation3 + $0x28] sm:$0xff] %v1395
        %1416 = vst [vmem:[#allocation3 + $0x30] sm:$0xff] %v1396
        %1417 = vst [vmem:[#allocation3 + $0x38] sm:$0xff] %v1397
        %1418 = vst [vmem:[#allocation3 + $0x40] sm:$0xff] %v1398
        %1419 = vst [vmem:[#allocation3 + $0x48] sm:$0xff] %v1399
        %1420 = vst [vmem:[#allocation3 + $0x50] sm:$0xff] %v1400
        %1421 = vst [vmem:[#allocation3 + $0x58] sm:$0xff] %v1401
        %1422 = vst [vmem:[#allocation3 + $0x60] sm:$0xff] %v1402
        %1423 = vst [vmem:[#allocation3 + $0x68] sm:$0xff] %v1403
        %1424 = vst [vmem:[#allocation3 + $0x70] sm:$0xff] %v1404
        %1425 = vst [vmem:[#allocation3 + $0x78] sm:$0xff] %v1405
        %1426 = vst [vmem:[#allocation3 + $0x80] sm:$0xff] %v1406
        %1427 = vst [vmem:[#allocation3 + $0x88] sm:$0xff] %v1407
        %1428 = vst [vmem:[#allocation3 + $0x90] sm:$0xff] %v1408
        %1429 = vst [vmem:[#allocation3 + $0x98] sm:$0xff] %v1409
        %1430 = vst [vmem:[#allocation3 + $0xa0] sm:$0xff] %v1410
        %1431 = vst [vmem:[#allocation3 + $0xa8] sm:$0xff] %v1411
        %1432 = vst [vmem:[#allocation3 + $0xb0] sm:$0xff] %v1412
        %v1433 = vld [vmem:[%s1] sm:$0xff]
        %v1434 = vld [vmem:[%s1 + $0x8] sm:$0xff]
        %v1435 = vld [vmem:[%s1 + $0x10] sm:$0xff]
        %v1436 = vld [vmem:[%s1 + $0x18] sm:$0xff]
        %v1437 = vld [vmem:[%s1 + $0x20] sm:$0xff]
        %v1438 = vld [vmem:[%s1 + $0x28] sm:$0xff]
        %v1439 = vld [vmem:[%s1 + $0x30] sm:$0xff]
        %v1440 = vld [vmem:[%s1 + $0x38] sm:$0xff]
        %v1441 = vld [vmem:[%s1 + $0x40] sm:$0xff]
        %v1442 = vld [vmem:[%s1 + $0x48] sm:$0xff]
        %v1443 = vld [vmem:[%s1 + $0x50] sm:$0xff]
        %v1444 = vld [vmem:[%s1 + $0x58] sm:$0xff]
        %v1445 = vld [vmem:[%s1 + $0x60] sm:$0xff]
        %v1446 = vld [vmem:[%s1 + $0x68] sm:$0xff]
        %v1447 = vld [vmem:[%s1 + $0x70] sm:$0xff]
        %v1448 = vld [vmem:[%s1 + $0x78] sm:$0xff]
        %v1449 = vld [vmem:[%s1 + $0x80] sm:$0xff]
        %v1450 = vld [vmem:[%s1 + $0x88] sm:$0xff]
        %v1451 = vld [vmem:[%s1 + $0x90] sm:$0xff]
        %v1452 = vld [vmem:[%s1 + $0x98] sm:$0xff]
        %vm1453 = vcmp.gt.f32.partialorder %v1433, 0.0
        %vm1454 = vcmp.gt.f32.partialorder %v1434, 0.0
        %vm1455 = vcmp.gt.f32.partialorder %v1435, 0.0
        %vm1456 = vcmp.gt.f32.partialorder %v1436, 0.0
        %vm1457 = vcmp.gt.f32.partialorder %v1437, 0.0
        %vm1458 = vcmp.gt.f32.partialorder %v1438, 0.0
        %vm1459 = vcmp.gt.f32.partialorder %v1439, 0.0
        %vm1460 = vcmp.gt.f32.partialorder %v1440, 0.0
        %vm1461 = vcmp.gt.f32.partialorder %v1441, 0.0
        %vm1462 = vcmp.gt.f32.partialorder %v1442, 0.0
        %vm1463 = vcmp.gt.f32.partialorder %v1443, 0.0
        %vm1464 = vcmp.gt.f32.partialorder %v1444, 0.0
        %vm1465 = vcmp.gt.f32.partialorder %v1445, 0.0
        %vm1466 = vcmp.gt.f32.partialorder %v1446, 0.0
        %vm1467 = vcmp.gt.f32.partialorder %v1447, 0.0
        %vm1468 = vcmp.gt.f32.partialorder %v1448, 0.0
        %vm1469 = vcmp.gt.f32.partialorder %v1449, 0.0
        %vm1470 = vcmp.gt.f32.partialorder %v1450, 0.0
        %vm1471 = vcmp.gt.f32.partialorder %v1451, 0.0
        %vm1472 = vcmp.gt.f32.partialorder %v1452, 0.0
        %v1473 = vld [vmem:[#allocation3 + $0x18] sm:$0xff]
        %v1474 = vld [vmem:[#allocation3 + $0x20] sm:$0xff]
        %v1475 = vld [vmem:[#allocation3 + $0x28] sm:$0xff]
        %v1476 = vld [vmem:[#allocation3 + $0x30] sm:$0xff]
        %v1477 = vld [vmem:[#allocation3 + $0x38] sm:$0xff]
        %v1478 = vld [vmem:[#allocation3 + $0x40] sm:$0xff]
        %v1479 = vld [vmem:[#allocation3 + $0x48] sm:$0xff]
        %v1480 = vld [vmem:[#allocation3 + $0x50] sm:$0xff]
        %v1481 = vld [vmem:[#allocation3 + $0x58] sm:$0xff]
        %v1482 = vld [vmem:[#allocation3 + $0x60] sm:$0xff]
        %v1483 = vld [vmem:[#allocation3 + $0x68] sm:$0xff]
        %v1484 = vld [vmem:[#allocation3 + $0x70] sm:$0xff]
        %v1485 = vld [vmem:[#allocation3 + $0x78] sm:$0xff]
        %v1486 = vld [vmem:[#allocation3 + $0x80] sm:$0xff]
        %v1487 = vld [vmem:[#allocation3 + $0x88] sm:$0xff]
        %v1488 = vld [vmem:[#allocation3 + $0x90] sm:$0xff]
        %v1489 = vld [vmem:[#allocation3 + $0x98] sm:$0xff]
        %v1490 = vld [vmem:[#allocation3 + $0xa0] sm:$0xff]
        %v1491 = vld [vmem:[#allocation3 + $0xa8] sm:$0xff]
        %v1492 = vld [vmem:[#allocation3 + $0xb0] sm:$0xff]
        %v1493 = vld [vmem:[%s3] sm:$0x1]
        %v1495 = vlaneseq
        %v1496 = vshrl.u32 %v1495, 7
        %v1497 = vsub.s32 0, %v1496
        %v1498 = vrot.slane %v1493, %v1497
        %v1500 = vadd.f32 %v1473, %v1498
        %v1501 = vadd.f32 %v1474, %v1498
        %v1502 = vadd.f32 %v1475, %v1498
        %v1503 = vadd.f32 %v1476, %v1498
        %v1504 = vadd.f32 %v1477, %v1498
        %v1505 = vadd.f32 %v1478, %v1498
        %v1506 = vadd.f32 %v1479, %v1498
        %v1507 = vadd.f32 %v1480, %v1498
        %v1508 = vadd.f32 %v1481, %v1498
        %v1509 = vadd.f32 %v1482, %v1498
        %v1510 = vadd.f32 %v1483, %v1498
        %v1511 = vadd.f32 %v1484, %v1498
        %v1512 = vadd.f32 %v1485, %v1498
        %v1513 = vadd.f32 %v1486, %v1498
        %v1514 = vadd.f32 %v1487, %v1498
        %v1515 = vadd.f32 %v1488, %v1498
        %v1516 = vadd.f32 %v1489, %v1498
        %v1517 = vadd.f32 %v1490, %v1498
        %v1518 = vadd.f32 %v1491, %v1498
        %v1519 = vadd.f32 %v1492, %v1498
        %v1520 = vmax.f32 %v1500, 0.0
        %v1521 = vmax.f32 %v1501, 0.0
        %v1522 = vmax.f32 %v1502, 0.0
        %v1523 = vmax.f32 %v1503, 0.0
        %v1524 = vmax.f32 %v1504, 0.0
        %v1525 = vmax.f32 %v1505, 0.0
        %v1526 = vmax.f32 %v1506, 0.0
        %v1527 = vmax.f32 %v1507, 0.0
        %v1528 = vmax.f32 %v1508, 0.0
        %v1529 = vmax.f32 %v1509, 0.0
        %v1530 = vmax.f32 %v1510, 0.0
        %v1531 = vmax.f32 %v1511, 0.0
        %v1532 = vmax.f32 %v1512, 0.0
        %v1533 = vmax.f32 %v1513, 0.0
        %v1534 = vmax.f32 %v1514, 0.0
        %v1535 = vmax.f32 %v1515, 0.0
        %v1536 = vmax.f32 %v1516, 0.0
        %v1537 = vmax.f32 %v1517, 0.0
        %v1538 = vmax.f32 %v1518, 0.0
        %v1539 = vmax.f32 %v1519, 0.0
        %v1540 = vsel %vm1453, 1, 0
        %v1541 = vsel %vm1454, 1, 0
        %v1542 = vsel %vm1455, 1, 0
        %v1543 = vsel %vm1456, 1, 0
        %v1544 = vsel %vm1457, 1, 0
        %v1545 = vsel %vm1458, 1, 0
        %v1546 = vsel %vm1459, 1, 0
        %v1547 = vsel %vm1460, 1, 0
        %v1548 = vsel %vm1461, 1, 0
        %v1549 = vsel %vm1462, 1, 0
        %v1550 = vsel %vm1463, 1, 0
        %v1551 = vsel %vm1464, 1, 0
        %v1552 = vsel %vm1465, 1, 0
        %v1553 = vsel %vm1466, 1, 0
        %v1554 = vsel %vm1467, 1, 0
        %v1555 = vsel %vm1468, 1, 0
        %v1556 = vsel %vm1469, 1, 0
        %v1557 = vsel %vm1470, 1, 0
        %v1558 = vsel %vm1471, 1, 0
        %v1559 = vsel %vm1472, 1, 0
        %1560 = vset.pattern.permute.xlu0 0
        %1561 = vperm.xlu0 %1560, %v1540
        %v1562 = vpop.permute.xlu0 %1561
        %1563 = vset.pattern.permute.xlu0 0
        %1564 = vperm.xlu0 %1563, %v1541
        %v1565 = vpop.permute.xlu0 %1564
        %1566 = vset.pattern.permute.xlu0 0
        %1567 = vperm.xlu0 %1566, %v1542
        %v1568 = vpop.permute.xlu0 %1567
        %1569 = vset.pattern.permute.xlu0 0
        %1570 = vperm.xlu0 %1569, %v1543
        %v1571 = vpop.permute.xlu0 %1570
        %1572 = vset.pattern.permute.xlu0 0
        %1573 = vperm.xlu0 %1572, %v1544
        %v1574 = vpop.permute.xlu0 %1573
        %1575 = vset.pattern.permute.xlu0 0
        %1576 = vperm.xlu0 %1575, %v1545
        %v1577 = vpop.permute.xlu0 %1576
        %1578 = vset.pattern.permute.xlu0 0
        %1579 = vperm.xlu0 %1578, %v1546
        %v1580 = vpop.permute.xlu0 %1579
        %1581 = vset.pattern.permute.xlu0 0
        %1582 = vperm.xlu0 %1581, %v1547
        %v1583 = vpop.permute.xlu0 %1582
        %1584 = vset.pattern.permute.xlu0 0
        %1585 = vperm.xlu0 %1584, %v1548
        %v1586 = vpop.permute.xlu0 %1585
        %1587 = vset.pattern.permute.xlu0 0
        %1588 = vperm.xlu0 %1587, %v1549
        %v1589 = vpop.permute.xlu0 %1588
        %1590 = vset.pattern.permute.xlu0 0
        %1591 = vperm.xlu0 %1590, %v1550
        %v1592 = vpop.permute.xlu0 %1591
        %1593 = vset.pattern.permute.xlu0 0
        %1594 = vperm.xlu0 %1593, %v1551
        %v1595 = vpop.permute.xlu0 %1594
        %1596 = vset.pattern.permute.xlu0 0
        %1597 = vperm.xlu0 %1596, %v1552
        %v1598 = vpop.permute.xlu0 %1597
        %1599 = vset.pattern.permute.xlu0 0
        %1600 = vperm.xlu0 %1599, %v1553
        %v1601 = vpop.permute.xlu0 %1600
        %1602 = vset.pattern.permute.xlu0 0
        %1603 = vperm.xlu0 %1602, %v1554
        %v1604 = vpop.permute.xlu0 %1603
        %1605 = vset.pattern.permute.xlu0 0
        %1606 = vperm.xlu0 %1605, %v1555
        %v1607 = vpop.permute.xlu0 %1606
        %1608 = vset.pattern.permute.xlu0 0
        %1609 = vperm.xlu0 %1608, %v1556
        %v1610 = vpop.permute.xlu0 %1609
        %1611 = vset.pattern.permute.xlu0 0
        %1612 = vperm.xlu0 %1611, %v1557
        %v1613 = vpop.permute.xlu0 %1612
        %1614 = vset.pattern.permute.xlu0 0
        %1615 = vperm.xlu0 %1614, %v1558
        %v1616 = vpop.permute.xlu0 %1615
        %1617 = vset.pattern.permute.xlu0 0
        %1618 = vperm.xlu0 %1617, %v1559
        %v1619 = vpop.permute.xlu0 %1618
        %vm1620 = vcmp.eq.s32.totalorder %v1562, 1
        %vm1621 = vcmp.eq.s32.totalorder %v1565, 1
        %vm1622 = vcmp.eq.s32.totalorder %v1568, 1
        %vm1623 = vcmp.eq.s32.totalorder %v1571, 1
        %vm1624 = vcmp.eq.s32.totalorder %v1574, 1
        %vm1625 = vcmp.eq.s32.totalorder %v1577, 1
        %vm1626 = vcmp.eq.s32.totalorder %v1580, 1
        %vm1627 = vcmp.eq.s32.totalorder %v1583, 1
        %vm1628 = vcmp.eq.s32.totalorder %v1586, 1
        %vm1629 = vcmp.eq.s32.totalorder %v1589, 1
        %vm1630 = vcmp.eq.s32.totalorder %v1592, 1
        %vm1631 = vcmp.eq.s32.totalorder %v1595, 1
        %vm1632 = vcmp.eq.s32.totalorder %v1598, 1
        %vm1633 = vcmp.eq.s32.totalorder %v1601, 1
        %vm1634 = vcmp.eq.s32.totalorder %v1604, 1
        %vm1635 = vcmp.eq.s32.totalorder %v1607, 1
        %vm1636 = vcmp.eq.s32.totalorder %v1610, 1
        %vm1637 = vcmp.eq.s32.totalorder %v1613, 1
        %vm1638 = vcmp.eq.s32.totalorder %v1616, 1
        %vm1639 = vcmp.eq.s32.totalorder %v1619, 1
        %v1640 = vsel %vm1620, %v1520, 0.0
        %v1641 = vsel %vm1621, %v1521, 0.0
        %v1642 = vsel %vm1622, %v1522, 0.0
        %v1643 = vsel %vm1623, %v1523, 0.0
        %v1644 = vsel %vm1624, %v1524, 0.0
        %v1645 = vsel %vm1625, %v1525, 0.0
        %v1646 = vsel %vm1626, %v1526, 0.0
        %v1647 = vsel %vm1627, %v1527, 0.0
        %v1648 = vsel %vm1628, %v1528, 0.0
        %v1649 = vsel %vm1629, %v1529, 0.0
        %v1650 = vsel %vm1630, %v1530, 0.0
        %v1651 = vsel %vm1631, %v1531, 0.0
        %v1652 = vsel %vm1632, %v1532, 0.0
        %v1653 = vsel %vm1633, %v1533, 0.0
        %v1654 = vsel %vm1634, %v1534, 0.0
        %v1655 = vsel %vm1635, %v1535, 0.0
        %v1656 = vsel %vm1636, %v1536, 0.0
        %v1657 = vsel %vm1637, %v1537, 0.0
        %v1658 = vsel %vm1638, %v1538, 0.0
        %v1659 = vsel %vm1639, %v1539, 0.0
        %1660 = vst [vmem:[#allocation3 + $0x18] sm:$0xff] %v1640
        %1661 = vst [vmem:[#allocation3 + $0x20] sm:$0xff] %v1641
        %1662 = vst [vmem:[#allocation3 + $0x28] sm:$0xff] %v1642
        %1663 = vst [vmem:[#allocation3 + $0x30] sm:$0xff] %v1643
        %1664 = vst [vmem:[#allocation3 + $0x38] sm:$0xff] %v1644
        %1665 = vst [vmem:[#allocation3 + $0x40] sm:$0xff] %v1645
        %1666 = vst [vmem:[#allocation3 + $0x48] sm:$0xff] %v1646
        %1667 = vst [vmem:[#allocation3 + $0x50] sm:$0xff] %v1647
        %1668 = vst [vmem:[#allocation3 + $0x58] sm:$0xff] %v1648
        %1669 = vst [vmem:[#allocation3 + $0x60] sm:$0xff] %v1649
        %1670 = vst [vmem:[#allocation3 + $0x68] sm:$0xff] %v1650
        %1671 = vst [vmem:[#allocation3 + $0x70] sm:$0xff] %v1651
        %1672 = vst [vmem:[#allocation3 + $0x78] sm:$0xff] %v1652
        %1673 = vst [vmem:[#allocation3 + $0x80] sm:$0xff] %v1653
        %1674 = vst [vmem:[#allocation3 + $0x88] sm:$0xff] %v1654
        %1675 = vst [vmem:[#allocation3 + $0x90] sm:$0xff] %v1655
        %1676 = vst [vmem:[#allocation3 + $0x98] sm:$0xff] %v1656
        %1677 = vst [vmem:[#allocation3 + $0xa0] sm:$0xff] %v1657
        %1678 = vst [vmem:[#allocation3 + $0xa8] sm:$0xff] %v1658
        %1679 = vst [vmem:[#allocation3 + $0xb0] sm:$0xff] %v1659
        %v1680 = vld [vmem:[#allocation3 + $0x7] sm:$0xff]
        %v1681 = vld [vmem:[#allocation3 + $0xf] sm:$0xff]
        %v1682 = vld [vmem:[#allocation3 + $0x17] sm:$0xff]
        %v1683 = vld [vmem:[#allocation3 + $0x1f] sm:$0xff]
        %v1684 = vld [vmem:[#allocation3 + $0x27] sm:$0xff]
        %v1685 = vld [vmem:[#allocation3 + $0x2f] sm:$0xff]
        %v1686 = vld [vmem:[#allocation3 + $0x37] sm:$0xff]
        %v1687 = vld [vmem:[#allocation3 + $0x3f] sm:$0xff]
        %v1688 = vld [vmem:[#allocation3 + $0x47] sm:$0xff]
        %v1689 = vld [vmem:[#allocation3 + $0x4f] sm:$0xff]
        %v1690 = vld [vmem:[#allocation3 + $0x57] sm:$0xff]
        %v1691 = vld [vmem:[#allocation3 + $0x5f] sm:$0xff]
        %v1692 = vld [vmem:[#allocation3 + $0x67] sm:$0xff]
        %v1693 = vld [vmem:[#allocation3 + $0x6f] sm:$0xff]
        %v1694 = vld [vmem:[#allocation3 + $0x77] sm:$0xff]
        %v1695 = vld [vmem:[#allocation3 + $0x7f] sm:$0xff]
        %v1696 = vld [vmem:[#allocation3 + $0x87] sm:$0xff]
        %v1697 = vld [vmem:[#allocation3 + $0x8f] sm:$0xff]
        %v1698 = vld [vmem:[#allocation3 + $0x97] sm:$0xff]
        %v1699 = vld [vmem:[#allocation3 + $0x9f] sm:$0xff]
        %v1700 = vld [vmem:[%s4] sm:$0xff]
        %v1701 = vld [vmem:[%s4 + $0x8] sm:$0xff]
        %v1702 = vld [vmem:[%s4 + $0x10] sm:$0xff]
        %v1703 = vld [vmem:[%s4 + $0x18] sm:$0xff]
        %v1704 = vld [vmem:[%s4 + $0x20] sm:$0xff]
        %v1705 = vld [vmem:[%s4 + $0x28] sm:$0xff]
        %v1706 = vld [vmem:[%s4 + $0x30] sm:$0xff]
        %v1707 = vld [vmem:[%s4 + $0x38] sm:$0xff]
        %v1708 = vld [vmem:[%s4 + $0x40] sm:$0xff]
        %v1709 = vld [vmem:[%s4 + $0x48] sm:$0xff]
        %v1710 = vld [vmem:[%s4 + $0x50] sm:$0xff]
        %v1711 = vld [vmem:[%s4 + $0x58] sm:$0xff]
        %v1712 = vld [vmem:[%s4 + $0x60] sm:$0xff]
        %v1713 = vld [vmem:[%s4 + $0x68] sm:$0xff]
        %v1714 = vld [vmem:[%s4 + $0x70] sm:$0xff]
        %v1715 = vld [vmem:[%s4 + $0x78] sm:$0xff]
        %1716 = vmatprep.subr.mxu0 0.0
        %1717 = vmatpush1.msra.mxu0 %v1715
        %1718 = vmatprep.subr.mxu0 0.0
        %1719 = vmatpush1.msra.mxu0 %v1714
        %1720 = vmatprep.subr.mxu0 0.0
        %1721 = vmatpush1.msra.mxu0 %v1713
        %1722 = vmatprep.subr.mxu0 0.0
        %1723 = vmatpush1.msra.mxu0 %v1712
        %1724 = vmatprep.subr.mxu0 0.0
        %1725 = vmatpush1.msra.mxu0 %v1711
        %1726 = vmatprep.subr.mxu0 0.0
        %1727 = vmatpush1.msra.mxu0 %v1710
        %1728 = vmatprep.subr.mxu0 0.0
        %1729 = vmatpush1.msra.mxu0 %v1709
        %1730 = vmatprep.subr.mxu0 0.0
        %1731 = vmatpush1.msra.mxu0 %v1708
        %1732 = vmatprep.subr.mxu0 0.0
        %1733 = vmatpush1.msra.mxu0 %v1707
        %1734 = vmatprep.subr.mxu0 0.0
        %1735 = vmatpush1.msra.mxu0 %v1706
        %1736 = vmatprep.subr.mxu0 0.0
        %1737 = vmatpush1.msra.mxu0 %v1705
        %1738 = vmatprep.subr.mxu0 0.0
        %1739 = vmatpush1.msra.mxu0 %v1704
        %1740 = vmatprep.subr.mxu0 0.0
        %1741 = vmatpush1.msra.mxu0 %v1703
        %1742 = vmatprep.subr.mxu0 0.0
        %1743 = vmatpush1.msra.mxu0 %v1702
        %1744 = vmatprep.subr.mxu0 0.0
        %1745 = vmatpush1.msra.mxu0 %v1701
        %1746 = vmatprep.subr.mxu0 0.0
        %1747 = vmatpush1.msra.mxu0 %v1700
        %1748 = vmatprep.subr.mxu0 0.0
        %1749 = vmatpush2.msra.mxu0 0.0
        %1750 = vmatprep.subr.mxu0 0.0
        %1751 = vmatpush2.msra.mxu0 0.0
        %1752 = vmatprep.subr.mxu0 0.0
        %1753 = vmatpush2.msra.mxu0 0.0
        %1754 = vmatprep.subr.mxu0 0.0
        %1755 = vmatpush2.msra.mxu0 0.0
        %1756 = vmatprep.subr.mxu0 0.0
        %1757 = vmatpush2.msra.mxu0 0.0
        %1758 = vmatprep.subr.mxu0 0.0
        %1759 = vmatpush2.msra.mxu0 0.0
        %1760 = vmatprep.subr.mxu0 0.0
        %1761 = vmatpush2.msra.mxu0 0.0
        %1762 = vmatprep.subr.mxu0 0.0
        %1763 = vmatpush2.msra.mxu0 0.0
        %1764 = vmatprep.subr.mxu0 0.0
        %1765 = vmatpush2.msra.mxu0 0.0
        %1766 = vmatprep.subr.mxu0 0.0
        %1767 = vmatpush2.msra.mxu0 0.0
        %1768 = vmatprep.subr.mxu0 0.0
        %1769 = vmatpush2.msra.mxu0 0.0
        %1770 = vmatprep.subr.mxu0 0.0
        %1771 = vmatpush2.msra.mxu0 0.0
        %1772 = vmatprep.subr.mxu0 0.0
        %1773 = vmatpush2.msra.mxu0 0.0
        %1774 = vmatprep.subr.mxu0 0.0
        %1775 = vmatpush2.msra.mxu0 0.0
        %1776 = vmatprep.subr.mxu0 0.0
        %1777 = vmatpush2.msra.mxu0 0.0
        %1778 = vmatprep.subr.mxu0 0.0
        %1779 = vmatpush2.msra.mxu0 0.0
        %1780 = vmatprep.mubr.f32.mxu0 0.0
        %1781 = vmatmul.mubr.f32.gmra.mxu0 %v1680
        %v1782 = vpop.f32.mrf.mxu0
        %v1783 = vadd.f32 0.0, %v1782
        %v1784 = vpop.f32.mrf.mxu0
        %1785 = vmatprep.mubr.f32.mxu0 0.0
        %1786 = vmatmul.mubr.f32.gmra.mxu0 %v1681
        %v1787 = vpop.f32.mrf.mxu0
        %v1788 = vadd.f32 0.0, %v1787
        %v1789 = vpop.f32.mrf.mxu0
        %1790 = vmatprep.mubr.f32.mxu0 0.0
        %1791 = vmatmul.mubr.f32.gmra.mxu0 %v1682
        %v1792 = vpop.f32.mrf.mxu0
        %v1793 = vadd.f32 0.0, %v1792
        %v1794 = vpop.f32.mrf.mxu0
        %1795 = vmatprep.mubr.f32.mxu0 0.0
        %1796 = vmatmul.mubr.f32.gmra.mxu0 %v1683
        %v1797 = vpop.f32.mrf.mxu0
        %v1798 = vadd.f32 0.0, %v1797
        %v1799 = vpop.f32.mrf.mxu0
        %1800 = vmatprep.mubr.f32.mxu0 0.0
        %1801 = vmatmul.mubr.f32.gmra.mxu0 %v1684
        %v1802 = vpop.f32.mrf.mxu0
        %v1803 = vadd.f32 0.0, %v1802
        %v1804 = vpop.f32.mrf.mxu0
        %1805 = vmatprep.mubr.f32.mxu0 0.0
        %1806 = vmatmul.mubr.f32.gmra.mxu0 %v1685
        %v1807 = vpop.f32.mrf.mxu0
        %v1808 = vadd.f32 0.0, %v1807
        %v1809 = vpop.f32.mrf.mxu0
        %1810 = vmatprep.mubr.f32.mxu0 0.0
        %1811 = vmatmul.mubr.f32.gmra.mxu0 %v1686
        %v1812 = vpop.f32.mrf.mxu0
        %v1813 = vadd.f32 0.0, %v1812
        %v1814 = vpop.f32.mrf.mxu0
        %1815 = vmatprep.mubr.f32.mxu0 0.0
        %1816 = vmatmul.mubr.f32.gmra.mxu0 %v1687
        %v1817 = vpop.f32.mrf.mxu0
        %v1818 = vadd.f32 0.0, %v1817
        %v1819 = vpop.f32.mrf.mxu0
        %1820 = vmatprep.mubr.f32.mxu0 0.0
        %1821 = vmatmul.mubr.f32.gmra.mxu0 %v1688
        %v1822 = vpop.f32.mrf.mxu0
        %v1823 = vadd.f32 0.0, %v1822
        %v1824 = vpop.f32.mrf.mxu0
        %1825 = vmatprep.mubr.f32.mxu0 0.0
        %1826 = vmatmul.mubr.f32.gmra.mxu0 %v1689
        %v1827 = vpop.f32.mrf.mxu0
        %v1828 = vadd.f32 0.0, %v1827
        %v1829 = vpop.f32.mrf.mxu0
        %1830 = vmatprep.mubr.f32.mxu0 0.0
        %1831 = vmatmul.mubr.f32.gmra.mxu0 %v1690
        %v1832 = vpop.f32.mrf.mxu0
        %v1833 = vadd.f32 0.0, %v1832
        %v1834 = vpop.f32.mrf.mxu0
        %1835 = vmatprep.mubr.f32.mxu0 0.0
        %1836 = vmatmul.mubr.f32.gmra.mxu0 %v1691
        %v1837 = vpop.f32.mrf.mxu0
        %v1838 = vadd.f32 0.0, %v1837
        %v1839 = vpop.f32.mrf.mxu0
        %1840 = vmatprep.mubr.f32.mxu0 0.0
        %1841 = vmatmul.mubr.f32.gmra.mxu0 %v1692
        %v1842 = vpop.f32.mrf.mxu0
        %v1843 = vadd.f32 0.0, %v1842
        %v1844 = vpop.f32.mrf.mxu0
        %1845 = vmatprep.mubr.f32.mxu0 0.0
        %1846 = vmatmul.mubr.f32.gmra.mxu0 %v1693
        %v1847 = vpop.f32.mrf.mxu0
        %v1848 = vadd.f32 0.0, %v1847
        %v1849 = vpop.f32.mrf.mxu0
        %1850 = vmatprep.mubr.f32.mxu0 0.0
        %1851 = vmatmul.mubr.f32.gmra.mxu0 %v1694
        %v1852 = vpop.f32.mrf.mxu0
        %v1853 = vadd.f32 0.0, %v1852
        %v1854 = vpop.f32.mrf.mxu0
        %1855 = vmatprep.mubr.f32.mxu0 0.0
        %1856 = vmatmul.mubr.f32.gmra.mxu0 %v1695
        %v1857 = vpop.f32.mrf.mxu0
        %v1858 = vadd.f32 0.0, %v1857
        %v1859 = vpop.f32.mrf.mxu0
        %1860 = vmatprep.mubr.f32.mxu0 0.0
        %1861 = vmatmul.mubr.f32.gmra.mxu0 %v1696
        %v1862 = vpop.f32.mrf.mxu0
        %v1863 = vadd.f32 0.0, %v1862
        %v1864 = vpop.f32.mrf.mxu0
        %1865 = vmatprep.mubr.f32.mxu0 0.0
        %1866 = vmatmul.mubr.f32.gmra.mxu0 %v1697
        %v1867 = vpop.f32.mrf.mxu0
        %v1868 = vadd.f32 0.0, %v1867
        %v1869 = vpop.f32.mrf.mxu0
        %1870 = vmatprep.mubr.f32.mxu0 0.0
        %1871 = vmatmul.mubr.f32.gmra.mxu0 %v1698
        %v1872 = vpop.f32.mrf.mxu0
        %v1873 = vadd.f32 0.0, %v1872
        %v1874 = vpop.f32.mrf.mxu0
        %1875 = vmatprep.mubr.f32.mxu0 0.0
        %1876 = vmatmul.mubr.f32.gmra.mxu0 %v1699
        %v1877 = vpop.f32.mrf.mxu0
        %v1878 = vadd.f32 0.0, %v1877
        %v1879 = vpop.f32.mrf.mxu0
        %1880 = vdwg.mxu0
        %1881 = vst [vmem:[%s444] sm:$0xff] %v1783
        %1882 = vst [vmem:[%s444 + $0x8] sm:$0xff] %v1788
        %1883 = vst [vmem:[%s444 + $0x10] sm:$0xff] %v1793
        %1884 = vst [vmem:[%s444 + $0x18] sm:$0xff] %v1798
        %1885 = vst [vmem:[%s444 + $0x20] sm:$0xff] %v1803
        %1886 = vst [vmem:[%s444 + $0x28] sm:$0xff] %v1808
        %1887 = vst [vmem:[%s444 + $0x30] sm:$0xff] %v1813
        %1888 = vst [vmem:[%s444 + $0x38] sm:$0xff] %v1818
        %1889 = vst [vmem:[%s444 + $0x40] sm:$0xff] %v1823
        %1890 = vst [vmem:[%s444 + $0x48] sm:$0xff] %v1828
        %1891 = vst [vmem:[%s444 + $0x50] sm:$0xff] %v1833
        %1892 = vst [vmem:[%s444 + $0x58] sm:$0xff] %v1838
        %1893 = vst [vmem:[%s444 + $0x60] sm:$0xff] %v1843
        %1894 = vst [vmem:[%s444 + $0x68] sm:$0xff] %v1848
        %1895 = vst [vmem:[%s444 + $0x70] sm:$0xff] %v1853
        %1896 = vst [vmem:[%s444 + $0x78] sm:$0xff] %v1858
        %1897 = vst [vmem:[%s444 + $0x80] sm:$0xff] %v1863
        %1898 = vst [vmem:[%s444 + $0x88] sm:$0xff] %v1868
        %1899 = vst [vmem:[%s444 + $0x90] sm:$0xff] %v1873
        %1900 = vst [vmem:[%s444 + $0x98] sm:$0xff] %v1878
        %v1901 = vld [vmem:[#allocation3 + $0x8] sm:$0xff]
        %v1902 = vld [vmem:[#allocation3 + $0x10] sm:$0xff]
        %v1903 = vld [vmem:[#allocation3 + $0x18] sm:$0xff]
        %v1904 = vld [vmem:[#allocation3 + $0x20] sm:$0xff]
        %v1905 = vld [vmem:[#allocation3 + $0x28] sm:$0xff]
        %v1906 = vld [vmem:[#allocation3 + $0x30] sm:$0xff]
        %v1907 = vld [vmem:[#allocation3 + $0x38] sm:$0xff]
        %v1908 = vld [vmem:[#allocation3 + $0x40] sm:$0xff]
        %v1909 = vld [vmem:[#allocation3 + $0x48] sm:$0xff]
        %v1910 = vld [vmem:[#allocation3 + $0x50] sm:$0xff]
        %v1911 = vld [vmem:[#allocation3 + $0x58] sm:$0xff]
        %v1912 = vld [vmem:[#allocation3 + $0x60] sm:$0xff]
        %v1913 = vld [vmem:[#allocation3 + $0x68] sm:$0xff]
        %v1914 = vld [vmem:[#allocation3 + $0x70] sm:$0xff]
        %v1915 = vld [vmem:[#allocation3 + $0x78] sm:$0xff]
        %v1916 = vld [vmem:[#allocation3 + $0x80] sm:$0xff]
        %v1917 = vld [vmem:[#allocation3 + $0x88] sm:$0xff]
        %v1918 = vld [vmem:[#allocation3 + $0x90] sm:$0xff]
        %v1919 = vld [vmem:[#allocation3 + $0x98] sm:$0xff]
        %v1920 = vld [vmem:[#allocation3 + $0xa0] sm:$0xff]
        %s1921 = scalar_lea.vmem %s4, 128
        %v1922 = vld [vmem:[%s1921] sm:$0xff]
        %v1923 = vld [vmem:[%s1921 + $0x8] sm:$0xff]
        %v1924 = vld [vmem:[%s1921 + $0x10] sm:$0xff]
        %v1925 = vld [vmem:[%s1921 + $0x18] sm:$0xff]
        %v1926 = vld [vmem:[%s1921 + $0x20] sm:$0xff]
        %v1927 = vld [vmem:[%s1921 + $0x28] sm:$0xff]
        %v1928 = vld [vmem:[%s1921 + $0x30] sm:$0xff]
        %v1929 = vld [vmem:[%s1921 + $0x38] sm:$0xff]
        %v1930 = vld [vmem:[%s1921 + $0x40] sm:$0xff]
        %v1931 = vld [vmem:[%s1921 + $0x48] sm:$0xff]
        %v1932 = vld [vmem:[%s1921 + $0x50] sm:$0xff]
        %v1933 = vld [vmem:[%s1921 + $0x58] sm:$0xff]
        %v1934 = vld [vmem:[%s1921 + $0x60] sm:$0xff]
        %v1935 = vld [vmem:[%s1921 + $0x68] sm:$0xff]
        %v1936 = vld [vmem:[%s1921 + $0x70] sm:$0xff]
        %v1937 = vld [vmem:[%s1921 + $0x78] sm:$0xff]
        %1938 = vmatprep.subr.mxu0 0.0
        %1939 = vmatpush1.msra.mxu0 %v1937
        %1940 = vmatprep.subr.mxu0 0.0
        %1941 = vmatpush1.msra.mxu0 %v1936
        %1942 = vmatprep.subr.mxu0 0.0
        %1943 = vmatpush1.msra.mxu0 %v1935
        %1944 = vmatprep.subr.mxu0 0.0
        %1945 = vmatpush1.msra.mxu0 %v1934
        %1946 = vmatprep.subr.mxu0 0.0
        %1947 = vmatpush1.msra.mxu0 %v1933
        %1948 = vmatprep.subr.mxu0 0.0
        %1949 = vmatpush1.msra.mxu0 %v1932
        %1950 = vmatprep.subr.mxu0 0.0
        %1951 = vmatpush1.msra.mxu0 %v1931
        %1952 = vmatprep.subr.mxu0 0.0
        %1953 = vmatpush1.msra.mxu0 %v1930
        %1954 = vmatprep.subr.mxu0 0.0
        %1955 = vmatpush1.msra.mxu0 %v1929
        %1956 = vmatprep.subr.mxu0 0.0
        %1957 = vmatpush1.msra.mxu0 %v1928
        %1958 = vmatprep.subr.mxu0 0.0
        %1959 = vmatpush1.msra.mxu0 %v1927
        %1960 = vmatprep.subr.mxu0 0.0
        %1961 = vmatpush1.msra.mxu0 %v1926
        %1962 = vmatprep.subr.mxu0 0.0
        %1963 = vmatpush1.msra.mxu0 %v1925
        %1964 = vmatprep.subr.mxu0 0.0
        %1965 = vmatpush1.msra.mxu0 %v1924
        %1966 = vmatprep.subr.mxu0 0.0
        %1967 = vmatpush1.msra.mxu0 %v1923
        %1968 = vmatprep.subr.mxu0 0.0
        %1969 = vmatpush1.msra.mxu0 %v1922
        %1970 = vmatprep.subr.mxu0 0.0
        %1971 = vmatpush2.msra.mxu0 0.0
        %1972 = vmatprep.subr.mxu0 0.0
        %1973 = vmatpush2.msra.mxu0 0.0
        %1974 = vmatprep.subr.mxu0 0.0
        %1975 = vmatpush2.msra.mxu0 0.0
        %1976 = vmatprep.subr.mxu0 0.0
        %1977 = vmatpush2.msra.mxu0 0.0
        %1978 = vmatprep.subr.mxu0 0.0
        %1979 = vmatpush2.msra.mxu0 0.0
        %1980 = vmatprep.subr.mxu0 0.0
        %1981 = vmatpush2.msra.mxu0 0.0
        %1982 = vmatprep.subr.mxu0 0.0
        %1983 = vmatpush2.msra.mxu0 0.0
        %1984 = vmatprep.subr.mxu0 0.0
        %1985 = vmatpush2.msra.mxu0 0.0
        %1986 = vmatprep.subr.mxu0 0.0
        %1987 = vmatpush2.msra.mxu0 0.0
        %1988 = vmatprep.subr.mxu0 0.0
        %1989 = vmatpush2.msra.mxu0 0.0
        %1990 = vmatprep.subr.mxu0 0.0
        %1991 = vmatpush2.msra.mxu0 0.0
        %1992 = vmatprep.subr.mxu0 0.0
        %1993 = vmatpush2.msra.mxu0 0.0
        %1994 = vmatprep.subr.mxu0 0.0
        %1995 = vmatpush2.msra.mxu0 0.0
        %1996 = vmatprep.subr.mxu0 0.0
        %1997 = vmatpush2.msra.mxu0 0.0
        %1998 = vmatprep.subr.mxu0 0.0
        %1999 = vmatpush2.msra.mxu0 0.0
        %2000 = vmatprep.subr.mxu0 0.0
        %2001 = vmatpush2.msra.mxu0 0.0
        %2002 = vmatprep.mubr.f32.mxu0 0.0
        %2003 = vmatmul.mubr.f32.gmra.mxu0 %v1901
        %v2004 = vpop.f32.mrf.mxu0
        %v2005 = vadd.f32 0.0, %v2004
        %v2006 = vpop.f32.mrf.mxu0
        %2007 = vmatprep.mubr.f32.mxu0 0.0
        %2008 = vmatmul.mubr.f32.gmra.mxu0 %v1902
        %v2009 = vpop.f32.mrf.mxu0
        %v2010 = vadd.f32 0.0, %v2009
        %v2011 = vpop.f32.mrf.mxu0
        %2012 = vmatprep.mubr.f32.mxu0 0.0
        %2013 = vmatmul.mubr.f32.gmra.mxu0 %v1903
        %v2014 = vpop.f32.mrf.mxu0
        %v2015 = vadd.f32 0.0, %v2014
        %v2016 = vpop.f32.mrf.mxu0
        %2017 = vmatprep.mubr.f32.mxu0 0.0
        %2018 = vmatmul.mubr.f32.gmra.mxu0 %v1904
        %v2019 = vpop.f32.mrf.mxu0
        %v2020 = vadd.f32 0.0, %v2019
        %v2021 = vpop.f32.mrf.mxu0
        %2022 = vmatprep.mubr.f32.mxu0 0.0
        %2023 = vmatmul.mubr.f32.gmra.mxu0 %v1905
        %v2024 = vpop.f32.mrf.mxu0
        %v2025 = vadd.f32 0.0, %v2024
        %v2026 = vpop.f32.mrf.mxu0
        %2027 = vmatprep.mubr.f32.mxu0 0.0
        %2028 = vmatmul.mubr.f32.gmra.mxu0 %v1906
        %v2029 = vpop.f32.mrf.mxu0
        %v2030 = vadd.f32 0.0, %v2029
        %v2031 = vpop.f32.mrf.mxu0
        %2032 = vmatprep.mubr.f32.mxu0 0.0
        %2033 = vmatmul.mubr.f32.gmra.mxu0 %v1907
        %v2034 = vpop.f32.mrf.mxu0
        %v2035 = vadd.f32 0.0, %v2034
        %v2036 = vpop.f32.mrf.mxu0
        %2037 = vmatprep.mubr.f32.mxu0 0.0
        %2038 = vmatmul.mubr.f32.gmra.mxu0 %v1908
        %v2039 = vpop.f32.mrf.mxu0
        %v2040 = vadd.f32 0.0, %v2039
        %v2041 = vpop.f32.mrf.mxu0
        %2042 = vmatprep.mubr.f32.mxu0 0.0
        %2043 = vmatmul.mubr.f32.gmra.mxu0 %v1909
        %v2044 = vpop.f32.mrf.mxu0
        %v2045 = vadd.f32 0.0, %v2044
        %v2046 = vpop.f32.mrf.mxu0
        %2047 = vmatprep.mubr.f32.mxu0 0.0
        %2048 = vmatmul.mubr.f32.gmra.mxu0 %v1910
        %v2049 = vpop.f32.mrf.mxu0
        %v2050 = vadd.f32 0.0, %v2049
        %v2051 = vpop.f32.mrf.mxu0
        %2052 = vmatprep.mubr.f32.mxu0 0.0
        %2053 = vmatmul.mubr.f32.gmra.mxu0 %v1911
        %v2054 = vpop.f32.mrf.mxu0
        %v2055 = vadd.f32 0.0, %v2054
        %v2056 = vpop.f32.mrf.mxu0
        %2057 = vmatprep.mubr.f32.mxu0 0.0
        %2058 = vmatmul.mubr.f32.gmra.mxu0 %v1912
        %v2059 = vpop.f32.mrf.mxu0
        %v2060 = vadd.f32 0.0, %v2059
        %v2061 = vpop.f32.mrf.mxu0
        %2062 = vmatprep.mubr.f32.mxu0 0.0
        %2063 = vmatmul.mubr.f32.gmra.mxu0 %v1913
        %v2064 = vpop.f32.mrf.mxu0
        %v2065 = vadd.f32 0.0, %v2064
        %v2066 = vpop.f32.mrf.mxu0
        %2067 = vmatprep.mubr.f32.mxu0 0.0
        %2068 = vmatmul.mubr.f32.gmra.mxu0 %v1914
        %v2069 = vpop.f32.mrf.mxu0
        %v2070 = vadd.f32 0.0, %v2069
        %v2071 = vpop.f32.mrf.mxu0
        %2072 = vmatprep.mubr.f32.mxu0 0.0
        %2073 = vmatmul.mubr.f32.gmra.mxu0 %v1915
        %v2074 = vpop.f32.mrf.mxu0
        %v2075 = vadd.f32 0.0, %v2074
        %v2076 = vpop.f32.mrf.mxu0
        %2077 = vmatprep.mubr.f32.mxu0 0.0
        %2078 = vmatmul.mubr.f32.gmra.mxu0 %v1916
        %v2079 = vpop.f32.mrf.mxu0
        %v2080 = vadd.f32 0.0, %v2079
        %v2081 = vpop.f32.mrf.mxu0
        %2082 = vmatprep.mubr.f32.mxu0 0.0
        %2083 = vmatmul.mubr.f32.gmra.mxu0 %v1917
        %v2084 = vpop.f32.mrf.mxu0
        %v2085 = vadd.f32 0.0, %v2084
        %v2086 = vpop.f32.mrf.mxu0
        %2087 = vmatprep.mubr.f32.mxu0 0.0
        %2088 = vmatmul.mubr.f32.gmra.mxu0 %v1918
        %v2089 = vpop.f32.mrf.mxu0
        %v2090 = vadd.f32 0.0, %v2089
        %v2091 = vpop.f32.mrf.mxu0
        %2092 = vmatprep.mubr.f32.mxu0 0.0
        %2093 = vmatmul.mubr.f32.gmra.mxu0 %v1919
        %v2094 = vpop.f32.mrf.mxu0
        %v2095 = vadd.f32 0.0, %v2094
        %v2096 = vpop.f32.mrf.mxu0
        %2097 = vmatprep.mubr.f32.mxu0 0.0
        %2098 = vmatmul.mubr.f32.gmra.mxu0 %v1920
        %v2099 = vpop.f32.mrf.mxu0
        %v2100 = vadd.f32 0.0, %v2099
        %v2101 = vpop.f32.mrf.mxu0
        %2102 = vdwg.mxu0
        %v2103 = vld [vmem:[%s444] sm:$0xff]
        %v2104 = vld [vmem:[%s444 + $0x8] sm:$0xff]
        %v2105 = vld [vmem:[%s444 + $0x10] sm:$0xff]
        %v2106 = vld [vmem:[%s444 + $0x18] sm:$0xff]
        %v2107 = vld [vmem:[%s444 + $0x20] sm:$0xff]
        %v2108 = vld [vmem:[%s444 + $0x28] sm:$0xff]
        %v2109 = vld [vmem:[%s444 + $0x30] sm:$0xff]
        %v2110 = vld [vmem:[%s444 + $0x38] sm:$0xff]
        %v2111 = vld [vmem:[%s444 + $0x40] sm:$0xff]
        %v2112 = vld [vmem:[%s444 + $0x48] sm:$0xff]
        %v2113 = vld [vmem:[%s444 + $0x50] sm:$0xff]
        %v2114 = vld [vmem:[%s444 + $0x58] sm:$0xff]
        %v2115 = vld [vmem:[%s444 + $0x60] sm:$0xff]
        %v2116 = vld [vmem:[%s444 + $0x68] sm:$0xff]
        %v2117 = vld [vmem:[%s444 + $0x70] sm:$0xff]
        %v2118 = vld [vmem:[%s444 + $0x78] sm:$0xff]
        %v2119 = vld [vmem:[%s444 + $0x80] sm:$0xff]
        %v2120 = vld [vmem:[%s444 + $0x88] sm:$0xff]
        %v2121 = vld [vmem:[%s444 + $0x90] sm:$0xff]
        %v2122 = vld [vmem:[%s444 + $0x98] sm:$0xff]
        %v2123 = vadd.f32 %v2103, %v2005
        %v2124 = vadd.f32 %v2104, %v2010
        %v2125 = vadd.f32 %v2105, %v2015
        %v2126 = vadd.f32 %v2106, %v2020
        %v2127 = vadd.f32 %v2107, %v2025
        %v2128 = vadd.f32 %v2108, %v2030
        %v2129 = vadd.f32 %v2109, %v2035
        %v2130 = vadd.f32 %v2110, %v2040
        %v2131 = vadd.f32 %v2111, %v2045
        %v2132 = vadd.f32 %v2112, %v2050
        %v2133 = vadd.f32 %v2113, %v2055
        %v2134 = vadd.f32 %v2114, %v2060
        %v2135 = vadd.f32 %v2115, %v2065
        %v2136 = vadd.f32 %v2116, %v2070
        %v2137 = vadd.f32 %v2117, %v2075
        %v2138 = vadd.f32 %v2118, %v2080
        %v2139 = vadd.f32 %v2119, %v2085
        %v2140 = vadd.f32 %v2120, %v2090
        %v2141 = vadd.f32 %v2121, %v2095
        %v2142 = vadd.f32 %v2122, %v2100
        %2143 = vst [vmem:[%s444] sm:$0xff] %v2123
        %2144 = vst [vmem:[%s444 + $0x8] sm:$0xff] %v2124
        %2145 = vst [vmem:[%s444 + $0x10] sm:$0xff] %v2125
        %2146 = vst [vmem:[%s444 + $0x18] sm:$0xff] %v2126
        %2147 = vst [vmem:[%s444 + $0x20] sm:$0xff] %v2127
        %2148 = vst [vmem:[%s444 + $0x28] sm:$0xff] %v2128
        %2149 = vst [vmem:[%s444 + $0x30] sm:$0xff] %v2129
        %2150 = vst [vmem:[%s444 + $0x38] sm:$0xff] %v2130
        %2151 = vst [vmem:[%s444 + $0x40] sm:$0xff] %v2131
        %2152 = vst [vmem:[%s444 + $0x48] sm:$0xff] %v2132
        %2153 = vst [vmem:[%s444 + $0x50] sm:$0xff] %v2133
        %2154 = vst [vmem:[%s444 + $0x58] sm:$0xff] %v2134
        %2155 = vst [vmem:[%s444 + $0x60] sm:$0xff] %v2135
        %2156 = vst [vmem:[%s444 + $0x68] sm:$0xff] %v2136
        %2157 = vst [vmem:[%s444 + $0x70] sm:$0xff] %v2137
        %2158 = vst [vmem:[%s444 + $0x78] sm:$0xff] %v2138
        %2159 = vst [vmem:[%s444 + $0x80] sm:$0xff] %v2139
        %2160 = vst [vmem:[%s444 + $0x88] sm:$0xff] %v2140
        %2161 = vst [vmem:[%s444 + $0x90] sm:$0xff] %v2141
        %2162 = vst [vmem:[%s444 + $0x98] sm:$0xff] %v2142
        %v2163 = vld [vmem:[#allocation3 + $0x9] sm:$0xff]
        %v2164 = vld [vmem:[#allocation3 + $0x11] sm:$0xff]
        %v2165 = vld [vmem:[#allocation3 + $0x19] sm:$0xff]
        %v2166 = vld [vmem:[#allocation3 + $0x21] sm:$0xff]
        %v2167 = vld [vmem:[#allocation3 + $0x29] sm:$0xff]
        %v2168 = vld [vmem:[#allocation3 + $0x31] sm:$0xff]
        %v2169 = vld [vmem:[#allocation3 + $0x39] sm:$0xff]
        %v2170 = vld [vmem:[#allocation3 + $0x41] sm:$0xff]
        %v2171 = vld [vmem:[#allocation3 + $0x49] sm:$0xff]
        %v2172 = vld [vmem:[#allocation3 + $0x51] sm:$0xff]
        %v2173 = vld [vmem:[#allocation3 + $0x59] sm:$0xff]
        %v2174 = vld [vmem:[#allocation3 + $0x61] sm:$0xff]
        %v2175 = vld [vmem:[#allocation3 + $0x69] sm:$0xff]
        %v2176 = vld [vmem:[#allocation3 + $0x71] sm:$0xff]
        %v2177 = vld [vmem:[#allocation3 + $0x79] sm:$0xff]
        %v2178 = vld [vmem:[#allocation3 + $0x81] sm:$0xff]
        %v2179 = vld [vmem:[#allocation3 + $0x89] sm:$0xff]
        %v2180 = vld [vmem:[#allocation3 + $0x91] sm:$0xff]
        %v2181 = vld [vmem:[#allocation3 + $0x99] sm:$0xff]
        %v2182 = vld [vmem:[#allocation3 + $0xa1] sm:$0xff]
        %s2183 = scalar_lea.vmem %s4, 256
        %v2184 = vld [vmem:[%s2183] sm:$0xff]
        %v2185 = vld [vmem:[%s2183 + $0x8] sm:$0xff]
        %v2186 = vld [vmem:[%s2183 + $0x10] sm:$0xff]
        %v2187 = vld [vmem:[%s2183 + $0x18] sm:$0xff]
        %v2188 = vld [vmem:[%s2183 + $0x20] sm:$0xff]
        %v2189 = vld [vmem:[%s2183 + $0x28] sm:$0xff]
        %v2190 = vld [vmem:[%s2183 + $0x30] sm:$0xff]
        %v2191 = vld [vmem:[%s2183 + $0x38] sm:$0xff]
        %v2192 = vld [vmem:[%s2183 + $0x40] sm:$0xff]
        %v2193 = vld [vmem:[%s2183 + $0x48] sm:$0xff]
        %v2194 = vld [vmem:[%s2183 + $0x50] sm:$0xff]
        %v2195 = vld [vmem:[%s2183 + $0x58] sm:$0xff]
        %v2196 = vld [vmem:[%s2183 + $0x60] sm:$0xff]
        %v2197 = vld [vmem:[%s2183 + $0x68] sm:$0xff]
        %v2198 = vld [vmem:[%s2183 + $0x70] sm:$0xff]
        %v2199 = vld [vmem:[%s2183 + $0x78] sm:$0xff]
        %2200 = vmatprep.subr.mxu0 0.0
        %2201 = vmatpush1.msra.mxu0 %v2199
        %2202 = vmatprep.subr.mxu0 0.0
        %2203 = vmatpush1.msra.mxu0 %v2198
        %2204 = vmatprep.subr.mxu0 0.0
        %2205 = vmatpush1.msra.mxu0 %v2197
        %2206 = vmatprep.subr.mxu0 0.0
        %2207 = vmatpush1.msra.mxu0 %v2196
        %2208 = vmatprep.subr.mxu0 0.0
        %2209 = vmatpush1.msra.mxu0 %v2195
        %2210 = vmatprep.subr.mxu0 0.0
        %2211 = vmatpush1.msra.mxu0 %v2194
        %2212 = vmatprep.subr.mxu0 0.0
        %2213 = vmatpush1.msra.mxu0 %v2193
        %2214 = vmatprep.subr.mxu0 0.0
        %2215 = vmatpush1.msra.mxu0 %v2192
        %2216 = vmatprep.subr.mxu0 0.0
        %2217 = vmatpush1.msra.mxu0 %v2191
        %2218 = vmatprep.subr.mxu0 0.0
        %2219 = vmatpush1.msra.mxu0 %v2190
        %2220 = vmatprep.subr.mxu0 0.0
        %2221 = vmatpush1.msra.mxu0 %v2189
        %2222 = vmatprep.subr.mxu0 0.0
        %2223 = vmatpush1.msra.mxu0 %v2188
        %2224 = vmatprep.subr.mxu0 0.0
        %2225 = vmatpush1.msra.mxu0 %v2187
        %2226 = vmatprep.subr.mxu0 0.0
        %2227 = vmatpush1.msra.mxu0 %v2186
        %2228 = vmatprep.subr.mxu0 0.0
        %2229 = vmatpush1.msra.mxu0 %v2185
        %2230 = vmatprep.subr.mxu0 0.0
        %2231 = vmatpush1.msra.mxu0 %v2184
        %2232 = vmatprep.subr.mxu0 0.0
        %2233 = vmatpush2.msra.mxu0 0.0
        %2234 = vmatprep.subr.mxu0 0.0
        %2235 = vmatpush2.msra.mxu0 0.0
        %2236 = vmatprep.subr.mxu0 0.0
        %2237 = vmatpush2.msra.mxu0 0.0
        %2238 = vmatprep.subr.mxu0 0.0
        %2239 = vmatpush2.msra.mxu0 0.0
        %2240 = vmatprep.subr.mxu0 0.0
        %2241 = vmatpush2.msra.mxu0 0.0
        %2242 = vmatprep.subr.mxu0 0.0
        %2243 = vmatpush2.msra.mxu0 0.0
        %2244 = vmatprep.subr.mxu0 0.0
        %2245 = vmatpush2.msra.mxu0 0.0
        %2246 = vmatprep.subr.mxu0 0.0
        %2247 = vmatpush2.msra.mxu0 0.0
        %2248 = vmatprep.subr.mxu0 0.0
        %2249 = vmatpush2.msra.mxu0 0.0
        %2250 = vmatprep.subr.mxu0 0.0
        %2251 = vmatpush2.msra.mxu0 0.0
        %2252 = vmatprep.subr.mxu0 0.0
        %2253 = vmatpush2.msra.mxu0 0.0
        %2254 = vmatprep.subr.mxu0 0.0
        %2255 = vmatpush2.msra.mxu0 0.0
        %2256 = vmatprep.subr.mxu0 0.0
        %2257 = vmatpush2.msra.mxu0 0.0
        %2258 = vmatprep.subr.mxu0 0.0
        %2259 = vmatpush2.msra.mxu0 0.0
        %2260 = vmatprep.subr.mxu0 0.0
        %2261 = vmatpush2.msra.mxu0 0.0
        %2262 = vmatprep.subr.mxu0 0.0
        %2263 = vmatpush2.msra.mxu0 0.0
        %2264 = vmatprep.mubr.f32.mxu0 0.0
        %2265 = vmatmul.mubr.f32.gmra.mxu0 %v2163
        %v2266 = vpop.f32.mrf.mxu0
        %v2267 = vadd.f32 0.0, %v2266
        %v2268 = vpop.f32.mrf.mxu0
        %2269 = vmatprep.mubr.f32.mxu0 0.0
        %2270 = vmatmul.mubr.f32.gmra.mxu0 %v2164
        %v2271 = vpop.f32.mrf.mxu0
        %v2272 = vadd.f32 0.0, %v2271
        %v2273 = vpop.f32.mrf.mxu0
        %2274 = vmatprep.mubr.f32.mxu0 0.0
        %2275 = vmatmul.mubr.f32.gmra.mxu0 %v2165
        %v2276 = vpop.f32.mrf.mxu0
        %v2277 = vadd.f32 0.0, %v2276
        %v2278 = vpop.f32.mrf.mxu0
        %2279 = vmatprep.mubr.f32.mxu0 0.0
        %2280 = vmatmul.mubr.f32.gmra.mxu0 %v2166
        %v2281 = vpop.f32.mrf.mxu0
        %v2282 = vadd.f32 0.0, %v2281
        %v2283 = vpop.f32.mrf.mxu0
        %2284 = vmatprep.mubr.f32.mxu0 0.0
        %2285 = vmatmul.mubr.f32.gmra.mxu0 %v2167
        %v2286 = vpop.f32.mrf.mxu0
        %v2287 = vadd.f32 0.0, %v2286
        %v2288 = vpop.f32.mrf.mxu0
        %2289 = vmatprep.mubr.f32.mxu0 0.0
        %2290 = vmatmul.mubr.f32.gmra.mxu0 %v2168
        %v2291 = vpop.f32.mrf.mxu0
        %v2292 = vadd.f32 0.0, %v2291
        %v2293 = vpop.f32.mrf.mxu0
        %2294 = vmatprep.mubr.f32.mxu0 0.0
        %2295 = vmatmul.mubr.f32.gmra.mxu0 %v2169
        %v2296 = vpop.f32.mrf.mxu0
        %v2297 = vadd.f32 0.0, %v2296
        %v2298 = vpop.f32.mrf.mxu0
        %2299 = vmatprep.mubr.f32.mxu0 0.0
        %2300 = vmatmul.mubr.f32.gmra.mxu0 %v2170
        %v2301 = vpop.f32.mrf.mxu0
        %v2302 = vadd.f32 0.0, %v2301
        %v2303 = vpop.f32.mrf.mxu0
        %2304 = vmatprep.mubr.f32.mxu0 0.0
        %2305 = vmatmul.mubr.f32.gmra.mxu0 %v2171
        %v2306 = vpop.f32.mrf.mxu0
        %v2307 = vadd.f32 0.0, %v2306
        %v2308 = vpop.f32.mrf.mxu0
        %2309 = vmatprep.mubr.f32.mxu0 0.0
        %2310 = vmatmul.mubr.f32.gmra.mxu0 %v2172
        %v2311 = vpop.f32.mrf.mxu0
        %v2312 = vadd.f32 0.0, %v2311
        %v2313 = vpop.f32.mrf.mxu0
        %2314 = vmatprep.mubr.f32.mxu0 0.0
        %2315 = vmatmul.mubr.f32.gmra.mxu0 %v2173
        %v2316 = vpop.f32.mrf.mxu0
        %v2317 = vadd.f32 0.0, %v2316
        %v2318 = vpop.f32.mrf.mxu0
        %2319 = vmatprep.mubr.f32.mxu0 0.0
        %2320 = vmatmul.mubr.f32.gmra.mxu0 %v2174
        %v2321 = vpop.f32.mrf.mxu0
        %v2322 = vadd.f32 0.0, %v2321
        %v2323 = vpop.f32.mrf.mxu0
        %2324 = vmatprep.mubr.f32.mxu0 0.0
        %2325 = vmatmul.mubr.f32.gmra.mxu0 %v2175
        %v2326 = vpop.f32.mrf.mxu0
        %v2327 = vadd.f32 0.0, %v2326
        %v2328 = vpop.f32.mrf.mxu0
        %2329 = vmatprep.mubr.f32.mxu0 0.0
        %2330 = vmatmul.mubr.f32.gmra.mxu0 %v2176
        %v2331 = vpop.f32.mrf.mxu0
        %v2332 = vadd.f32 0.0, %v2331
        %v2333 = vpop.f32.mrf.mxu0
        %2334 = vmatprep.mubr.f32.mxu0 0.0
        %2335 = vmatmul.mubr.f32.gmra.mxu0 %v2177
        %v2336 = vpop.f32.mrf.mxu0
        %v2337 = vadd.f32 0.0, %v2336
        %v2338 = vpop.f32.mrf.mxu0
        %2339 = vmatprep.mubr.f32.mxu0 0.0
        %2340 = vmatmul.mubr.f32.gmra.mxu0 %v2178
        %v2341 = vpop.f32.mrf.mxu0
        %v2342 = vadd.f32 0.0, %v2341
        %v2343 = vpop.f32.mrf.mxu0
        %2344 = vmatprep.mubr.f32.mxu0 0.0
        %2345 = vmatmul.mubr.f32.gmra.mxu0 %v2179
        %v2346 = vpop.f32.mrf.mxu0
        %v2347 = vadd.f32 0.0, %v2346
        %v2348 = vpop.f32.mrf.mxu0
        %2349 = vmatprep.mubr.f32.mxu0 0.0
        %2350 = vmatmul.mubr.f32.gmra.mxu0 %v2180
        %v2351 = vpop.f32.mrf.mxu0
        %v2352 = vadd.f32 0.0, %v2351
        %v2353 = vpop.f32.mrf.mxu0
        %2354 = vmatprep.mubr.f32.mxu0 0.0
        %2355 = vmatmul.mubr.f32.gmra.mxu0 %v2181
        %v2356 = vpop.f32.mrf.mxu0
        %v2357 = vadd.f32 0.0, %v2356
        %v2358 = vpop.f32.mrf.mxu0
        %2359 = vmatprep.mubr.f32.mxu0 0.0
        %2360 = vmatmul.mubr.f32.gmra.mxu0 %v2182
        %v2361 = vpop.f32.mrf.mxu0
        %v2362 = vadd.f32 0.0, %v2361
        %v2363 = vpop.f32.mrf.mxu0
        %2364 = vdwg.mxu0
        %v2365 = vld [vmem:[%s444] sm:$0xff]
        %v2366 = vld [vmem:[%s444 + $0x8] sm:$0xff]
        %v2367 = vld [vmem:[%s444 + $0x10] sm:$0xff]
        %v2368 = vld [vmem:[%s444 + $0x18] sm:$0xff]
        %v2369 = vld [vmem:[%s444 + $0x20] sm:$0xff]
        %v2370 = vld [vmem:[%s444 + $0x28] sm:$0xff]
        %v2371 = vld [vmem:[%s444 + $0x30] sm:$0xff]
        %v2372 = vld [vmem:[%s444 + $0x38] sm:$0xff]
        %v2373 = vld [vmem:[%s444 + $0x40] sm:$0xff]
        %v2374 = vld [vmem:[%s444 + $0x48] sm:$0xff]
        %v2375 = vld [vmem:[%s444 + $0x50] sm:$0xff]
        %v2376 = vld [vmem:[%s444 + $0x58] sm:$0xff]
        %v2377 = vld [vmem:[%s444 + $0x60] sm:$0xff]
        %v2378 = vld [vmem:[%s444 + $0x68] sm:$0xff]
        %v2379 = vld [vmem:[%s444 + $0x70] sm:$0xff]
        %v2380 = vld [vmem:[%s444 + $0x78] sm:$0xff]
        %v2381 = vld [vmem:[%s444 + $0x80] sm:$0xff]
        %v2382 = vld [vmem:[%s444 + $0x88] sm:$0xff]
        %v2383 = vld [vmem:[%s444 + $0x90] sm:$0xff]
        %v2384 = vld [vmem:[%s444 + $0x98] sm:$0xff]
        %v2385 = vadd.f32 %v2365, %v2267
        %v2386 = vadd.f32 %v2366, %v2272
        %v2387 = vadd.f32 %v2367, %v2277
        %v2388 = vadd.f32 %v2368, %v2282
        %v2389 = vadd.f32 %v2369, %v2287
        %v2390 = vadd.f32 %v2370, %v2292
        %v2391 = vadd.f32 %v2371, %v2297
        %v2392 = vadd.f32 %v2372, %v2302
        %v2393 = vadd.f32 %v2373, %v2307
        %v2394 = vadd.f32 %v2374, %v2312
        %v2395 = vadd.f32 %v2375, %v2317
        %v2396 = vadd.f32 %v2376, %v2322
        %v2397 = vadd.f32 %v2377, %v2327
        %v2398 = vadd.f32 %v2378, %v2332
        %v2399 = vadd.f32 %v2379, %v2337
        %v2400 = vadd.f32 %v2380, %v2342
        %v2401 = vadd.f32 %v2381, %v2347
        %v2402 = vadd.f32 %v2382, %v2352
        %v2403 = vadd.f32 %v2383, %v2357
        %v2404 = vadd.f32 %v2384, %v2362
        %2405 = vst [vmem:[%s444] sm:$0xff] %v2385
        %2406 = vst [vmem:[%s444 + $0x8] sm:$0xff] %v2386
        %2407 = vst [vmem:[%s444 + $0x10] sm:$0xff] %v2387
        %2408 = vst [vmem:[%s444 + $0x18] sm:$0xff] %v2388
        %2409 = vst [vmem:[%s444 + $0x20] sm:$0xff] %v2389
        %2410 = vst [vmem:[%s444 + $0x28] sm:$0xff] %v2390
        %2411 = vst [vmem:[%s444 + $0x30] sm:$0xff] %v2391
        %2412 = vst [vmem:[%s444 + $0x38] sm:$0xff] %v2392
        %2413 = vst [vmem:[%s444 + $0x40] sm:$0xff] %v2393
        %2414 = vst [vmem:[%s444 + $0x48] sm:$0xff] %v2394
        %2415 = vst [vmem:[%s444 + $0x50] sm:$0xff] %v2395
        %2416 = vst [vmem:[%s444 + $0x58] sm:$0xff] %v2396
        %2417 = vst [vmem:[%s444 + $0x60] sm:$0xff] %v2397
        %2418 = vst [vmem:[%s444 + $0x68] sm:$0xff] %v2398
        %2419 = vst [vmem:[%s444 + $0x70] sm:$0xff] %v2399
        %2420 = vst [vmem:[%s444 + $0x78] sm:$0xff] %v2400
        %2421 = vst [vmem:[%s444 + $0x80] sm:$0xff] %v2401
        %2422 = vst [vmem:[%s444 + $0x88] sm:$0xff] %v2402
        %2423 = vst [vmem:[%s444 + $0x90] sm:$0xff] %v2403
        %2424 = vst [vmem:[%s444 + $0x98] sm:$0xff] %v2404
        %v2425 = vld [vmem:[#allocation3 + $0x17] sm:$0xff]
        %v2426 = vld [vmem:[#allocation3 + $0x1f] sm:$0xff]
        %v2427 = vld [vmem:[#allocation3 + $0x27] sm:$0xff]
        %v2428 = vld [vmem:[#allocation3 + $0x2f] sm:$0xff]
        %v2429 = vld [vmem:[#allocation3 + $0x37] sm:$0xff]
        %v2430 = vld [vmem:[#allocation3 + $0x3f] sm:$0xff]
        %v2431 = vld [vmem:[#allocation3 + $0x47] sm:$0xff]
        %v2432 = vld [vmem:[#allocation3 + $0x4f] sm:$0xff]
        %v2433 = vld [vmem:[#allocation3 + $0x57] sm:$0xff]
        %v2434 = vld [vmem:[#allocation3 + $0x5f] sm:$0xff]
        %v2435 = vld [vmem:[#allocation3 + $0x67] sm:$0xff]
        %v2436 = vld [vmem:[#allocation3 + $0x6f] sm:$0xff]
        %v2437 = vld [vmem:[#allocation3 + $0x77] sm:$0xff]
        %v2438 = vld [vmem:[#allocation3 + $0x7f] sm:$0xff]
        %v2439 = vld [vmem:[#allocation3 + $0x87] sm:$0xff]
        %v2440 = vld [vmem:[#allocation3 + $0x8f] sm:$0xff]
        %v2441 = vld [vmem:[#allocation3 + $0x97] sm:$0xff]
        %v2442 = vld [vmem:[#allocation3 + $0x9f] sm:$0xff]
        %v2443 = vld [vmem:[#allocation3 + $0xa7] sm:$0xff]
        %v2444 = vld [vmem:[#allocation3 + $0xaf] sm:$0xff]
        %s2445 = scalar_lea.vmem %s4, 384
        %v2446 = vld [vmem:[%s2445] sm:$0xff]
        %v2447 = vld [vmem:[%s2445 + $0x8] sm:$0xff]
        %v2448 = vld [vmem:[%s2445 + $0x10] sm:$0xff]
        %v2449 = vld [vmem:[%s2445 + $0x18] sm:$0xff]
        %v2450 = vld [vmem:[%s2445 + $0x20] sm:$0xff]
        %v2451 = vld [vmem:[%s2445 + $0x28] sm:$0xff]
        %v2452 = vld [vmem:[%s2445 + $0x30] sm:$0xff]
        %v2453 = vld [vmem:[%s2445 + $0x38] sm:$0xff]
        %v2454 = vld [vmem:[%s2445 + $0x40] sm:$0xff]
        %v2455 = vld [vmem:[%s2445 + $0x48] sm:$0xff]
        %v2456 = vld [vmem:[%s2445 + $0x50] sm:$0xff]
        %v2457 = vld [vmem:[%s2445 + $0x58] sm:$0xff]
        %v2458 = vld [vmem:[%s2445 + $0x60] sm:$0xff]
        %v2459 = vld [vmem:[%s2445 + $0x68] sm:$0xff]
        %v2460 = vld [vmem:[%s2445 + $0x70] sm:$0xff]
        %v2461 = vld [vmem:[%s2445 + $0x78] sm:$0xff]
        %2462 = vmatprep.subr.mxu0 0.0
        %2463 = vmatpush1.msra.mxu0 %v2461
        %2464 = vmatprep.subr.mxu0 0.0
        %2465 = vmatpush1.msra.mxu0 %v2460
        %2466 = vmatprep.subr.mxu0 0.0
        %2467 = vmatpush1.msra.mxu0 %v2459
        %2468 = vmatprep.subr.mxu0 0.0
        %2469 = vmatpush1.msra.mxu0 %v2458
        %2470 = vmatprep.subr.mxu0 0.0
        %2471 = vmatpush1.msra.mxu0 %v2457
        %2472 = vmatprep.subr.mxu0 0.0
        %2473 = vmatpush1.msra.mxu0 %v2456
        %2474 = vmatprep.subr.mxu0 0.0
        %2475 = vmatpush1.msra.mxu0 %v2455
        %2476 = vmatprep.subr.mxu0 0.0
        %2477 = vmatpush1.msra.mxu0 %v2454
        %2478 = vmatprep.subr.mxu0 0.0
        %2479 = vmatpush1.msra.mxu0 %v2453
        %2480 = vmatprep.subr.mxu0 0.0
        %2481 = vmatpush1.msra.mxu0 %v2452
        %2482 = vmatprep.subr.mxu0 0.0
        %2483 = vmatpush1.msra.mxu0 %v2451
        %2484 = vmatprep.subr.mxu0 0.0
        %2485 = vmatpush1.msra.mxu0 %v2450
        %2486 = vmatprep.subr.mxu0 0.0
        %2487 = vmatpush1.msra.mxu0 %v2449
        %2488 = vmatprep.subr.mxu0 0.0
        %2489 = vmatpush1.msra.mxu0 %v2448
        %2490 = vmatprep.subr.mxu0 0.0
        %2491 = vmatpush1.msra.mxu0 %v2447
        %2492 = vmatprep.subr.mxu0 0.0
        %2493 = vmatpush1.msra.mxu0 %v2446
        %2494 = vmatprep.subr.mxu0 0.0
        %2495 = vmatpush2.msra.mxu0 0.0
        %2496 = vmatprep.subr.mxu0 0.0
        %2497 = vmatpush2.msra.mxu0 0.0
        %2498 = vmatprep.subr.mxu0 0.0
        %2499 = vmatpush2.msra.mxu0 0.0
        %2500 = vmatprep.subr.mxu0 0.0
        %2501 = vmatpush2.msra.mxu0 0.0
        %2502 = vmatprep.subr.mxu0 0.0
        %2503 = vmatpush2.msra.mxu0 0.0
        %2504 = vmatprep.subr.mxu0 0.0
        %2505 = vmatpush2.msra.mxu0 0.0
        %2506 = vmatprep.subr.mxu0 0.0
        %2507 = vmatpush2.msra.mxu0 0.0
        %2508 = vmatprep.subr.mxu0 0.0
        %2509 = vmatpush2.msra.mxu0 0.0
        %2510 = vmatprep.subr.mxu0 0.0
        %2511 = vmatpush2.msra.mxu0 0.0
        %2512 = vmatprep.subr.mxu0 0.0
        %2513 = vmatpush2.msra.mxu0 0.0
        %2514 = vmatprep.subr.mxu0 0.0
        %2515 = vmatpush2.msra.mxu0 0.0
        %2516 = vmatprep.subr.mxu0 0.0
        %2517 = vmatpush2.msra.mxu0 0.0
        %2518 = vmatprep.subr.mxu0 0.0
        %2519 = vmatpush2.msra.mxu0 0.0
        %2520 = vmatprep.subr.mxu0 0.0
        %2521 = vmatpush2.msra.mxu0 0.0
        %2522 = vmatprep.subr.mxu0 0.0
        %2523 = vmatpush2.msra.mxu0 0.0
        %2524 = vmatprep.subr.mxu0 0.0
        %2525 = vmatpush2.msra.mxu0 0.0
        %2526 = vmatprep.mubr.f32.mxu0 0.0
        %2527 = vmatmul.mubr.f32.gmra.mxu0 %v2425
        %v2528 = vpop.f32.mrf.mxu0
        %v2529 = vadd.f32 0.0, %v2528
        %v2530 = vpop.f32.mrf.mxu0
        %2531 = vmatprep.mubr.f32.mxu0 0.0
        %2532 = vmatmul.mubr.f32.gmra.mxu0 %v2426
        %v2533 = vpop.f32.mrf.mxu0
        %v2534 = vadd.f32 0.0, %v2533
        %v2535 = vpop.f32.mrf.mxu0
        %2536 = vmatprep.mubr.f32.mxu0 0.0
        %2537 = vmatmul.mubr.f32.gmra.mxu0 %v2427
        %v2538 = vpop.f32.mrf.mxu0
        %v2539 = vadd.f32 0.0, %v2538
        %v2540 = vpop.f32.mrf.mxu0
        %2541 = vmatprep.mubr.f32.mxu0 0.0
        %2542 = vmatmul.mubr.f32.gmra.mxu0 %v2428
        %v2543 = vpop.f32.mrf.mxu0
        %v2544 = vadd.f32 0.0, %v2543
        %v2545 = vpop.f32.mrf.mxu0
        %2546 = vmatprep.mubr.f32.mxu0 0.0
        %2547 = vmatmul.mubr.f32.gmra.mxu0 %v2429
        %v2548 = vpop.f32.mrf.mxu0
        %v2549 = vadd.f32 0.0, %v2548
        %v2550 = vpop.f32.mrf.mxu0
        %2551 = vmatprep.mubr.f32.mxu0 0.0
        %2552 = vmatmul.mubr.f32.gmra.mxu0 %v2430
        %v2553 = vpop.f32.mrf.mxu0
        %v2554 = vadd.f32 0.0, %v2553
        %v2555 = vpop.f32.mrf.mxu0
        %2556 = vmatprep.mubr.f32.mxu0 0.0
        %2557 = vmatmul.mubr.f32.gmra.mxu0 %v2431
        %v2558 = vpop.f32.mrf.mxu0
        %v2559 = vadd.f32 0.0, %v2558
        %v2560 = vpop.f32.mrf.mxu0
        %2561 = vmatprep.mubr.f32.mxu0 0.0
        %2562 = vmatmul.mubr.f32.gmra.mxu0 %v2432
        %v2563 = vpop.f32.mrf.mxu0
        %v2564 = vadd.f32 0.0, %v2563
        %v2565 = vpop.f32.mrf.mxu0
        %2566 = vmatprep.mubr.f32.mxu0 0.0
        %2567 = vmatmul.mubr.f32.gmra.mxu0 %v2433
        %v2568 = vpop.f32.mrf.mxu0
        %v2569 = vadd.f32 0.0, %v2568
        %v2570 = vpop.f32.mrf.mxu0
        %2571 = vmatprep.mubr.f32.mxu0 0.0
        %2572 = vmatmul.mubr.f32.gmra.mxu0 %v2434
        %v2573 = vpop.f32.mrf.mxu0
        %v2574 = vadd.f32 0.0, %v2573
        %v2575 = vpop.f32.mrf.mxu0
        %2576 = vmatprep.mubr.f32.mxu0 0.0
        %2577 = vmatmul.mubr.f32.gmra.mxu0 %v2435
        %v2578 = vpop.f32.mrf.mxu0
        %v2579 = vadd.f32 0.0, %v2578
        %v2580 = vpop.f32.mrf.mxu0
        %2581 = vmatprep.mubr.f32.mxu0 0.0
        %2582 = vmatmul.mubr.f32.gmra.mxu0 %v2436
        %v2583 = vpop.f32.mrf.mxu0
        %v2584 = vadd.f32 0.0, %v2583
        %v2585 = vpop.f32.mrf.mxu0
        %2586 = vmatprep.mubr.f32.mxu0 0.0
        %2587 = vmatmul.mubr.f32.gmra.mxu0 %v2437
        %v2588 = vpop.f32.mrf.mxu0
        %v2589 = vadd.f32 0.0, %v2588
        %v2590 = vpop.f32.mrf.mxu0
        %2591 = vmatprep.mubr.f32.mxu0 0.0
        %2592 = vmatmul.mubr.f32.gmra.mxu0 %v2438
        %v2593 = vpop.f32.mrf.mxu0
        %v2594 = vadd.f32 0.0, %v2593
        %v2595 = vpop.f32.mrf.mxu0
        %2596 = vmatprep.mubr.f32.mxu0 0.0
        %2597 = vmatmul.mubr.f32.gmra.mxu0 %v2439
        %v2598 = vpop.f32.mrf.mxu0
        %v2599 = vadd.f32 0.0, %v2598
        %v2600 = vpop.f32.mrf.mxu0
        %2601 = vmatprep.mubr.f32.mxu0 0.0
        %2602 = vmatmul.mubr.f32.gmra.mxu0 %v2440
        %v2603 = vpop.f32.mrf.mxu0
        %v2604 = vadd.f32 0.0, %v2603
        %v2605 = vpop.f32.mrf.mxu0
        %2606 = vmatprep.mubr.f32.mxu0 0.0
        %2607 = vmatmul.mubr.f32.gmra.mxu0 %v2441
        %v2608 = vpop.f32.mrf.mxu0
        %v2609 = vadd.f32 0.0, %v2608
        %v2610 = vpop.f32.mrf.mxu0
        %2611 = vmatprep.mubr.f32.mxu0 0.0
        %2612 = vmatmul.mubr.f32.gmra.mxu0 %v2442
        %v2613 = vpop.f32.mrf.mxu0
        %v2614 = vadd.f32 0.0, %v2613
        %v2615 = vpop.f32.mrf.mxu0
        %2616 = vmatprep.mubr.f32.mxu0 0.0
        %2617 = vmatmul.mubr.f32.gmra.mxu0 %v2443
        %v2618 = vpop.f32.mrf.mxu0
        %v2619 = vadd.f32 0.0, %v2618
        %v2620 = vpop.f32.mrf.mxu0
        %2621 = vmatprep.mubr.f32.mxu0 0.0
        %2622 = vmatmul.mubr.f32.gmra.mxu0 %v2444
        %v2623 = vpop.f32.mrf.mxu0
        %v2624 = vadd.f32 0.0, %v2623
        %v2625 = vpop.f32.mrf.mxu0
        %2626 = vdwg.mxu0
        %v2627 = vld [vmem:[%s444] sm:$0xff]
        %v2628 = vld [vmem:[%s444 + $0x8] sm:$0xff]
        %v2629 = vld [vmem:[%s444 + $0x10] sm:$0xff]
        %v2630 = vld [vmem:[%s444 + $0x18] sm:$0xff]
        %v2631 = vld [vmem:[%s444 + $0x20] sm:$0xff]
        %v2632 = vld [vmem:[%s444 + $0x28] sm:$0xff]
        %v2633 = vld [vmem:[%s444 + $0x30] sm:$0xff]
        %v2634 = vld [vmem:[%s444 + $0x38] sm:$0xff]
        %v2635 = vld [vmem:[%s444 + $0x40] sm:$0xff]
        %v2636 = vld [vmem:[%s444 + $0x48] sm:$0xff]
        %v2637 = vld [vmem:[%s444 + $0x50] sm:$0xff]
        %v2638 = vld [vmem:[%s444 + $0x58] sm:$0xff]
        %v2639 = vld [vmem:[%s444 + $0x60] sm:$0xff]
        %v2640 = vld [vmem:[%s444 + $0x68] sm:$0xff]
        %v2641 = vld [vmem:[%s444 + $0x70] sm:$0xff]
        %v2642 = vld [vmem:[%s444 + $0x78] sm:$0xff]
        %v2643 = vld [vmem:[%s444 + $0x80] sm:$0xff]
        %v2644 = vld [vmem:[%s444 + $0x88] sm:$0xff]
        %v2645 = vld [vmem:[%s444 + $0x90] sm:$0xff]
        %v2646 = vld [vmem:[%s444 + $0x98] sm:$0xff]
        %v2647 = vadd.f32 %v2627, %v2529
        %v2648 = vadd.f32 %v2628, %v2534
        %v2649 = vadd.f32 %v2629, %v2539
        %v2650 = vadd.f32 %v2630, %v2544
        %v2651 = vadd.f32 %v2631, %v2549
        %v2652 = vadd.f32 %v2632, %v2554
        %v2653 = vadd.f32 %v2633, %v2559
        %v2654 = vadd.f32 %v2634, %v2564
        %v2655 = vadd.f32 %v2635, %v2569
        %v2656 = vadd.f32 %v2636, %v2574
        %v2657 = vadd.f32 %v2637, %v2579
        %v2658 = vadd.f32 %v2638, %v2584
        %v2659 = vadd.f32 %v2639, %v2589
        %v2660 = vadd.f32 %v2640, %v2594
        %v2661 = vadd.f32 %v2641, %v2599
        %v2662 = vadd.f32 %v2642, %v2604
        %v2663 = vadd.f32 %v2643, %v2609
        %v2664 = vadd.f32 %v2644, %v2614
        %v2665 = vadd.f32 %v2645, %v2619
        %v2666 = vadd.f32 %v2646, %v2624
        %2667 = vst [vmem:[%s444] sm:$0xff] %v2647
        %2668 = vst [vmem:[%s444 + $0x8] sm:$0xff] %v2648
        %2669 = vst [vmem:[%s444 + $0x10] sm:$0xff] %v2649
        %2670 = vst [vmem:[%s444 + $0x18] sm:$0xff] %v2650
        %2671 = vst [vmem:[%s444 + $0x20] sm:$0xff] %v2651
        %2672 = vst [vmem:[%s444 + $0x28] sm:$0xff] %v2652
        %2673 = vst [vmem:[%s444 + $0x30] sm:$0xff] %v2653
        %2674 = vst [vmem:[%s444 + $0x38] sm:$0xff] %v2654
        %2675 = vst [vmem:[%s444 + $0x40] sm:$0xff] %v2655
        %2676 = vst [vmem:[%s444 + $0x48] sm:$0xff] %v2656
        %2677 = vst [vmem:[%s444 + $0x50] sm:$0xff] %v2657
        %2678 = vst [vmem:[%s444 + $0x58] sm:$0xff] %v2658
        %2679 = vst [vmem:[%s444 + $0x60] sm:$0xff] %v2659
        %2680 = vst [vmem:[%s444 + $0x68] sm:$0xff] %v2660
        %2681 = vst [vmem:[%s444 + $0x70] sm:$0xff] %v2661
        %2682 = vst [vmem:[%s444 + $0x78] sm:$0xff] %v2662
        %2683 = vst [vmem:[%s444 + $0x80] sm:$0xff] %v2663
        %2684 = vst [vmem:[%s444 + $0x88] sm:$0xff] %v2664
        %2685 = vst [vmem:[%s444 + $0x90] sm:$0xff] %v2665
        %2686 = vst [vmem:[%s444 + $0x98] sm:$0xff] %v2666
        %v2687 = vld [vmem:[#allocation3 + $0x18] sm:$0xff]
        %v2688 = vld [vmem:[#allocation3 + $0x20] sm:$0xff]
        %v2689 = vld [vmem:[#allocation3 + $0x28] sm:$0xff]
        %v2690 = vld [vmem:[#allocation3 + $0x30] sm:$0xff]
        %v2691 = vld [vmem:[#allocation3 + $0x38] sm:$0xff]
        %v2692 = vld [vmem:[#allocation3 + $0x40] sm:$0xff]
        %v2693 = vld [vmem:[#allocation3 + $0x48] sm:$0xff]
        %v2694 = vld [vmem:[#allocation3 + $0x50] sm:$0xff]
        %v2695 = vld [vmem:[#allocation3 + $0x58] sm:$0xff]
        %v2696 = vld [vmem:[#allocation3 + $0x60] sm:$0xff]
        %v2697 = vld [vmem:[#allocation3 + $0x68] sm:$0xff]
        %v2698 = vld [vmem:[#allocation3 + $0x70] sm:$0xff]
        %v2699 = vld [vmem:[#allocation3 + $0x78] sm:$0xff]
        %v2700 = vld [vmem:[#allocation3 + $0x80] sm:$0xff]
        %v2701 = vld [vmem:[#allocation3 + $0x88] sm:$0xff]
        %v2702 = vld [vmem:[#allocation3 + $0x90] sm:$0xff]
        %v2703 = vld [vmem:[#allocation3 + $0x98] sm:$0xff]
        %v2704 = vld [vmem:[#allocation3 + $0xa0] sm:$0xff]
        %v2705 = vld [vmem:[#allocation3 + $0xa8] sm:$0xff]
        %v2706 = vld [vmem:[#allocation3 + $0xb0] sm:$0xff]
        %s2707 = scalar_lea.vmem %s4, 512
        %v2708 = vld [vmem:[%s2707] sm:$0xff]
        %v2709 = vld [vmem:[%s2707 + $0x8] sm:$0xff]
        %v2710 = vld [vmem:[%s2707 + $0x10] sm:$0xff]
        %v2711 = vld [vmem:[%s2707 + $0x18] sm:$0xff]
        %v2712 = vld [vmem:[%s2707 + $0x20] sm:$0xff]
        %v2713 = vld [vmem:[%s2707 + $0x28] sm:$0xff]
        %v2714 = vld [vmem:[%s2707 + $0x30] sm:$0xff]
        %v2715 = vld [vmem:[%s2707 + $0x38] sm:$0xff]
        %v2716 = vld [vmem:[%s2707 + $0x40] sm:$0xff]
        %v2717 = vld [vmem:[%s2707 + $0x48] sm:$0xff]
        %v2718 = vld [vmem:[%s2707 + $0x50] sm:$0xff]
        %v2719 = vld [vmem:[%s2707 + $0x58] sm:$0xff]
        %v2720 = vld [vmem:[%s2707 + $0x60] sm:$0xff]
        %v2721 = vld [vmem:[%s2707 + $0x68] sm:$0xff]
        %v2722 = vld [vmem:[%s2707 + $0x70] sm:$0xff]
        %v2723 = vld [vmem:[%s2707 + $0x78] sm:$0xff]
        %2724 = vmatprep.subr.mxu0 0.0
        %2725 = vmatpush1.msra.mxu0 %v2723
        %2726 = vmatprep.subr.mxu0 0.0
        %2727 = vmatpush1.msra.mxu0 %v2722
        %2728 = vmatprep.subr.mxu0 0.0
        %2729 = vmatpush1.msra.mxu0 %v2721
        %2730 = vmatprep.subr.mxu0 0.0
        %2731 = vmatpush1.msra.mxu0 %v2720
        %2732 = vmatprep.subr.mxu0 0.0
        %2733 = vmatpush1.msra.mxu0 %v2719
        %2734 = vmatprep.subr.mxu0 0.0
        %2735 = vmatpush1.msra.mxu0 %v2718
        %2736 = vmatprep.subr.mxu0 0.0
        %2737 = vmatpush1.msra.mxu0 %v2717
        %2738 = vmatprep.subr.mxu0 0.0
        %2739 = vmatpush1.msra.mxu0 %v2716
        %2740 = vmatprep.subr.mxu0 0.0
        %2741 = vmatpush1.msra.mxu0 %v2715
        %2742 = vmatprep.subr.mxu0 0.0
        %2743 = vmatpush1.msra.mxu0 %v2714
        %2744 = vmatprep.subr.mxu0 0.0
        %2745 = vmatpush1.msra.mxu0 %v2713
        %2746 = vmatprep.subr.mxu0 0.0
        %2747 = vmatpush1.msra.mxu0 %v2712
        %2748 = vmatprep.subr.mxu0 0.0
        %2749 = vmatpush1.msra.mxu0 %v2711
        %2750 = vmatprep.subr.mxu0 0.0
        %2751 = vmatpush1.msra.mxu0 %v2710
        %2752 = vmatprep.subr.mxu0 0.0
        %2753 = vmatpush1.msra.mxu0 %v2709
        %2754 = vmatprep.subr.mxu0 0.0
        %2755 = vmatpush1.msra.mxu0 %v2708
        %2756 = vmatprep.subr.mxu0 0.0
        %2757 = vmatpush2.msra.mxu0 0.0
        %2758 = vmatprep.subr.mxu0 0.0
        %2759 = vmatpush2.msra.mxu0 0.0
        %2760 = vmatprep.subr.mxu0 0.0
        %2761 = vmatpush2.msra.mxu0 0.0
        %2762 = vmatprep.subr.mxu0 0.0
        %2763 = vmatpush2.msra.mxu0 0.0
        %2764 = vmatprep.subr.mxu0 0.0
        %2765 = vmatpush2.msra.mxu0 0.0
        %2766 = vmatprep.subr.mxu0 0.0
        %2767 = vmatpush2.msra.mxu0 0.0
        %2768 = vmatprep.subr.mxu0 0.0
        %2769 = vmatpush2.msra.mxu0 0.0
        %2770 = vmatprep.subr.mxu0 0.0
        %2771 = vmatpush2.msra.mxu0 0.0
        %2772 = vmatprep.subr.mxu0 0.0
        %2773 = vmatpush2.msra.mxu0 0.0
        %2774 = vmatprep.subr.mxu0 0.0
        %2775 = vmatpush2.msra.mxu0 0.0
        %2776 = vmatprep.subr.mxu0 0.0
        %2777 = vmatpush2.msra.mxu0 0.0
        %2778 = vmatprep.subr.mxu0 0.0
        %2779 = vmatpush2.msra.mxu0 0.0
        %2780 = vmatprep.subr.mxu0 0.0
        %2781 = vmatpush2.msra.mxu0 0.0
        %2782 = vmatprep.subr.mxu0 0.0
        %2783 = vmatpush2.msra.mxu0 0.0
        %2784 = vmatprep.subr.mxu0 0.0
        %2785 = vmatpush2.msra.mxu0 0.0
        %2786 = vmatprep.subr.mxu0 0.0
        %2787 = vmatpush2.msra.mxu0 0.0
        %2788 = vmatprep.mubr.f32.mxu0 0.0
        %2789 = vmatmul.mubr.f32.gmra.mxu0 %v2687
        %v2790 = vpop.f32.mrf.mxu0
        %v2791 = vadd.f32 0.0, %v2790
        %v2792 = vpop.f32.mrf.mxu0
        %2793 = vmatprep.mubr.f32.mxu0 0.0
        %2794 = vmatmul.mubr.f32.gmra.mxu0 %v2688
        %v2795 = vpop.f32.mrf.mxu0
        %v2796 = vadd.f32 0.0, %v2795
        %v2797 = vpop.f32.mrf.mxu0
        %2798 = vmatprep.mubr.f32.mxu0 0.0
        %2799 = vmatmul.mubr.f32.gmra.mxu0 %v2689
        %v2800 = vpop.f32.mrf.mxu0
        %v2801 = vadd.f32 0.0, %v2800
        %v2802 = vpop.f32.mrf.mxu0
        %2803 = vmatprep.mubr.f32.mxu0 0.0
        %2804 = vmatmul.mubr.f32.gmra.mxu0 %v2690
        %v2805 = vpop.f32.mrf.mxu0
        %v2806 = vadd.f32 0.0, %v2805
        %v2807 = vpop.f32.mrf.mxu0
        %2808 = vmatprep.mubr.f32.mxu0 0.0
        %2809 = vmatmul.mubr.f32.gmra.mxu0 %v2691
        %v2810 = vpop.f32.mrf.mxu0
        %v2811 = vadd.f32 0.0, %v2810
        %v2812 = vpop.f32.mrf.mxu0
        %2813 = vmatprep.mubr.f32.mxu0 0.0
        %2814 = vmatmul.mubr.f32.gmra.mxu0 %v2692
        %v2815 = vpop.f32.mrf.mxu0
        %v2816 = vadd.f32 0.0, %v2815
        %v2817 = vpop.f32.mrf.mxu0
        %2818 = vmatprep.mubr.f32.mxu0 0.0
        %2819 = vmatmul.mubr.f32.gmra.mxu0 %v2693
        %v2820 = vpop.f32.mrf.mxu0
        %v2821 = vadd.f32 0.0, %v2820
        %v2822 = vpop.f32.mrf.mxu0
        %2823 = vmatprep.mubr.f32.mxu0 0.0
        %2824 = vmatmul.mubr.f32.gmra.mxu0 %v2694
        %v2825 = vpop.f32.mrf.mxu0
        %v2826 = vadd.f32 0.0, %v2825
        %v2827 = vpop.f32.mrf.mxu0
        %2828 = vmatprep.mubr.f32.mxu0 0.0
        %2829 = vmatmul.mubr.f32.gmra.mxu0 %v2695
        %v2830 = vpop.f32.mrf.mxu0
        %v2831 = vadd.f32 0.0, %v2830
        %v2832 = vpop.f32.mrf.mxu0
        %2833 = vmatprep.mubr.f32.mxu0 0.0
        %2834 = vmatmul.mubr.f32.gmra.mxu0 %v2696
        %v2835 = vpop.f32.mrf.mxu0
        %v2836 = vadd.f32 0.0, %v2835
        %v2837 = vpop.f32.mrf.mxu0
        %2838 = vmatprep.mubr.f32.mxu0 0.0
        %2839 = vmatmul.mubr.f32.gmra.mxu0 %v2697
        %v2840 = vpop.f32.mrf.mxu0
        %v2841 = vadd.f32 0.0, %v2840
        %v2842 = vpop.f32.mrf.mxu0
        %2843 = vmatprep.mubr.f32.mxu0 0.0
        %2844 = vmatmul.mubr.f32.gmra.mxu0 %v2698
        %v2845 = vpop.f32.mrf.mxu0
        %v2846 = vadd.f32 0.0, %v2845
        %v2847 = vpop.f32.mrf.mxu0
        %2848 = vmatprep.mubr.f32.mxu0 0.0
        %2849 = vmatmul.mubr.f32.gmra.mxu0 %v2699
        %v2850 = vpop.f32.mrf.mxu0
        %v2851 = vadd.f32 0.0, %v2850
        %v2852 = vpop.f32.mrf.mxu0
        %2853 = vmatprep.mubr.f32.mxu0 0.0
        %2854 = vmatmul.mubr.f32.gmra.mxu0 %v2700
        %v2855 = vpop.f32.mrf.mxu0
        %v2856 = vadd.f32 0.0, %v2855
        %v2857 = vpop.f32.mrf.mxu0
        %2858 = vmatprep.mubr.f32.mxu0 0.0
        %2859 = vmatmul.mubr.f32.gmra.mxu0 %v2701
        %v2860 = vpop.f32.mrf.mxu0
        %v2861 = vadd.f32 0.0, %v2860
        %v2862 = vpop.f32.mrf.mxu0
        %2863 = vmatprep.mubr.f32.mxu0 0.0
        %2864 = vmatmul.mubr.f32.gmra.mxu0 %v2702
        %v2865 = vpop.f32.mrf.mxu0
        %v2866 = vadd.f32 0.0, %v2865
        %v2867 = vpop.f32.mrf.mxu0
        %2868 = vmatprep.mubr.f32.mxu0 0.0
        %2869 = vmatmul.mubr.f32.gmra.mxu0 %v2703
        %v2870 = vpop.f32.mrf.mxu0
        %v2871 = vadd.f32 0.0, %v2870
        %v2872 = vpop.f32.mrf.mxu0
        %2873 = vmatprep.mubr.f32.mxu0 0.0
        %2874 = vmatmul.mubr.f32.gmra.mxu0 %v2704
        %v2875 = vpop.f32.mrf.mxu0
        %v2876 = vadd.f32 0.0, %v2875
        %v2877 = vpop.f32.mrf.mxu0
        %2878 = vmatprep.mubr.f32.mxu0 0.0
        %2879 = vmatmul.mubr.f32.gmra.mxu0 %v2705
        %v2880 = vpop.f32.mrf.mxu0
        %v2881 = vadd.f32 0.0, %v2880
        %v2882 = vpop.f32.mrf.mxu0
        %2883 = vmatprep.mubr.f32.mxu0 0.0
        %2884 = vmatmul.mubr.f32.gmra.mxu0 %v2706
        %v2885 = vpop.f32.mrf.mxu0
        %v2886 = vadd.f32 0.0, %v2885
        %v2887 = vpop.f32.mrf.mxu0
        %2888 = vdwg.mxu0
        %v2889 = vld [vmem:[%s444] sm:$0xff]
        %v2890 = vld [vmem:[%s444 + $0x8] sm:$0xff]
        %v2891 = vld [vmem:[%s444 + $0x10] sm:$0xff]
        %v2892 = vld [vmem:[%s444 + $0x18] sm:$0xff]
        %v2893 = vld [vmem:[%s444 + $0x20] sm:$0xff]
        %v2894 = vld [vmem:[%s444 + $0x28] sm:$0xff]
        %v2895 = vld [vmem:[%s444 + $0x30] sm:$0xff]
        %v2896 = vld [vmem:[%s444 + $0x38] sm:$0xff]
        %v2897 = vld [vmem:[%s444 + $0x40] sm:$0xff]
        %v2898 = vld [vmem:[%s444 + $0x48] sm:$0xff]
        %v2899 = vld [vmem:[%s444 + $0x50] sm:$0xff]
        %v2900 = vld [vmem:[%s444 + $0x58] sm:$0xff]
        %v2901 = vld [vmem:[%s444 + $0x60] sm:$0xff]
        %v2902 = vld [vmem:[%s444 + $0x68] sm:$0xff]
        %v2903 = vld [vmem:[%s444 + $0x70] sm:$0xff]
        %v2904 = vld [vmem:[%s444 + $0x78] sm:$0xff]
        %v2905 = vld [vmem:[%s444 + $0x80] sm:$0xff]
        %v2906 = vld [vmem:[%s444 + $0x88] sm:$0xff]
        %v2907 = vld [vmem:[%s444 + $0x90] sm:$0xff]
        %v2908 = vld [vmem:[%s444 + $0x98] sm:$0xff]
        %v2909 = vadd.f32 %v2889, %v2791
        %v2910 = vadd.f32 %v2890, %v2796
        %v2911 = vadd.f32 %v2891, %v2801
        %v2912 = vadd.f32 %v2892, %v2806
        %v2913 = vadd.f32 %v2893, %v2811
        %v2914 = vadd.f32 %v2894, %v2816
        %v2915 = vadd.f32 %v2895, %v2821
        %v2916 = vadd.f32 %v2896, %v2826
        %v2917 = vadd.f32 %v2897, %v2831
        %v2918 = vadd.f32 %v2898, %v2836
        %v2919 = vadd.f32 %v2899, %v2841
        %v2920 = vadd.f32 %v2900, %v2846
        %v2921 = vadd.f32 %v2901, %v2851
        %v2922 = vadd.f32 %v2902, %v2856
        %v2923 = vadd.f32 %v2903, %v2861
        %v2924 = vadd.f32 %v2904, %v2866
        %v2925 = vadd.f32 %v2905, %v2871
        %v2926 = vadd.f32 %v2906, %v2876
        %v2927 = vadd.f32 %v2907, %v2881
        %v2928 = vadd.f32 %v2908, %v2886
        %2929 = vst [vmem:[%s444] sm:$0xff] %v2909
        %2930 = vst [vmem:[%s444 + $0x8] sm:$0xff] %v2910
        %2931 = vst [vmem:[%s444 + $0x10] sm:$0xff] %v2911
        %2932 = vst [vmem:[%s444 + $0x18] sm:$0xff] %v2912
        %2933 = vst [vmem:[%s444 + $0x20] sm:$0xff] %v2913
        %2934 = vst [vmem:[%s444 + $0x28] sm:$0xff] %v2914
        %2935 = vst [vmem:[%s444 + $0x30] sm:$0xff] %v2915
        %2936 = vst [vmem:[%s444 + $0x38] sm:$0xff] %v2916
        %2937 = vst [vmem:[%s444 + $0x40] sm:$0xff] %v2917
        %2938 = vst [vmem:[%s444 + $0x48] sm:$0xff] %v2918
        %2939 = vst [vmem:[%s444 + $0x50] sm:$0xff] %v2919
        %2940 = vst [vmem:[%s444 + $0x58] sm:$0xff] %v2920
        %2941 = vst [vmem:[%s444 + $0x60] sm:$0xff] %v2921
        %2942 = vst [vmem:[%s444 + $0x68] sm:$0xff] %v2922
        %2943 = vst [vmem:[%s444 + $0x70] sm:$0xff] %v2923
        %2944 = vst [vmem:[%s444 + $0x78] sm:$0xff] %v2924
        %2945 = vst [vmem:[%s444 + $0x80] sm:$0xff] %v2925
        %2946 = vst [vmem:[%s444 + $0x88] sm:$0xff] %v2926
        %2947 = vst [vmem:[%s444 + $0x90] sm:$0xff] %v2927
        %2948 = vst [vmem:[%s444 + $0x98] sm:$0xff] %v2928
        %v2949 = vld [vmem:[#allocation3 + $0x19] sm:$0xff]
        %v2950 = vld [vmem:[#allocation3 + $0x21] sm:$0xff]
        %v2951 = vld [vmem:[#allocation3 + $0x29] sm:$0xff]
        %v2952 = vld [vmem:[#allocation3 + $0x31] sm:$0xff]
        %v2953 = vld [vmem:[#allocation3 + $0x39] sm:$0xff]
        %v2954 = vld [vmem:[#allocation3 + $0x41] sm:$0xff]
        %v2955 = vld [vmem:[#allocation3 + $0x49] sm:$0xff]
        %v2956 = vld [vmem:[#allocation3 + $0x51] sm:$0xff]
        %v2957 = vld [vmem:[#allocation3 + $0x59] sm:$0xff]
        %v2958 = vld [vmem:[#allocation3 + $0x61] sm:$0xff]
        %v2959 = vld [vmem:[#allocation3 + $0x69] sm:$0xff]
        %v2960 = vld [vmem:[#allocation3 + $0x71] sm:$0xff]
        %v2961 = vld [vmem:[#allocation3 + $0x79] sm:$0xff]
        %v2962 = vld [vmem:[#allocation3 + $0x81] sm:$0xff]
        %v2963 = vld [vmem:[#allocation3 + $0x89] sm:$0xff]
        %v2964 = vld [vmem:[#allocation3 + $0x91] sm:$0xff]
        %v2965 = vld [vmem:[#allocation3 + $0x99] sm:$0xff]
        %v2966 = vld [vmem:[#allocation3 + $0xa1] sm:$0xff]
        %v2967 = vld [vmem:[#allocation3 + $0xa9] sm:$0xff]
        %v2968 = vld [vmem:[#allocation3 + $0xb1] sm:$0xff]
        %s2969 = scalar_lea.vmem %s4, 640
        %v2970 = vld [vmem:[%s2969] sm:$0xff]
        %v2971 = vld [vmem:[%s2969 + $0x8] sm:$0xff]
        %v2972 = vld [vmem:[%s2969 + $0x10] sm:$0xff]
        %v2973 = vld [vmem:[%s2969 + $0x18] sm:$0xff]
        %v2974 = vld [vmem:[%s2969 + $0x20] sm:$0xff]
        %v2975 = vld [vmem:[%s2969 + $0x28] sm:$0xff]
        %v2976 = vld [vmem:[%s2969 + $0x30] sm:$0xff]
        %v2977 = vld [vmem:[%s2969 + $0x38] sm:$0xff]
        %v2978 = vld [vmem:[%s2969 + $0x40] sm:$0xff]
        %v2979 = vld [vmem:[%s2969 + $0x48] sm:$0xff]
        %v2980 = vld [vmem:[%s2969 + $0x50] sm:$0xff]
        %v2981 = vld [vmem:[%s2969 + $0x58] sm:$0xff]
        %v2982 = vld [vmem:[%s2969 + $0x60] sm:$0xff]
        %v2983 = vld [vmem:[%s2969 + $0x68] sm:$0xff]
        %v2984 = vld [vmem:[%s2969 + $0x70] sm:$0xff]
        %v2985 = vld [vmem:[%s2969 + $0x78] sm:$0xff]
        %2986 = vmatprep.subr.mxu0 0.0
        %2987 = vmatpush1.msra.mxu0 %v2985
        %2988 = vmatprep.subr.mxu0 0.0
        %2989 = vmatpush1.msra.mxu0 %v2984
        %2990 = vmatprep.subr.mxu0 0.0
        %2991 = vmatpush1.msra.mxu0 %v2983
        %2992 = vmatprep.subr.mxu0 0.0
        %2993 = vmatpush1.msra.mxu0 %v2982
        %2994 = vmatprep.subr.mxu0 0.0
        %2995 = vmatpush1.msra.mxu0 %v2981
        %2996 = vmatprep.subr.mxu0 0.0
        %2997 = vmatpush1.msra.mxu0 %v2980
        %2998 = vmatprep.subr.mxu0 0.0
        %2999 = vmatpush1.msra.mxu0 %v2979
        %3000 = vmatprep.subr.mxu0 0.0
        %3001 = vmatpush1.msra.mxu0 %v2978
        %3002 = vmatprep.subr.mxu0 0.0
        %3003 = vmatpush1.msra.mxu0 %v2977
        %3004 = vmatprep.subr.mxu0 0.0
        %3005 = vmatpush1.msra.mxu0 %v2976
        %3006 = vmatprep.subr.mxu0 0.0
        %3007 = vmatpush1.msra.mxu0 %v2975
        %3008 = vmatprep.subr.mxu0 0.0
        %3009 = vmatpush1.msra.mxu0 %v2974
        %3010 = vmatprep.subr.mxu0 0.0
        %3011 = vmatpush1.msra.mxu0 %v2973
        %3012 = vmatprep.subr.mxu0 0.0
        %3013 = vmatpush1.msra.mxu0 %v2972
        %3014 = vmatprep.subr.mxu0 0.0
        %3015 = vmatpush1.msra.mxu0 %v2971
        %3016 = vmatprep.subr.mxu0 0.0
        %3017 = vmatpush1.msra.mxu0 %v2970
        %3018 = vmatprep.subr.mxu0 0.0
        %3019 = vmatpush2.msra.mxu0 0.0
        %3020 = vmatprep.subr.mxu0 0.0
        %3021 = vmatpush2.msra.mxu0 0.0
        %3022 = vmatprep.subr.mxu0 0.0
        %3023 = vmatpush2.msra.mxu0 0.0
        %3024 = vmatprep.subr.mxu0 0.0
        %3025 = vmatpush2.msra.mxu0 0.0
        %3026 = vmatprep.subr.mxu0 0.0
        %3027 = vmatpush2.msra.mxu0 0.0
        %3028 = vmatprep.subr.mxu0 0.0
        %3029 = vmatpush2.msra.mxu0 0.0
        %3030 = vmatprep.subr.mxu0 0.0
        %3031 = vmatpush2.msra.mxu0 0.0
        %3032 = vmatprep.subr.mxu0 0.0
        %3033 = vmatpush2.msra.mxu0 0.0
        %3034 = vmatprep.subr.mxu0 0.0
        %3035 = vmatpush2.msra.mxu0 0.0
        %3036 = vmatprep.subr.mxu0 0.0
        %3037 = vmatpush2.msra.mxu0 0.0
        %3038 = vmatprep.subr.mxu0 0.0
        %3039 = vmatpush2.msra.mxu0 0.0
        %3040 = vmatprep.subr.mxu0 0.0
        %3041 = vmatpush2.msra.mxu0 0.0
        %3042 = vmatprep.subr.mxu0 0.0
        %3043 = vmatpush2.msra.mxu0 0.0
        %3044 = vmatprep.subr.mxu0 0.0
        %3045 = vmatpush2.msra.mxu0 0.0
        %3046 = vmatprep.subr.mxu0 0.0
        %3047 = vmatpush2.msra.mxu0 0.0
        %3048 = vmatprep.subr.mxu0 0.0
        %3049 = vmatpush2.msra.mxu0 0.0
        %3050 = vmatprep.mubr.f32.mxu0 0.0
        %3051 = vmatmul.mubr.f32.gmra.mxu0 %v2949
        %v3052 = vpop.f32.mrf.mxu0
        %v3053 = vadd.f32 0.0, %v3052
        %v3054 = vpop.f32.mrf.mxu0
        %3055 = vmatprep.mubr.f32.mxu0 0.0
        %3056 = vmatmul.mubr.f32.gmra.mxu0 %v2950
        %v3057 = vpop.f32.mrf.mxu0
        %v3058 = vadd.f32 0.0, %v3057
        %v3059 = vpop.f32.mrf.mxu0
        %3060 = vmatprep.mubr.f32.mxu0 0.0
        %3061 = vmatmul.mubr.f32.gmra.mxu0 %v2951
        %v3062 = vpop.f32.mrf.mxu0
        %v3063 = vadd.f32 0.0, %v3062
        %v3064 = vpop.f32.mrf.mxu0
        %3065 = vmatprep.mubr.f32.mxu0 0.0
        %3066 = vmatmul.mubr.f32.gmra.mxu0 %v2952
        %v3067 = vpop.f32.mrf.mxu0
        %v3068 = vadd.f32 0.0, %v3067
        %v3069 = vpop.f32.mrf.mxu0
        %3070 = vmatprep.mubr.f32.mxu0 0.0
        %3071 = vmatmul.mubr.f32.gmra.mxu0 %v2953
        %v3072 = vpop.f32.mrf.mxu0
        %v3073 = vadd.f32 0.0, %v3072
        %v3074 = vpop.f32.mrf.mxu0
        %3075 = vmatprep.mubr.f32.mxu0 0.0
        %3076 = vmatmul.mubr.f32.gmra.mxu0 %v2954
        %v3077 = vpop.f32.mrf.mxu0
        %v3078 = vadd.f32 0.0, %v3077
        %v3079 = vpop.f32.mrf.mxu0
        %3080 = vmatprep.mubr.f32.mxu0 0.0
        %3081 = vmatmul.mubr.f32.gmra.mxu0 %v2955
        %v3082 = vpop.f32.mrf.mxu0
        %v3083 = vadd.f32 0.0, %v3082
        %v3084 = vpop.f32.mrf.mxu0
        %3085 = vmatprep.mubr.f32.mxu0 0.0
        %3086 = vmatmul.mubr.f32.gmra.mxu0 %v2956
        %v3087 = vpop.f32.mrf.mxu0
        %v3088 = vadd.f32 0.0, %v3087
        %v3089 = vpop.f32.mrf.mxu0
        %3090 = vmatprep.mubr.f32.mxu0 0.0
        %3091 = vmatmul.mubr.f32.gmra.mxu0 %v2957
        %v3092 = vpop.f32.mrf.mxu0
        %v3093 = vadd.f32 0.0, %v3092
        %v3094 = vpop.f32.mrf.mxu0
        %3095 = vmatprep.mubr.f32.mxu0 0.0
        %3096 = vmatmul.mubr.f32.gmra.mxu0 %v2958
        %v3097 = vpop.f32.mrf.mxu0
        %v3098 = vadd.f32 0.0, %v3097
        %v3099 = vpop.f32.mrf.mxu0
        %3100 = vmatprep.mubr.f32.mxu0 0.0
        %3101 = vmatmul.mubr.f32.gmra.mxu0 %v2959
        %v3102 = vpop.f32.mrf.mxu0
        %v3103 = vadd.f32 0.0, %v3102
        %v3104 = vpop.f32.mrf.mxu0
        %3105 = vmatprep.mubr.f32.mxu0 0.0
        %3106 = vmatmul.mubr.f32.gmra.mxu0 %v2960
        %v3107 = vpop.f32.mrf.mxu0
        %v3108 = vadd.f32 0.0, %v3107
        %v3109 = vpop.f32.mrf.mxu0
        %3110 = vmatprep.mubr.f32.mxu0 0.0
        %3111 = vmatmul.mubr.f32.gmra.mxu0 %v2961
        %v3112 = vpop.f32.mrf.mxu0
        %v3113 = vadd.f32 0.0, %v3112
        %v3114 = vpop.f32.mrf.mxu0
        %3115 = vmatprep.mubr.f32.mxu0 0.0
        %3116 = vmatmul.mubr.f32.gmra.mxu0 %v2962
        %v3117 = vpop.f32.mrf.mxu0
        %v3118 = vadd.f32 0.0, %v3117
        %v3119 = vpop.f32.mrf.mxu0
        %3120 = vmatprep.mubr.f32.mxu0 0.0
        %3121 = vmatmul.mubr.f32.gmra.mxu0 %v2963
        %v3122 = vpop.f32.mrf.mxu0
        %v3123 = vadd.f32 0.0, %v3122
        %v3124 = vpop.f32.mrf.mxu0
        %3125 = vmatprep.mubr.f32.mxu0 0.0
        %3126 = vmatmul.mubr.f32.gmra.mxu0 %v2964
        %v3127 = vpop.f32.mrf.mxu0
        %v3128 = vadd.f32 0.0, %v3127
        %v3129 = vpop.f32.mrf.mxu0
        %3130 = vmatprep.mubr.f32.mxu0 0.0
        %3131 = vmatmul.mubr.f32.gmra.mxu0 %v2965
        %v3132 = vpop.f32.mrf.mxu0
        %v3133 = vadd.f32 0.0, %v3132
        %v3134 = vpop.f32.mrf.mxu0
        %3135 = vmatprep.mubr.f32.mxu0 0.0
        %3136 = vmatmul.mubr.f32.gmra.mxu0 %v2966
        %v3137 = vpop.f32.mrf.mxu0
        %v3138 = vadd.f32 0.0, %v3137
        %v3139 = vpop.f32.mrf.mxu0
        %3140 = vmatprep.mubr.f32.mxu0 0.0
        %3141 = vmatmul.mubr.f32.gmra.mxu0 %v2967
        %v3142 = vpop.f32.mrf.mxu0
        %v3143 = vadd.f32 0.0, %v3142
        %v3144 = vpop.f32.mrf.mxu0
        %3145 = vmatprep.mubr.f32.mxu0 0.0
        %3146 = vmatmul.mubr.f32.gmra.mxu0 %v2968
        %v3147 = vpop.f32.mrf.mxu0
        %v3148 = vadd.f32 0.0, %v3147
        %v3149 = vpop.f32.mrf.mxu0
        %3150 = vdwg.mxu0
        %v3151 = vld [vmem:[%s444] sm:$0xff]
        %v3152 = vld [vmem:[%s444 + $0x8] sm:$0xff]
        %v3153 = vld [vmem:[%s444 + $0x10] sm:$0xff]
        %v3154 = vld [vmem:[%s444 + $0x18] sm:$0xff]
        %v3155 = vld [vmem:[%s444 + $0x20] sm:$0xff]
        %v3156 = vld [vmem:[%s444 + $0x28] sm:$0xff]
        %v3157 = vld [vmem:[%s444 + $0x30] sm:$0xff]
        %v3158 = vld [vmem:[%s444 + $0x38] sm:$0xff]
        %v3159 = vld [vmem:[%s444 + $0x40] sm:$0xff]
        %v3160 = vld [vmem:[%s444 + $0x48] sm:$0xff]
        %v3161 = vld [vmem:[%s444 + $0x50] sm:$0xff]
        %v3162 = vld [vmem:[%s444 + $0x58] sm:$0xff]
        %v3163 = vld [vmem:[%s444 + $0x60] sm:$0xff]
        %v3164 = vld [vmem:[%s444 + $0x68] sm:$0xff]
        %v3165 = vld [vmem:[%s444 + $0x70] sm:$0xff]
        %v3166 = vld [vmem:[%s444 + $0x78] sm:$0xff]
        %v3167 = vld [vmem:[%s444 + $0x80] sm:$0xff]
        %v3168 = vld [vmem:[%s444 + $0x88] sm:$0xff]
        %v3169 = vld [vmem:[%s444 + $0x90] sm:$0xff]
        %v3170 = vld [vmem:[%s444 + $0x98] sm:$0xff]
        %v3171 = vadd.f32 %v3151, %v3053
        %v3172 = vadd.f32 %v3152, %v3058
        %v3173 = vadd.f32 %v3153, %v3063
        %v3174 = vadd.f32 %v3154, %v3068
        %v3175 = vadd.f32 %v3155, %v3073
        %v3176 = vadd.f32 %v3156, %v3078
        %v3177 = vadd.f32 %v3157, %v3083
        %v3178 = vadd.f32 %v3158, %v3088
        %v3179 = vadd.f32 %v3159, %v3093
        %v3180 = vadd.f32 %v3160, %v3098
        %v3181 = vadd.f32 %v3161, %v3103
        %v3182 = vadd.f32 %v3162, %v3108
        %v3183 = vadd.f32 %v3163, %v3113
        %v3184 = vadd.f32 %v3164, %v3118
        %v3185 = vadd.f32 %v3165, %v3123
        %v3186 = vadd.f32 %v3166, %v3128
        %v3187 = vadd.f32 %v3167, %v3133
        %v3188 = vadd.f32 %v3168, %v3138
        %v3189 = vadd.f32 %v3169, %v3143
        %v3190 = vadd.f32 %v3170, %v3148
        %3191 = vst [vmem:[%s444] sm:$0xff] %v3171
        %3192 = vst [vmem:[%s444 + $0x8] sm:$0xff] %v3172
        %3193 = vst [vmem:[%s444 + $0x10] sm:$0xff] %v3173
        %3194 = vst [vmem:[%s444 + $0x18] sm:$0xff] %v3174
        %3195 = vst [vmem:[%s444 + $0x20] sm:$0xff] %v3175
        %3196 = vst [vmem:[%s444 + $0x28] sm:$0xff] %v3176
        %3197 = vst [vmem:[%s444 + $0x30] sm:$0xff] %v3177
        %3198 = vst [vmem:[%s444 + $0x38] sm:$0xff] %v3178
        %3199 = vst [vmem:[%s444 + $0x40] sm:$0xff] %v3179
        %3200 = vst [vmem:[%s444 + $0x48] sm:$0xff] %v3180
        %3201 = vst [vmem:[%s444 + $0x50] sm:$0xff] %v3181
        %3202 = vst [vmem:[%s444 + $0x58] sm:$0xff] %v3182
        %3203 = vst [vmem:[%s444 + $0x60] sm:$0xff] %v3183
        %3204 = vst [vmem:[%s444 + $0x68] sm:$0xff] %v3184
        %3205 = vst [vmem:[%s444 + $0x70] sm:$0xff] %v3185
        %3206 = vst [vmem:[%s444 + $0x78] sm:$0xff] %v3186
        %3207 = vst [vmem:[%s444 + $0x80] sm:$0xff] %v3187
        %3208 = vst [vmem:[%s444 + $0x88] sm:$0xff] %v3188
        %3209 = vst [vmem:[%s444 + $0x90] sm:$0xff] %v3189
        %3210 = vst [vmem:[%s444 + $0x98] sm:$0xff] %v3190
        %v3211 = vld [vmem:[#allocation3 + $0x27] sm:$0xff]
        %v3212 = vld [vmem:[#allocation3 + $0x2f] sm:$0xff]
        %v3213 = vld [vmem:[#allocation3 + $0x37] sm:$0xff]
        %v3214 = vld [vmem:[#allocation3 + $0x3f] sm:$0xff]
        %v3215 = vld [vmem:[#allocation3 + $0x47] sm:$0xff]
        %v3216 = vld [vmem:[#allocation3 + $0x4f] sm:$0xff]
        %v3217 = vld [vmem:[#allocation3 + $0x57] sm:$0xff]
        %v3218 = vld [vmem:[#allocation3 + $0x5f] sm:$0xff]
        %v3219 = vld [vmem:[#allocation3 + $0x67] sm:$0xff]
        %v3220 = vld [vmem:[#allocation3 + $0x6f] sm:$0xff]
        %v3221 = vld [vmem:[#allocation3 + $0x77] sm:$0xff]
        %v3222 = vld [vmem:[#allocation3 + $0x7f] sm:$0xff]
        %v3223 = vld [vmem:[#allocation3 + $0x87] sm:$0xff]
        %v3224 = vld [vmem:[#allocation3 + $0x8f] sm:$0xff]
        %v3225 = vld [vmem:[#allocation3 + $0x97] sm:$0xff]
        %v3226 = vld [vmem:[#allocation3 + $0x9f] sm:$0xff]
        %v3227 = vld [vmem:[#allocation3 + $0xa7] sm:$0xff]
        %v3228 = vld [vmem:[#allocation3 + $0xaf] sm:$0xff]
        %v3229 = vld [vmem:[#allocation3 + $0xb7] sm:$0xff]
        %v3230 = vld [vmem:[#allocation3 + $0xbf] sm:$0xff]
        %s3231 = scalar_lea.vmem %s4, 768
        %v3232 = vld [vmem:[%s3231] sm:$0xff]
        %v3233 = vld [vmem:[%s3231 + $0x8] sm:$0xff]
        %v3234 = vld [vmem:[%s3231 + $0x10] sm:$0xff]
        %v3235 = vld [vmem:[%s3231 + $0x18] sm:$0xff]
        %v3236 = vld [vmem:[%s3231 + $0x20] sm:$0xff]
        %v3237 = vld [vmem:[%s3231 + $0x28] sm:$0xff]
        %v3238 = vld [vmem:[%s3231 + $0x30] sm:$0xff]
        %v3239 = vld [vmem:[%s3231 + $0x38] sm:$0xff]
        %v3240 = vld [vmem:[%s3231 + $0x40] sm:$0xff]
        %v3241 = vld [vmem:[%s3231 + $0x48] sm:$0xff]
        %v3242 = vld [vmem:[%s3231 + $0x50] sm:$0xff]
        %v3243 = vld [vmem:[%s3231 + $0x58] sm:$0xff]
        %v3244 = vld [vmem:[%s3231 + $0x60] sm:$0xff]
        %v3245 = vld [vmem:[%s3231 + $0x68] sm:$0xff]
        %v3246 = vld [vmem:[%s3231 + $0x70] sm:$0xff]
        %v3247 = vld [vmem:[%s3231 + $0x78] sm:$0xff]
        %3248 = vmatprep.subr.mxu0 0.0
        %3249 = vmatpush1.msra.mxu0 %v3247
        %3250 = vmatprep.subr.mxu0 0.0
        %3251 = vmatpush1.msra.mxu0 %v3246
        %3252 = vmatprep.subr.mxu0 0.0
        %3253 = vmatpush1.msra.mxu0 %v3245
        %3254 = vmatprep.subr.mxu0 0.0
        %3255 = vmatpush1.msra.mxu0 %v3244
        %3256 = vmatprep.subr.mxu0 0.0
        %3257 = vmatpush1.msra.mxu0 %v3243
        %3258 = vmatprep.subr.mxu0 0.0
        %3259 = vmatpush1.msra.mxu0 %v3242
        %3260 = vmatprep.subr.mxu0 0.0
        %3261 = vmatpush1.msra.mxu0 %v3241
        %3262 = vmatprep.subr.mxu0 0.0
        %3263 = vmatpush1.msra.mxu0 %v3240
        %3264 = vmatprep.subr.mxu0 0.0
        %3265 = vmatpush1.msra.mxu0 %v3239
        %3266 = vmatprep.subr.mxu0 0.0
        %3267 = vmatpush1.msra.mxu0 %v3238
        %3268 = vmatprep.subr.mxu0 0.0
        %3269 = vmatpush1.msra.mxu0 %v3237
        %3270 = vmatprep.subr.mxu0 0.0
        %3271 = vmatpush1.msra.mxu0 %v3236
        %3272 = vmatprep.subr.mxu0 0.0
        %3273 = vmatpush1.msra.mxu0 %v3235
        %3274 = vmatprep.subr.mxu0 0.0
        %3275 = vmatpush1.msra.mxu0 %v3234
        %3276 = vmatprep.subr.mxu0 0.0
        %3277 = vmatpush1.msra.mxu0 %v3233
        %3278 = vmatprep.subr.mxu0 0.0
        %3279 = vmatpush1.msra.mxu0 %v3232
        %3280 = vmatprep.subr.mxu0 0.0
        %3281 = vmatpush2.msra.mxu0 0.0
        %3282 = vmatprep.subr.mxu0 0.0
        %3283 = vmatpush2.msra.mxu0 0.0
        %3284 = vmatprep.subr.mxu0 0.0
        %3285 = vmatpush2.msra.mxu0 0.0
        %3286 = vmatprep.subr.mxu0 0.0
        %3287 = vmatpush2.msra.mxu0 0.0
        %3288 = vmatprep.subr.mxu0 0.0
        %3289 = vmatpush2.msra.mxu0 0.0
        %3290 = vmatprep.subr.mxu0 0.0
        %3291 = vmatpush2.msra.mxu0 0.0
        %3292 = vmatprep.subr.mxu0 0.0
        %3293 = vmatpush2.msra.mxu0 0.0
        %3294 = vmatprep.subr.mxu0 0.0
        %3295 = vmatpush2.msra.mxu0 0.0
        %3296 = vmatprep.subr.mxu0 0.0
        %3297 = vmatpush2.msra.mxu0 0.0
        %3298 = vmatprep.subr.mxu0 0.0
        %3299 = vmatpush2.msra.mxu0 0.0
        %3300 = vmatprep.subr.mxu0 0.0
        %3301 = vmatpush2.msra.mxu0 0.0
        %3302 = vmatprep.subr.mxu0 0.0
        %3303 = vmatpush2.msra.mxu0 0.0
        %3304 = vmatprep.subr.mxu0 0.0
        %3305 = vmatpush2.msra.mxu0 0.0
        %3306 = vmatprep.subr.mxu0 0.0
        %3307 = vmatpush2.msra.mxu0 0.0
        %3308 = vmatprep.subr.mxu0 0.0
        %3309 = vmatpush2.msra.mxu0 0.0
        %3310 = vmatprep.subr.mxu0 0.0
        %3311 = vmatpush2.msra.mxu0 0.0
        %3312 = vmatprep.mubr.f32.mxu0 0.0
        %3313 = vmatmul.mubr.f32.gmra.mxu0 %v3211
        %v3314 = vpop.f32.mrf.mxu0
        %v3315 = vadd.f32 0.0, %v3314
        %v3316 = vpop.f32.mrf.mxu0
        %3317 = vmatprep.mubr.f32.mxu0 0.0
        %3318 = vmatmul.mubr.f32.gmra.mxu0 %v3212
        %v3319 = vpop.f32.mrf.mxu0
        %v3320 = vadd.f32 0.0, %v3319
        %v3321 = vpop.f32.mrf.mxu0
        %3322 = vmatprep.mubr.f32.mxu0 0.0
        %3323 = vmatmul.mubr.f32.gmra.mxu0 %v3213
        %v3324 = vpop.f32.mrf.mxu0
        %v3325 = vadd.f32 0.0, %v3324
        %v3326 = vpop.f32.mrf.mxu0
        %3327 = vmatprep.mubr.f32.mxu0 0.0
        %3328 = vmatmul.mubr.f32.gmra.mxu0 %v3214
        %v3329 = vpop.f32.mrf.mxu0
        %v3330 = vadd.f32 0.0, %v3329
        %v3331 = vpop.f32.mrf.mxu0
        %3332 = vmatprep.mubr.f32.mxu0 0.0
        %3333 = vmatmul.mubr.f32.gmra.mxu0 %v3215
        %v3334 = vpop.f32.mrf.mxu0
        %v3335 = vadd.f32 0.0, %v3334
        %v3336 = vpop.f32.mrf.mxu0
        %3337 = vmatprep.mubr.f32.mxu0 0.0
        %3338 = vmatmul.mubr.f32.gmra.mxu0 %v3216
        %v3339 = vpop.f32.mrf.mxu0
        %v3340 = vadd.f32 0.0, %v3339
        %v3341 = vpop.f32.mrf.mxu0
        %3342 = vmatprep.mubr.f32.mxu0 0.0
        %3343 = vmatmul.mubr.f32.gmra.mxu0 %v3217
        %v3344 = vpop.f32.mrf.mxu0
        %v3345 = vadd.f32 0.0, %v3344
        %v3346 = vpop.f32.mrf.mxu0
        %3347 = vmatprep.mubr.f32.mxu0 0.0
        %3348 = vmatmul.mubr.f32.gmra.mxu0 %v3218
        %v3349 = vpop.f32.mrf.mxu0
        %v3350 = vadd.f32 0.0, %v3349
        %v3351 = vpop.f32.mrf.mxu0
        %3352 = vmatprep.mubr.f32.mxu0 0.0
        %3353 = vmatmul.mubr.f32.gmra.mxu0 %v3219
        %v3354 = vpop.f32.mrf.mxu0
        %v3355 = vadd.f32 0.0, %v3354
        %v3356 = vpop.f32.mrf.mxu0
        %3357 = vmatprep.mubr.f32.mxu0 0.0
        %3358 = vmatmul.mubr.f32.gmra.mxu0 %v3220
        %v3359 = vpop.f32.mrf.mxu0
        %v3360 = vadd.f32 0.0, %v3359
        %v3361 = vpop.f32.mrf.mxu0
        %3362 = vmatprep.mubr.f32.mxu0 0.0
        %3363 = vmatmul.mubr.f32.gmra.mxu0 %v3221
        %v3364 = vpop.f32.mrf.mxu0
        %v3365 = vadd.f32 0.0, %v3364
        %v3366 = vpop.f32.mrf.mxu0
        %3367 = vmatprep.mubr.f32.mxu0 0.0
        %3368 = vmatmul.mubr.f32.gmra.mxu0 %v3222
        %v3369 = vpop.f32.mrf.mxu0
        %v3370 = vadd.f32 0.0, %v3369
        %v3371 = vpop.f32.mrf.mxu0
        %3372 = vmatprep.mubr.f32.mxu0 0.0
        %3373 = vmatmul.mubr.f32.gmra.mxu0 %v3223
        %v3374 = vpop.f32.mrf.mxu0
        %v3375 = vadd.f32 0.0, %v3374
        %v3376 = vpop.f32.mrf.mxu0
        %3377 = vmatprep.mubr.f32.mxu0 0.0
        %3378 = vmatmul.mubr.f32.gmra.mxu0 %v3224
        %v3379 = vpop.f32.mrf.mxu0
        %v3380 = vadd.f32 0.0, %v3379
        %v3381 = vpop.f32.mrf.mxu0
        %3382 = vmatprep.mubr.f32.mxu0 0.0
        %3383 = vmatmul.mubr.f32.gmra.mxu0 %v3225
        %v3384 = vpop.f32.mrf.mxu0
        %v3385 = vadd.f32 0.0, %v3384
        %v3386 = vpop.f32.mrf.mxu0
        %3387 = vmatprep.mubr.f32.mxu0 0.0
        %3388 = vmatmul.mubr.f32.gmra.mxu0 %v3226
        %v3389 = vpop.f32.mrf.mxu0
        %v3390 = vadd.f32 0.0, %v3389
        %v3391 = vpop.f32.mrf.mxu0
        %3392 = vmatprep.mubr.f32.mxu0 0.0
        %3393 = vmatmul.mubr.f32.gmra.mxu0 %v3227
        %v3394 = vpop.f32.mrf.mxu0
        %v3395 = vadd.f32 0.0, %v3394
        %v3396 = vpop.f32.mrf.mxu0
        %3397 = vmatprep.mubr.f32.mxu0 0.0
        %3398 = vmatmul.mubr.f32.gmra.mxu0 %v3228
        %v3399 = vpop.f32.mrf.mxu0
        %v3400 = vadd.f32 0.0, %v3399
        %v3401 = vpop.f32.mrf.mxu0
        %3402 = vmatprep.mubr.f32.mxu0 0.0
        %3403 = vmatmul.mubr.f32.gmra.mxu0 %v3229
        %v3404 = vpop.f32.mrf.mxu0
        %v3405 = vadd.f32 0.0, %v3404
        %v3406 = vpop.f32.mrf.mxu0
        %3407 = vmatprep.mubr.f32.mxu0 0.0
        %3408 = vmatmul.mubr.f32.gmra.mxu0 %v3230
        %v3409 = vpop.f32.mrf.mxu0
        %v3410 = vadd.f32 0.0, %v3409
        %v3411 = vpop.f32.mrf.mxu0
        %3412 = vdwg.mxu0
        %v3413 = vld [vmem:[%s444] sm:$0xff]
        %v3414 = vld [vmem:[%s444 + $0x8] sm:$0xff]
        %v3415 = vld [vmem:[%s444 + $0x10] sm:$0xff]
        %v3416 = vld [vmem:[%s444 + $0x18] sm:$0xff]
        %v3417 = vld [vmem:[%s444 + $0x20] sm:$0xff]
        %v3418 = vld [vmem:[%s444 + $0x28] sm:$0xff]
        %v3419 = vld [vmem:[%s444 + $0x30] sm:$0xff]
        %v3420 = vld [vmem:[%s444 + $0x38] sm:$0xff]
        %v3421 = vld [vmem:[%s444 + $0x40] sm:$0xff]
        %v3422 = vld [vmem:[%s444 + $0x48] sm:$0xff]
        %v3423 = vld [vmem:[%s444 + $0x50] sm:$0xff]
        %v3424 = vld [vmem:[%s444 + $0x58] sm:$0xff]
        %v3425 = vld [vmem:[%s444 + $0x60] sm:$0xff]
        %v3426 = vld [vmem:[%s444 + $0x68] sm:$0xff]
        %v3427 = vld [vmem:[%s444 + $0x70] sm:$0xff]
        %v3428 = vld [vmem:[%s444 + $0x78] sm:$0xff]
        %v3429 = vld [vmem:[%s444 + $0x80] sm:$0xff]
        %v3430 = vld [vmem:[%s444 + $0x88] sm:$0xff]
        %v3431 = vld [vmem:[%s444 + $0x90] sm:$0xff]
        %v3432 = vld [vmem:[%s444 + $0x98] sm:$0xff]
        %v3433 = vadd.f32 %v3413, %v3315
        %v3434 = vadd.f32 %v3414, %v3320
        %v3435 = vadd.f32 %v3415, %v3325
        %v3436 = vadd.f32 %v3416, %v3330
        %v3437 = vadd.f32 %v3417, %v3335
        %v3438 = vadd.f32 %v3418, %v3340
        %v3439 = vadd.f32 %v3419, %v3345
        %v3440 = vadd.f32 %v3420, %v3350
        %v3441 = vadd.f32 %v3421, %v3355
        %v3442 = vadd.f32 %v3422, %v3360
        %v3443 = vadd.f32 %v3423, %v3365
        %v3444 = vadd.f32 %v3424, %v3370
        %v3445 = vadd.f32 %v3425, %v3375
        %v3446 = vadd.f32 %v3426, %v3380
        %v3447 = vadd.f32 %v3427, %v3385
        %v3448 = vadd.f32 %v3428, %v3390
        %v3449 = vadd.f32 %v3429, %v3395
        %v3450 = vadd.f32 %v3430, %v3400
        %v3451 = vadd.f32 %v3431, %v3405
        %v3452 = vadd.f32 %v3432, %v3410
        %3453 = vst [vmem:[%s444] sm:$0xff] %v3433
        %3454 = vst [vmem:[%s444 + $0x8] sm:$0xff] %v3434
        %3455 = vst [vmem:[%s444 + $0x10] sm:$0xff] %v3435
        %3456 = vst [vmem:[%s444 + $0x18] sm:$0xff] %v3436
        %3457 = vst [vmem:[%s444 + $0x20] sm:$0xff] %v3437
        %3458 = vst [vmem:[%s444 + $0x28] sm:$0xff] %v3438
        %3459 = vst [vmem:[%s444 + $0x30] sm:$0xff] %v3439
        %3460 = vst [vmem:[%s444 + $0x38] sm:$0xff] %v3440
        %3461 = vst [vmem:[%s444 + $0x40] sm:$0xff] %v3441
        %3462 = vst [vmem:[%s444 + $0x48] sm:$0xff] %v3442
        %3463 = vst [vmem:[%s444 + $0x50] sm:$0xff] %v3443
        %3464 = vst [vmem:[%s444 + $0x58] sm:$0xff] %v3444
        %3465 = vst [vmem:[%s444 + $0x60] sm:$0xff] %v3445
        %3466 = vst [vmem:[%s444 + $0x68] sm:$0xff] %v3446
        %3467 = vst [vmem:[%s444 + $0x70] sm:$0xff] %v3447
        %3468 = vst [vmem:[%s444 + $0x78] sm:$0xff] %v3448
        %3469 = vst [vmem:[%s444 + $0x80] sm:$0xff] %v3449
        %3470 = vst [vmem:[%s444 + $0x88] sm:$0xff] %v3450
        %3471 = vst [vmem:[%s444 + $0x90] sm:$0xff] %v3451
        %3472 = vst [vmem:[%s444 + $0x98] sm:$0xff] %v3452
        %v3473 = vld [vmem:[#allocation3 + $0x28] sm:$0xff]
        %v3474 = vld [vmem:[#allocation3 + $0x30] sm:$0xff]
        %v3475 = vld [vmem:[#allocation3 + $0x38] sm:$0xff]
        %v3476 = vld [vmem:[#allocation3 + $0x40] sm:$0xff]
        %v3477 = vld [vmem:[#allocation3 + $0x48] sm:$0xff]
        %v3478 = vld [vmem:[#allocation3 + $0x50] sm:$0xff]
        %v3479 = vld [vmem:[#allocation3 + $0x58] sm:$0xff]
        %v3480 = vld [vmem:[#allocation3 + $0x60] sm:$0xff]
        %v3481 = vld [vmem:[#allocation3 + $0x68] sm:$0xff]
        %v3482 = vld [vmem:[#allocation3 + $0x70] sm:$0xff]
        %v3483 = vld [vmem:[#allocation3 + $0x78] sm:$0xff]
        %v3484 = vld [vmem:[#allocation3 + $0x80] sm:$0xff]
        %v3485 = vld [vmem:[#allocation3 + $0x88] sm:$0xff]
        %v3486 = vld [vmem:[#allocation3 + $0x90] sm:$0xff]
        %v3487 = vld [vmem:[#allocation3 + $0x98] sm:$0xff]
        %v3488 = vld [vmem:[#allocation3 + $0xa0] sm:$0xff]
        %v3489 = vld [vmem:[#allocation3 + $0xa8] sm:$0xff]
        %v3490 = vld [vmem:[#allocation3 + $0xb0] sm:$0xff]
        %v3491 = vld [vmem:[#allocation3 + $0xb8] sm:$0xff]
        %v3492 = vld [vmem:[#allocation3 + $0xc0] sm:$0xff]
        %s3493 = scalar_lea.vmem %s4, 896
        %v3494 = vld [vmem:[%s3493] sm:$0xff]
        %v3495 = vld [vmem:[%s3493 + $0x8] sm:$0xff]
        %v3496 = vld [vmem:[%s3493 + $0x10] sm:$0xff]
        %v3497 = vld [vmem:[%s3493 + $0x18] sm:$0xff]
        %v3498 = vld [vmem:[%s3493 + $0x20] sm:$0xff]
        %v3499 = vld [vmem:[%s3493 + $0x28] sm:$0xff]
        %v3500 = vld [vmem:[%s3493 + $0x30] sm:$0xff]
        %v3501 = vld [vmem:[%s3493 + $0x38] sm:$0xff]
        %v3502 = vld [vmem:[%s3493 + $0x40] sm:$0xff]
        %v3503 = vld [vmem:[%s3493 + $0x48] sm:$0xff]
        %v3504 = vld [vmem:[%s3493 + $0x50] sm:$0xff]
        %v3505 = vld [vmem:[%s3493 + $0x58] sm:$0xff]
        %v3506 = vld [vmem:[%s3493 + $0x60] sm:$0xff]
        %v3507 = vld [vmem:[%s3493 + $0x68] sm:$0xff]
        %v3508 = vld [vmem:[%s3493 + $0x70] sm:$0xff]
        %v3509 = vld [vmem:[%s3493 + $0x78] sm:$0xff]
        %3510 = vmatprep.subr.mxu0 0.0
        %3511 = vmatpush1.msra.mxu0 %v3509
        %3512 = vmatprep.subr.mxu0 0.0
        %3513 = vmatpush1.msra.mxu0 %v3508
        %3514 = vmatprep.subr.mxu0 0.0
        %3515 = vmatpush1.msra.mxu0 %v3507
        %3516 = vmatprep.subr.mxu0 0.0
        %3517 = vmatpush1.msra.mxu0 %v3506
        %3518 = vmatprep.subr.mxu0 0.0
        %3519 = vmatpush1.msra.mxu0 %v3505
        %3520 = vmatprep.subr.mxu0 0.0
        %3521 = vmatpush1.msra.mxu0 %v3504
        %3522 = vmatprep.subr.mxu0 0.0
        %3523 = vmatpush1.msra.mxu0 %v3503
        %3524 = vmatprep.subr.mxu0 0.0
        %3525 = vmatpush1.msra.mxu0 %v3502
        %3526 = vmatprep.subr.mxu0 0.0
        %3527 = vmatpush1.msra.mxu0 %v3501
        %3528 = vmatprep.subr.mxu0 0.0
        %3529 = vmatpush1.msra.mxu0 %v3500
        %3530 = vmatprep.subr.mxu0 0.0
        %3531 = vmatpush1.msra.mxu0 %v3499
        %3532 = vmatprep.subr.mxu0 0.0
        %3533 = vmatpush1.msra.mxu0 %v3498
        %3534 = vmatprep.subr.mxu0 0.0
        %3535 = vmatpush1.msra.mxu0 %v3497
        %3536 = vmatprep.subr.mxu0 0.0
        %3537 = vmatpush1.msra.mxu0 %v3496
        %3538 = vmatprep.subr.mxu0 0.0
        %3539 = vmatpush1.msra.mxu0 %v3495
        %3540 = vmatprep.subr.mxu0 0.0
        %3541 = vmatpush1.msra.mxu0 %v3494
        %3542 = vmatprep.subr.mxu0 0.0
        %3543 = vmatpush2.msra.mxu0 0.0
        %3544 = vmatprep.subr.mxu0 0.0
        %3545 = vmatpush2.msra.mxu0 0.0
        %3546 = vmatprep.subr.mxu0 0.0
        %3547 = vmatpush2.msra.mxu0 0.0
        %3548 = vmatprep.subr.mxu0 0.0
        %3549 = vmatpush2.msra.mxu0 0.0
        %3550 = vmatprep.subr.mxu0 0.0
        %3551 = vmatpush2.msra.mxu0 0.0
        %3552 = vmatprep.subr.mxu0 0.0
        %3553 = vmatpush2.msra.mxu0 0.0
        %3554 = vmatprep.subr.mxu0 0.0
        %3555 = vmatpush2.msra.mxu0 0.0
        %3556 = vmatprep.subr.mxu0 0.0
        %3557 = vmatpush2.msra.mxu0 0.0
        %3558 = vmatprep.subr.mxu0 0.0
        %3559 = vmatpush2.msra.mxu0 0.0
        %3560 = vmatprep.subr.mxu0 0.0
        %3561 = vmatpush2.msra.mxu0 0.0
        %3562 = vmatprep.subr.mxu0 0.0
        %3563 = vmatpush2.msra.mxu0 0.0
        %3564 = vmatprep.subr.mxu0 0.0
        %3565 = vmatpush2.msra.mxu0 0.0
        %3566 = vmatprep.subr.mxu0 0.0
        %3567 = vmatpush2.msra.mxu0 0.0
        %3568 = vmatprep.subr.mxu0 0.0
        %3569 = vmatpush2.msra.mxu0 0.0
        %3570 = vmatprep.subr.mxu0 0.0
        %3571 = vmatpush2.msra.mxu0 0.0
        %3572 = vmatprep.subr.mxu0 0.0
        %3573 = vmatpush2.msra.mxu0 0.0
        %3574 = vmatprep.mubr.f32.mxu0 0.0
        %3575 = vmatmul.mubr.f32.gmra.mxu0 %v3473
        %v3576 = vpop.f32.mrf.mxu0
        %v3577 = vadd.f32 0.0, %v3576
        %v3578 = vpop.f32.mrf.mxu0
        %3579 = vmatprep.mubr.f32.mxu0 0.0
        %3580 = vmatmul.mubr.f32.gmra.mxu0 %v3474
        %v3581 = vpop.f32.mrf.mxu0
        %v3582 = vadd.f32 0.0, %v3581
        %v3583 = vpop.f32.mrf.mxu0
        %3584 = vmatprep.mubr.f32.mxu0 0.0
        %3585 = vmatmul.mubr.f32.gmra.mxu0 %v3475
        %v3586 = vpop.f32.mrf.mxu0
        %v3587 = vadd.f32 0.0, %v3586
        %v3588 = vpop.f32.mrf.mxu0
        %3589 = vmatprep.mubr.f32.mxu0 0.0
        %3590 = vmatmul.mubr.f32.gmra.mxu0 %v3476
        %v3591 = vpop.f32.mrf.mxu0
        %v3592 = vadd.f32 0.0, %v3591
        %v3593 = vpop.f32.mrf.mxu0
        %3594 = vmatprep.mubr.f32.mxu0 0.0
        %3595 = vmatmul.mubr.f32.gmra.mxu0 %v3477
        %v3596 = vpop.f32.mrf.mxu0
        %v3597 = vadd.f32 0.0, %v3596
        %v3598 = vpop.f32.mrf.mxu0
        %3599 = vmatprep.mubr.f32.mxu0 0.0
        %3600 = vmatmul.mubr.f32.gmra.mxu0 %v3478
        %v3601 = vpop.f32.mrf.mxu0
        %v3602 = vadd.f32 0.0, %v3601
        %v3603 = vpop.f32.mrf.mxu0
        %3604 = vmatprep.mubr.f32.mxu0 0.0
        %3605 = vmatmul.mubr.f32.gmra.mxu0 %v3479
        %v3606 = vpop.f32.mrf.mxu0
        %v3607 = vadd.f32 0.0, %v3606
        %v3608 = vpop.f32.mrf.mxu0
        %3609 = vmatprep.mubr.f32.mxu0 0.0
        %3610 = vmatmul.mubr.f32.gmra.mxu0 %v3480
        %v3611 = vpop.f32.mrf.mxu0
        %v3612 = vadd.f32 0.0, %v3611
        %v3613 = vpop.f32.mrf.mxu0
        %3614 = vmatprep.mubr.f32.mxu0 0.0
        %3615 = vmatmul.mubr.f32.gmra.mxu0 %v3481
        %v3616 = vpop.f32.mrf.mxu0
        %v3617 = vadd.f32 0.0, %v3616
        %v3618 = vpop.f32.mrf.mxu0
        %3619 = vmatprep.mubr.f32.mxu0 0.0
        %3620 = vmatmul.mubr.f32.gmra.mxu0 %v3482
        %v3621 = vpop.f32.mrf.mxu0
        %v3622 = vadd.f32 0.0, %v3621
        %v3623 = vpop.f32.mrf.mxu0
        %3624 = vmatprep.mubr.f32.mxu0 0.0
        %3625 = vmatmul.mubr.f32.gmra.mxu0 %v3483
        %v3626 = vpop.f32.mrf.mxu0
        %v3627 = vadd.f32 0.0, %v3626
        %v3628 = vpop.f32.mrf.mxu0
        %3629 = vmatprep.mubr.f32.mxu0 0.0
        %3630 = vmatmul.mubr.f32.gmra.mxu0 %v3484
        %v3631 = vpop.f32.mrf.mxu0
        %v3632 = vadd.f32 0.0, %v3631
        %v3633 = vpop.f32.mrf.mxu0
        %3634 = vmatprep.mubr.f32.mxu0 0.0
        %3635 = vmatmul.mubr.f32.gmra.mxu0 %v3485
        %v3636 = vpop.f32.mrf.mxu0
        %v3637 = vadd.f32 0.0, %v3636
        %v3638 = vpop.f32.mrf.mxu0
        %3639 = vmatprep.mubr.f32.mxu0 0.0
        %3640 = vmatmul.mubr.f32.gmra.mxu0 %v3486
        %v3641 = vpop.f32.mrf.mxu0
        %v3642 = vadd.f32 0.0, %v3641
        %v3643 = vpop.f32.mrf.mxu0
        %3644 = vmatprep.mubr.f32.mxu0 0.0
        %3645 = vmatmul.mubr.f32.gmra.mxu0 %v3487
        %v3646 = vpop.f32.mrf.mxu0
        %v3647 = vadd.f32 0.0, %v3646
        %v3648 = vpop.f32.mrf.mxu0
        %3649 = vmatprep.mubr.f32.mxu0 0.0
        %3650 = vmatmul.mubr.f32.gmra.mxu0 %v3488
        %v3651 = vpop.f32.mrf.mxu0
        %v3652 = vadd.f32 0.0, %v3651
        %v3653 = vpop.f32.mrf.mxu0
        %3654 = vmatprep.mubr.f32.mxu0 0.0
        %3655 = vmatmul.mubr.f32.gmra.mxu0 %v3489
        %v3656 = vpop.f32.mrf.mxu0
        %v3657 = vadd.f32 0.0, %v3656
        %v3658 = vpop.f32.mrf.mxu0
        %3659 = vmatprep.mubr.f32.mxu0 0.0
        %3660 = vmatmul.mubr.f32.gmra.mxu0 %v3490
        %v3661 = vpop.f32.mrf.mxu0
        %v3662 = vadd.f32 0.0, %v3661
        %v3663 = vpop.f32.mrf.mxu0
        %3664 = vmatprep.mubr.f32.mxu0 0.0
        %3665 = vmatmul.mubr.f32.gmra.mxu0 %v3491
        %v3666 = vpop.f32.mrf.mxu0
        %v3667 = vadd.f32 0.0, %v3666
        %v3668 = vpop.f32.mrf.mxu0
        %3669 = vmatprep.mubr.f32.mxu0 0.0
        %3670 = vmatmul.mubr.f32.gmra.mxu0 %v3492
        %v3671 = vpop.f32.mrf.mxu0
        %v3672 = vadd.f32 0.0, %v3671
        %v3673 = vpop.f32.mrf.mxu0
        %3674 = vdwg.mxu0
        %v3675 = vld [vmem:[%s444] sm:$0xff]
        %v3676 = vld [vmem:[%s444 + $0x8] sm:$0xff]
        %v3677 = vld [vmem:[%s444 + $0x10] sm:$0xff]
        %v3678 = vld [vmem:[%s444 + $0x18] sm:$0xff]
        %v3679 = vld [vmem:[%s444 + $0x20] sm:$0xff]
        %v3680 = vld [vmem:[%s444 + $0x28] sm:$0xff]
        %v3681 = vld [vmem:[%s444 + $0x30] sm:$0xff]
        %v3682 = vld [vmem:[%s444 + $0x38] sm:$0xff]
        %v3683 = vld [vmem:[%s444 + $0x40] sm:$0xff]
        %v3684 = vld [vmem:[%s444 + $0x48] sm:$0xff]
        %v3685 = vld [vmem:[%s444 + $0x50] sm:$0xff]
        %v3686 = vld [vmem:[%s444 + $0x58] sm:$0xff]
        %v3687 = vld [vmem:[%s444 + $0x60] sm:$0xff]
        %v3688 = vld [vmem:[%s444 + $0x68] sm:$0xff]
        %v3689 = vld [vmem:[%s444 + $0x70] sm:$0xff]
        %v3690 = vld [vmem:[%s444 + $0x78] sm:$0xff]
        %v3691 = vld [vmem:[%s444 + $0x80] sm:$0xff]
        %v3692 = vld [vmem:[%s444 + $0x88] sm:$0xff]
        %v3693 = vld [vmem:[%s444 + $0x90] sm:$0xff]
        %v3694 = vld [vmem:[%s444 + $0x98] sm:$0xff]
        %v3695 = vadd.f32 %v3675, %v3577
        %v3696 = vadd.f32 %v3676, %v3582
        %v3697 = vadd.f32 %v3677, %v3587
        %v3698 = vadd.f32 %v3678, %v3592
        %v3699 = vadd.f32 %v3679, %v3597
        %v3700 = vadd.f32 %v3680, %v3602
        %v3701 = vadd.f32 %v3681, %v3607
        %v3702 = vadd.f32 %v3682, %v3612
        %v3703 = vadd.f32 %v3683, %v3617
        %v3704 = vadd.f32 %v3684, %v3622
        %v3705 = vadd.f32 %v3685, %v3627
        %v3706 = vadd.f32 %v3686, %v3632
        %v3707 = vadd.f32 %v3687, %v3637
        %v3708 = vadd.f32 %v3688, %v3642
        %v3709 = vadd.f32 %v3689, %v3647
        %v3710 = vadd.f32 %v3690, %v3652
        %v3711 = vadd.f32 %v3691, %v3657
        %v3712 = vadd.f32 %v3692, %v3662
        %v3713 = vadd.f32 %v3693, %v3667
        %v3714 = vadd.f32 %v3694, %v3672
        %3715 = vst [vmem:[%s444] sm:$0xff] %v3695
        %3716 = vst [vmem:[%s444 + $0x8] sm:$0xff] %v3696
        %3717 = vst [vmem:[%s444 + $0x10] sm:$0xff] %v3697
        %3718 = vst [vmem:[%s444 + $0x18] sm:$0xff] %v3698
        %3719 = vst [vmem:[%s444 + $0x20] sm:$0xff] %v3699
        %3720 = vst [vmem:[%s444 + $0x28] sm:$0xff] %v3700
        %3721 = vst [vmem:[%s444 + $0x30] sm:$0xff] %v3701
        %3722 = vst [vmem:[%s444 + $0x38] sm:$0xff] %v3702
        %3723 = vst [vmem:[%s444 + $0x40] sm:$0xff] %v3703
        %3724 = vst [vmem:[%s444 + $0x48] sm:$0xff] %v3704
        %3725 = vst [vmem:[%s444 + $0x50] sm:$0xff] %v3705
        %3726 = vst [vmem:[%s444 + $0x58] sm:$0xff] %v3706
        %3727 = vst [vmem:[%s444 + $0x60] sm:$0xff] %v3707
        %3728 = vst [vmem:[%s444 + $0x68] sm:$0xff] %v3708
        %3729 = vst [vmem:[%s444 + $0x70] sm:$0xff] %v3709
        %3730 = vst [vmem:[%s444 + $0x78] sm:$0xff] %v3710
        %3731 = vst [vmem:[%s444 + $0x80] sm:$0xff] %v3711
        %3732 = vst [vmem:[%s444 + $0x88] sm:$0xff] %v3712
        %3733 = vst [vmem:[%s444 + $0x90] sm:$0xff] %v3713
        %3734 = vst [vmem:[%s444 + $0x98] sm:$0xff] %v3714
        %v3735 = vld [vmem:[#allocation3 + $0x29] sm:$0xff]
        %v3736 = vld [vmem:[#allocation3 + $0x31] sm:$0xff]
        %v3737 = vld [vmem:[#allocation3 + $0x39] sm:$0xff]
        %v3738 = vld [vmem:[#allocation3 + $0x41] sm:$0xff]
        %v3739 = vld [vmem:[#allocation3 + $0x49] sm:$0xff]
        %v3740 = vld [vmem:[#allocation3 + $0x51] sm:$0xff]
        %v3741 = vld [vmem:[#allocation3 + $0x59] sm:$0xff]
        %v3742 = vld [vmem:[#allocation3 + $0x61] sm:$0xff]
        %v3743 = vld [vmem:[#allocation3 + $0x69] sm:$0xff]
        %v3744 = vld [vmem:[#allocation3 + $0x71] sm:$0xff]
        %v3745 = vld [vmem:[#allocation3 + $0x79] sm:$0xff]
        %v3746 = vld [vmem:[#allocation3 + $0x81] sm:$0xff]
        %v3747 = vld [vmem:[#allocation3 + $0x89] sm:$0xff]
        %v3748 = vld [vmem:[#allocation3 + $0x91] sm:$0xff]
        %v3749 = vld [vmem:[#allocation3 + $0x99] sm:$0xff]
        %v3750 = vld [vmem:[#allocation3 + $0xa1] sm:$0xff]
        %v3751 = vld [vmem:[#allocation3 + $0xa9] sm:$0xff]
        %v3752 = vld [vmem:[#allocation3 + $0xb1] sm:$0xff]
        %v3753 = vld [vmem:[#allocation3 + $0xb9] sm:$0xff]
        %v3754 = vld [vmem:[#allocation3 + $0xc1] sm:$0xff]
        %s3755 = scalar_lea.vmem %s4, 1024
        %v3756 = vld [vmem:[%s3755] sm:$0xff]
        %v3757 = vld [vmem:[%s3755 + $0x8] sm:$0xff]
        %v3758 = vld [vmem:[%s3755 + $0x10] sm:$0xff]
        %v3759 = vld [vmem:[%s3755 + $0x18] sm:$0xff]
        %v3760 = vld [vmem:[%s3755 + $0x20] sm:$0xff]
        %v3761 = vld [vmem:[%s3755 + $0x28] sm:$0xff]
        %v3762 = vld [vmem:[%s3755 + $0x30] sm:$0xff]
        %v3763 = vld [vmem:[%s3755 + $0x38] sm:$0xff]
        %v3764 = vld [vmem:[%s3755 + $0x40] sm:$0xff]
        %v3765 = vld [vmem:[%s3755 + $0x48] sm:$0xff]
        %v3766 = vld [vmem:[%s3755 + $0x50] sm:$0xff]
        %v3767 = vld [vmem:[%s3755 + $0x58] sm:$0xff]
        %v3768 = vld [vmem:[%s3755 + $0x60] sm:$0xff]
        %v3769 = vld [vmem:[%s3755 + $0x68] sm:$0xff]
        %v3770 = vld [vmem:[%s3755 + $0x70] sm:$0xff]
        %v3771 = vld [vmem:[%s3755 + $0x78] sm:$0xff]
        %3772 = vmatprep.subr.mxu0 0.0
        %3773 = vmatpush1.msra.mxu0 %v3771
        %3774 = vmatprep.subr.mxu0 0.0
        %3775 = vmatpush1.msra.mxu0 %v3770
        %3776 = vmatprep.subr.mxu0 0.0
        %3777 = vmatpush1.msra.mxu0 %v3769
        %3778 = vmatprep.subr.mxu0 0.0
        %3779 = vmatpush1.msra.mxu0 %v3768
        %3780 = vmatprep.subr.mxu0 0.0
        %3781 = vmatpush1.msra.mxu0 %v3767
        %3782 = vmatprep.subr.mxu0 0.0
        %3783 = vmatpush1.msra.mxu0 %v3766
        %3784 = vmatprep.subr.mxu0 0.0
        %3785 = vmatpush1.msra.mxu0 %v3765
        %3786 = vmatprep.subr.mxu0 0.0
        %3787 = vmatpush1.msra.mxu0 %v3764
        %3788 = vmatprep.subr.mxu0 0.0
        %3789 = vmatpush1.msra.mxu0 %v3763
        %3790 = vmatprep.subr.mxu0 0.0
        %3791 = vmatpush1.msra.mxu0 %v3762
        %3792 = vmatprep.subr.mxu0 0.0
        %3793 = vmatpush1.msra.mxu0 %v3761
        %3794 = vmatprep.subr.mxu0 0.0
        %3795 = vmatpush1.msra.mxu0 %v3760
        %3796 = vmatprep.subr.mxu0 0.0
        %3797 = vmatpush1.msra.mxu0 %v3759
        %3798 = vmatprep.subr.mxu0 0.0
        %3799 = vmatpush1.msra.mxu0 %v3758
        %3800 = vmatprep.subr.mxu0 0.0
        %3801 = vmatpush1.msra.mxu0 %v3757
        %3802 = vmatprep.subr.mxu0 0.0
        %3803 = vmatpush1.msra.mxu0 %v3756
        %3804 = vmatprep.subr.mxu0 0.0
        %3805 = vmatpush2.msra.mxu0 0.0
        %3806 = vmatprep.subr.mxu0 0.0
        %3807 = vmatpush2.msra.mxu0 0.0
        %3808 = vmatprep.subr.mxu0 0.0
        %3809 = vmatpush2.msra.mxu0 0.0
        %3810 = vmatprep.subr.mxu0 0.0
        %3811 = vmatpush2.msra.mxu0 0.0
        %3812 = vmatprep.subr.mxu0 0.0
        %3813 = vmatpush2.msra.mxu0 0.0
        %3814 = vmatprep.subr.mxu0 0.0
        %3815 = vmatpush2.msra.mxu0 0.0
        %3816 = vmatprep.subr.mxu0 0.0
        %3817 = vmatpush2.msra.mxu0 0.0
        %3818 = vmatprep.subr.mxu0 0.0
        %3819 = vmatpush2.msra.mxu0 0.0
        %3820 = vmatprep.subr.mxu0 0.0
        %3821 = vmatpush2.msra.mxu0 0.0
        %3822 = vmatprep.subr.mxu0 0.0
        %3823 = vmatpush2.msra.mxu0 0.0
        %3824 = vmatprep.subr.mxu0 0.0
        %3825 = vmatpush2.msra.mxu0 0.0
        %3826 = vmatprep.subr.mxu0 0.0
        %3827 = vmatpush2.msra.mxu0 0.0
        %3828 = vmatprep.subr.mxu0 0.0
        %3829 = vmatpush2.msra.mxu0 0.0
        %3830 = vmatprep.subr.mxu0 0.0
        %3831 = vmatpush2.msra.mxu0 0.0
        %3832 = vmatprep.subr.mxu0 0.0
        %3833 = vmatpush2.msra.mxu0 0.0
        %3834 = vmatprep.subr.mxu0 0.0
        %3835 = vmatpush2.msra.mxu0 0.0
        %3836 = vmatprep.mubr.f32.mxu0 0.0
        %3837 = vmatmul.mubr.f32.gmra.mxu0 %v3735
        %v3838 = vpop.f32.mrf.mxu0
        %v3839 = vadd.f32 0.0, %v3838
        %v3840 = vpop.f32.mrf.mxu0
        %3841 = vmatprep.mubr.f32.mxu0 0.0
        %3842 = vmatmul.mubr.f32.gmra.mxu0 %v3736
        %v3843 = vpop.f32.mrf.mxu0
        %v3844 = vadd.f32 0.0, %v3843
        %v3845 = vpop.f32.mrf.mxu0
        %3846 = vmatprep.mubr.f32.mxu0 0.0
        %3847 = vmatmul.mubr.f32.gmra.mxu0 %v3737
        %v3848 = vpop.f32.mrf.mxu0
        %v3849 = vadd.f32 0.0, %v3848
        %v3850 = vpop.f32.mrf.mxu0
        %3851 = vmatprep.mubr.f32.mxu0 0.0
        %3852 = vmatmul.mubr.f32.gmra.mxu0 %v3738
        %v3853 = vpop.f32.mrf.mxu0
        %v3854 = vadd.f32 0.0, %v3853
        %v3855 = vpop.f32.mrf.mxu0
        %3856 = vmatprep.mubr.f32.mxu0 0.0
        %3857 = vmatmul.mubr.f32.gmra.mxu0 %v3739
        %v3858 = vpop.f32.mrf.mxu0
        %v3859 = vadd.f32 0.0, %v3858
        %v3860 = vpop.f32.mrf.mxu0
        %3861 = vmatprep.mubr.f32.mxu0 0.0
        %3862 = vmatmul.mubr.f32.gmra.mxu0 %v3740
        %v3863 = vpop.f32.mrf.mxu0
        %v3864 = vadd.f32 0.0, %v3863
        %v3865 = vpop.f32.mrf.mxu0
        %3866 = vmatprep.mubr.f32.mxu0 0.0
        %3867 = vmatmul.mubr.f32.gmra.mxu0 %v3741
        %v3868 = vpop.f32.mrf.mxu0
        %v3869 = vadd.f32 0.0, %v3868
        %v3870 = vpop.f32.mrf.mxu0
        %3871 = vmatprep.mubr.f32.mxu0 0.0
        %3872 = vmatmul.mubr.f32.gmra.mxu0 %v3742
        %v3873 = vpop.f32.mrf.mxu0
        %v3874 = vadd.f32 0.0, %v3873
        %v3875 = vpop.f32.mrf.mxu0
        %3876 = vmatprep.mubr.f32.mxu0 0.0
        %3877 = vmatmul.mubr.f32.gmra.mxu0 %v3743
        %v3878 = vpop.f32.mrf.mxu0
        %v3879 = vadd.f32 0.0, %v3878
        %v3880 = vpop.f32.mrf.mxu0
        %3881 = vmatprep.mubr.f32.mxu0 0.0
        %3882 = vmatmul.mubr.f32.gmra.mxu0 %v3744
        %v3883 = vpop.f32.mrf.mxu0
        %v3884 = vadd.f32 0.0, %v3883
        %v3885 = vpop.f32.mrf.mxu0
        %3886 = vmatprep.mubr.f32.mxu0 0.0
        %3887 = vmatmul.mubr.f32.gmra.mxu0 %v3745
        %v3888 = vpop.f32.mrf.mxu0
        %v3889 = vadd.f32 0.0, %v3888
        %v3890 = vpop.f32.mrf.mxu0
        %3891 = vmatprep.mubr.f32.mxu0 0.0
        %3892 = vmatmul.mubr.f32.gmra.mxu0 %v3746
        %v3893 = vpop.f32.mrf.mxu0
        %v3894 = vadd.f32 0.0, %v3893
        %v3895 = vpop.f32.mrf.mxu0
        %3896 = vmatprep.mubr.f32.mxu0 0.0
        %3897 = vmatmul.mubr.f32.gmra.mxu0 %v3747
        %v3898 = vpop.f32.mrf.mxu0
        %v3899 = vadd.f32 0.0, %v3898
        %v3900 = vpop.f32.mrf.mxu0
        %3901 = vmatprep.mubr.f32.mxu0 0.0
        %3902 = vmatmul.mubr.f32.gmra.mxu0 %v3748
        %v3903 = vpop.f32.mrf.mxu0
        %v3904 = vadd.f32 0.0, %v3903
        %v3905 = vpop.f32.mrf.mxu0
        %3906 = vmatprep.mubr.f32.mxu0 0.0
        %3907 = vmatmul.mubr.f32.gmra.mxu0 %v3749
        %v3908 = vpop.f32.mrf.mxu0
        %v3909 = vadd.f32 0.0, %v3908
        %v3910 = vpop.f32.mrf.mxu0
        %3911 = vmatprep.mubr.f32.mxu0 0.0
        %3912 = vmatmul.mubr.f32.gmra.mxu0 %v3750
        %v3913 = vpop.f32.mrf.mxu0
        %v3914 = vadd.f32 0.0, %v3913
        %v3915 = vpop.f32.mrf.mxu0
        %3916 = vmatprep.mubr.f32.mxu0 0.0
        %3917 = vmatmul.mubr.f32.gmra.mxu0 %v3751
        %v3918 = vpop.f32.mrf.mxu0
        %v3919 = vadd.f32 0.0, %v3918
        %v3920 = vpop.f32.mrf.mxu0
        %3921 = vmatprep.mubr.f32.mxu0 0.0
        %3922 = vmatmul.mubr.f32.gmra.mxu0 %v3752
        %v3923 = vpop.f32.mrf.mxu0
        %v3924 = vadd.f32 0.0, %v3923
        %v3925 = vpop.f32.mrf.mxu0
        %3926 = vmatprep.mubr.f32.mxu0 0.0
        %3927 = vmatmul.mubr.f32.gmra.mxu0 %v3753
        %v3928 = vpop.f32.mrf.mxu0
        %v3929 = vadd.f32 0.0, %v3928
        %v3930 = vpop.f32.mrf.mxu0
        %3931 = vmatprep.mubr.f32.mxu0 0.0
        %3932 = vmatmul.mubr.f32.gmra.mxu0 %v3754
        %v3933 = vpop.f32.mrf.mxu0
        %v3934 = vadd.f32 0.0, %v3933
        %v3935 = vpop.f32.mrf.mxu0
        %3936 = vdwg.mxu0
        %v3937 = vld [vmem:[%s444] sm:$0xff]
        %v3938 = vld [vmem:[%s444 + $0x8] sm:$0xff]
        %v3939 = vld [vmem:[%s444 + $0x10] sm:$0xff]
        %v3940 = vld [vmem:[%s444 + $0x18] sm:$0xff]
        %v3941 = vld [vmem:[%s444 + $0x20] sm:$0xff]
        %v3942 = vld [vmem:[%s444 + $0x28] sm:$0xff]
        %v3943 = vld [vmem:[%s444 + $0x30] sm:$0xff]
        %v3944 = vld [vmem:[%s444 + $0x38] sm:$0xff]
        %v3945 = vld [vmem:[%s444 + $0x40] sm:$0xff]
        %v3946 = vld [vmem:[%s444 + $0x48] sm:$0xff]
        %v3947 = vld [vmem:[%s444 + $0x50] sm:$0xff]
        %v3948 = vld [vmem:[%s444 + $0x58] sm:$0xff]
        %v3949 = vld [vmem:[%s444 + $0x60] sm:$0xff]
        %v3950 = vld [vmem:[%s444 + $0x68] sm:$0xff]
        %v3951 = vld [vmem:[%s444 + $0x70] sm:$0xff]
        %v3952 = vld [vmem:[%s444 + $0x78] sm:$0xff]
        %v3953 = vld [vmem:[%s444 + $0x80] sm:$0xff]
        %v3954 = vld [vmem:[%s444 + $0x88] sm:$0xff]
        %v3955 = vld [vmem:[%s444 + $0x90] sm:$0xff]
        %v3956 = vld [vmem:[%s444 + $0x98] sm:$0xff]
        %v3957 = vadd.f32 %v3937, %v3839
        %v3958 = vadd.f32 %v3938, %v3844
        %v3959 = vadd.f32 %v3939, %v3849
        %v3960 = vadd.f32 %v3940, %v3854
        %v3961 = vadd.f32 %v3941, %v3859
        %v3962 = vadd.f32 %v3942, %v3864
        %v3963 = vadd.f32 %v3943, %v3869
        %v3964 = vadd.f32 %v3944, %v3874
        %v3965 = vadd.f32 %v3945, %v3879
        %v3966 = vadd.f32 %v3946, %v3884
        %v3967 = vadd.f32 %v3947, %v3889
        %v3968 = vadd.f32 %v3948, %v3894
        %v3969 = vadd.f32 %v3949, %v3899
        %v3970 = vadd.f32 %v3950, %v3904
        %v3971 = vadd.f32 %v3951, %v3909
        %v3972 = vadd.f32 %v3952, %v3914
        %v3973 = vadd.f32 %v3953, %v3919
        %v3974 = vadd.f32 %v3954, %v3924
        %v3975 = vadd.f32 %v3955, %v3929
        %v3976 = vadd.f32 %v3956, %v3934
        %3977 = vst [vmem:[%s444] sm:$0xff] %v3957
        %3978 = vst [vmem:[%s444 + $0x8] sm:$0xff] %v3958
        %3979 = vst [vmem:[%s444 + $0x10] sm:$0xff] %v3959
        %3980 = vst [vmem:[%s444 + $0x18] sm:$0xff] %v3960
        %3981 = vst [vmem:[%s444 + $0x20] sm:$0xff] %v3961
        %3982 = vst [vmem:[%s444 + $0x28] sm:$0xff] %v3962
        %3983 = vst [vmem:[%s444 + $0x30] sm:$0xff] %v3963
        %3984 = vst [vmem:[%s444 + $0x38] sm:$0xff] %v3964
        %3985 = vst [vmem:[%s444 + $0x40] sm:$0xff] %v3965
        %3986 = vst [vmem:[%s444 + $0x48] sm:$0xff] %v3966
        %3987 = vst [vmem:[%s444 + $0x50] sm:$0xff] %v3967
        %3988 = vst [vmem:[%s444 + $0x58] sm:$0xff] %v3968
        %3989 = vst [vmem:[%s444 + $0x60] sm:$0xff] %v3969
        %3990 = vst [vmem:[%s444 + $0x68] sm:$0xff] %v3970
        %3991 = vst [vmem:[%s444 + $0x70] sm:$0xff] %v3971
        %3992 = vst [vmem:[%s444 + $0x78] sm:$0xff] %v3972
        %3993 = vst [vmem:[%s444 + $0x80] sm:$0xff] %v3973
        %3994 = vst [vmem:[%s444 + $0x88] sm:$0xff] %v3974
        %3995 = vst [vmem:[%s444 + $0x90] sm:$0xff] %v3975
        %3996 = vst [vmem:[%s444 + $0x98] sm:$0xff] %v3976
        %v3997 = vld [vmem:[%s444] sm:$0xff]
        %v3998 = vld [vmem:[%s444 + $0x8] sm:$0xff]
        %v3999 = vld [vmem:[%s444 + $0x10] sm:$0xff]
        %v4000 = vld [vmem:[%s444 + $0x18] sm:$0xff]
        %v4001 = vld [vmem:[%s444 + $0x20] sm:$0xff]
        %v4002 = vld [vmem:[%s444 + $0x28] sm:$0xff]
        %v4003 = vld [vmem:[%s444 + $0x30] sm:$0xff]
        %v4004 = vld [vmem:[%s444 + $0x38] sm:$0xff]
        %v4005 = vld [vmem:[%s444 + $0x40] sm:$0xff]
        %v4006 = vld [vmem:[%s444 + $0x48] sm:$0xff]
        %v4007 = vld [vmem:[%s444 + $0x50] sm:$0xff]
        %v4008 = vld [vmem:[%s444 + $0x58] sm:$0xff]
        %v4009 = vld [vmem:[%s444 + $0x60] sm:$0xff]
        %v4010 = vld [vmem:[%s444 + $0x68] sm:$0xff]
        %v4011 = vld [vmem:[%s444 + $0x70] sm:$0xff]
        %v4012 = vld [vmem:[%s444 + $0x78] sm:$0xff]
        %v4013 = vld [vmem:[%s444 + $0x80] sm:$0xff]
        %v4014 = vld [vmem:[%s444 + $0x88] sm:$0xff]
        %v4015 = vld [vmem:[%s444 + $0x90] sm:$0xff]
        %v4016 = vld [vmem:[%s444 + $0x98] sm:$0xff]
        %v4017 = vld [vmem:[%s5] sm:$0x1]
        %v4019 = vlaneseq
        %v4020 = vshrl.u32 %v4019, 7
        %v4021 = vsub.s32 0, %v4020
        %v4022 = vrot.slane %v4017, %v4021
        %v4024 = vadd.f32 %v3997, %v4022
        %v4025 = vadd.f32 %v3998, %v4022
        %v4026 = vadd.f32 %v3999, %v4022
        %v4027 = vadd.f32 %v4000, %v4022
        %v4028 = vadd.f32 %v4001, %v4022
        %v4029 = vadd.f32 %v4002, %v4022
        %v4030 = vadd.f32 %v4003, %v4022
        %v4031 = vadd.f32 %v4004, %v4022
        %v4032 = vadd.f32 %v4005, %v4022
        %v4033 = vadd.f32 %v4006, %v4022
        %v4034 = vadd.f32 %v4007, %v4022
        %v4035 = vadd.f32 %v4008, %v4022
        %v4036 = vadd.f32 %v4009, %v4022
        %v4037 = vadd.f32 %v4010, %v4022
        %v4038 = vadd.f32 %v4011, %v4022
        %v4039 = vadd.f32 %v4012, %v4022
        %v4040 = vadd.f32 %v4013, %v4022
        %v4041 = vadd.f32 %v4014, %v4022
        %v4042 = vadd.f32 %v4015, %v4022
        %v4043 = vadd.f32 %v4016, %v4022
        %v4044 = vmax.f32 %v4024, 0.0
        %v4045 = vmax.f32 %v4025, 0.0
        %v4046 = vmax.f32 %v4026, 0.0
        %v4047 = vmax.f32 %v4027, 0.0
        %v4048 = vmax.f32 %v4028, 0.0
        %v4049 = vmax.f32 %v4029, 0.0
        %v4050 = vmax.f32 %v4030, 0.0
        %v4051 = vmax.f32 %v4031, 0.0
        %v4052 = vmax.f32 %v4032, 0.0
        %v4053 = vmax.f32 %v4033, 0.0
        %v4054 = vmax.f32 %v4034, 0.0
        %v4055 = vmax.f32 %v4035, 0.0
        %v4056 = vmax.f32 %v4036, 0.0
        %v4057 = vmax.f32 %v4037, 0.0
        %v4058 = vmax.f32 %v4038, 0.0
        %v4059 = vmax.f32 %v4039, 0.0
        %v4060 = vmax.f32 %v4040, 0.0
        %v4061 = vmax.f32 %v4041, 0.0
        %v4062 = vmax.f32 %v4042, 0.0
        %v4063 = vmax.f32 %v4043, 0.0
        %4064 = vst [vmem:[%s444] sm:$0xff] %v4044
        %4065 = vst [vmem:[%s444 + $0x8] sm:$0xff] %v4045
        %4066 = vst [vmem:[%s444 + $0x10] sm:$0xff] %v4046
        %4067 = vst [vmem:[%s444 + $0x18] sm:$0xff] %v4047
        %4068 = vst [vmem:[%s444 + $0x20] sm:$0xff] %v4048
        %4069 = vst [vmem:[%s444 + $0x28] sm:$0xff] %v4049
        %4070 = vst [vmem:[%s444 + $0x30] sm:$0xff] %v4050
        %4071 = vst [vmem:[%s444 + $0x38] sm:$0xff] %v4051
        %4072 = vst [vmem:[%s444 + $0x40] sm:$0xff] %v4052
        %4073 = vst [vmem:[%s444 + $0x48] sm:$0xff] %v4053
        %4074 = vst [vmem:[%s444 + $0x50] sm:$0xff] %v4054
        %4075 = vst [vmem:[%s444 + $0x58] sm:$0xff] %v4055
        %4076 = vst [vmem:[%s444 + $0x60] sm:$0xff] %v4056
        %4077 = vst [vmem:[%s444 + $0x68] sm:$0xff] %v4057
        %4078 = vst [vmem:[%s444 + $0x70] sm:$0xff] %v4058
        %4079 = vst [vmem:[%s444 + $0x78] sm:$0xff] %v4059
        %4080 = vst [vmem:[%s444 + $0x80] sm:$0xff] %v4060
        %4081 = vst [vmem:[%s444 + $0x88] sm:$0xff] %v4061
        %4082 = vst [vmem:[%s444 + $0x90] sm:$0xff] %v4062
        %4083 = vst [vmem:[%s444 + $0x98] sm:$0xff] %v4063
        %s4084 = smul.u32 20, %s17
        %p4085 = scmp.lt.s32.totalorder %s4084, 39
        %s4086 = scalar_select %p4085, %s4084, 39
        %s4087 = smul.addr %s4086, 8
        %s4088 = scalar_lea.vmem %s6, %s4087
        // Predicated region
        $region83: #{down_forward.1} parent=77 // pred_check
          %p4089 = pneg %p166
        $region84: #{down_forward.1} parent=77 // pred_check_branch
          %4091 = sbr.rel (%p4089) target = $region86
        $region85: #{down_forward.1} parent=77 // pred_region
          %s4092 = smul.u32 20, %s17
        $region86: #{down_forward.1} parent=77 // pred_fallthru
          _
      $region78: #{down_forward.1} parent=5 // pred_fallthru
        _
      %p4093 = scmp.le.s32.totalorder 2, %s12
      // Predicated region
      $region87: #{down_forward.1} parent=5 // pred_check
        %p4094 = pneg %p4093
      $region88: #{down_forward.1} parent=5 // pred_check_branch
        %4096 = sbr.rel (%p4094) target = $region90
      $region89: #{down_forward.1} parent=5 // pred_region
        %s4097 = ssub.s32 %s12, 2
        // Predicated region
        $region91: #{down_forward.1} parent=89 // pred_check
          %p4098 = pneg %p172
        $region92: #{down_forward.1} parent=89 // pred_check_branch
          %4100 = sbr.rel (%p4098) target = $region94
        $region93: #{down_forward.1} parent=89 // pred_region
          %s4101 = smul.u32 20, %s18
          %p4102 = scmp.lt.s32.totalorder %s4101, 39
          %s4103 = scalar_select %p4102, %s4101, 39
          %s4104 = smul.addr %s4103, 8
          %s4105 = scalar_lea.vmem %s6, %s4104
        $region94: #{down_forward.1} parent=89 // pred_fallthru
          _
      $region90: #{down_forward.1} parent=5 // pred_fallthru
        _
    $region6: #{down_forward.1} parent=1 // loop_footer
      %s16 = sadd.s32 1, %s12
    $region7: #{down_forward.1} parent=1 // loop_footer_branch
      %11 = sbr.rel target = $region3
    $region8: #{down_forward.1} parent=1 // loop_exit
      _

</llo_original>
